<compile_context>
chip_gen: v6e
topology: v6e:2x2x1
jax: 0.10.0
libtpu: 0.0.40
codegen_flags: <defaults>
</compile_context>

<pallas_src>
import functools
import math

import jax
import jax.numpy as jnp
from jax import lax
from jax.experimental import pallas as pl
from jax.experimental.pallas import tpu as pltpu


def _graph_learning_kernel(w_ref, xi_ref, xjT_ref, a_ref, *,
                           n_valid, n_pad, n_feat, tj):
    # w_ref   : (1, F)       SMEM   learned weight row (scalar reads)
    # xi_ref  : (TI, F)      VMEM   i-tile of node features (double-buffered)
    # xjT_ref : (F, N_pad)   VMEM   all node features, feature-major (single copy)
    # a_ref   : (TI, N_pad)  VMEM   output tile of A; also used to stage s
    ti = a_ref.shape[0]
    nb = n_pad // tj

    xi = xi_ref[...]                                           # (TI, F) f32

    # ---- Pass 1: blocked weighted-L1 scores; block acc stays in vregs ----
    for jb in range(nb):                      # static: N_pad known at trace
        j0 = jb * tj
        acc = jnp.zeros((ti, tj), dtype=jnp.float32)
        for f in range(n_feat):               # static unroll; bounded live set
            w_f = w_ref[0, f]                                  # SMEM scalar
            xi_col = xi[:, f:f + 1]                            # (TI, 1)
            xj_row = xjT_ref[f:f + 1, j0:j0 + tj]              # (1, TJ) vld
            acc = acc + w_f * jnp.abs(xi_col - xj_row)         # (TI, TJ)

        # s = exp(relu(score)); note: overflows to inf for score >~ 88,
        # exactly like the reference implementation.
        s_blk = jnp.exp(jnp.maximum(acc, 0.0))

        # Exclude padded j-columns from the softmax (only last block can hit).
        if n_valid < n_pad and (jb + 1) * tj > n_valid:
            col = j0 + lax.broadcasted_iota(jnp.int32, (ti, tj), 1)
            s_blk = jnp.where(col < n_valid, s_blk, -jnp.inf)

        a_ref[:, j0:j0 + tj] = s_blk          # one lane-dense store per block

    # ---- Pass 2: row-wise softmax (axis=1), in place over the staged s ----
    s = a_ref[...]
    m = jnp.max(s, axis=1, keepdims=True)                      # (TI, 1)
    e = jnp.exp(s - m)                                         # masked cols -> 0
    denom = jnp.sum(e, axis=1, keepdims=True)                  # (TI, 1)

    # EUP approximate reciprocal + 2 Newton steps on the tiny column (f32 exact).
    inv = pl.reciprocal(denom, approx=True)
    inv = inv * (2.0 - denom * inv)
    inv = inv * (2.0 - denom * inv)

    a_ref[...] = e * inv


def graph_learning(inputs, weight):
    """inputs: (N, F), weight: (1, F) -> (A, D), each (N, N) float32."""
    n, f = inputs.shape
    assert weight.shape == (1, f)

    ti = 128                                  # row tile (sweep 256 on v5e/v6e)
    tj = 128                                  # j-column block (16-vreg acc)
    n_pad = ((n + 127) // 128) * 128          # lane-dense output width
    num_row_tiles = n_pad // ti

    x = inputs.astype(jnp.float32)
    w = weight.astype(jnp.float32)
    x_pad = jnp.zeros((n_pad, f), jnp.float32).at[:n, :].set(x)
    xT_pad = jnp.transpose(x_pad)             # (F, N_pad), layout plumbing

    kernel = functools.partial(
        _graph_learning_kernel, n_valid=n, n_pad=n_pad, n_feat=f, tj=tj)

    # Advisory cost estimate for the XLA scheduler.
    flops = int(n_pad * n_pad * (4 * f + 8))
    transcendentals = int(2 * n_pad * n_pad)
    bytes_accessed = int(4 * (2 * n_pad * f + n_pad * n_pad))

    # VMEM budget: x^T slab (single copy) + double-buffered xi tile +
    # double-buffered A output tile + pass-2 full-row temporaries (~3x).
    f_sub = ((f + 7) // 8) * 8
    f_lane = ((f + 127) // 128) * 128
    vmem_need = 4 * (f_sub * n_pad
                     + 2 * ti * f_lane
                     + 2 * ti * n_pad
                     + 3 * ti * n_pad)

    # Generation-aware cap: ~3/4 of physical VMEM (96 MiB on v5e/v6e, 48 MiB
    # on v7x), so we can exceed the conservative 64 MiB default where possible.
    phys_vmem = 64 << 20
    try:
        info = pltpu.get_tpu_info()
        phys_vmem = int(getattr(info, "vmem_capacity_bytes", phys_vmem))
    except Exception:
        pass
    vmem_limit = int(min(max(vmem_need + (4 << 20), 32 << 20),
                         (phys_vmem * 3) // 4))

    a_pad = pl.pallas_call(
        kernel,
        out_shape=jax.ShapeDtypeStruct((n_pad, n_pad), jnp.float32),
        grid=(num_row_tiles,),
        in_specs=[
            pl.BlockSpec(memory_space=pltpu.MemorySpace.SMEM),    # weight
            pl.BlockSpec((ti, f), lambda i: (i, 0)),              # x  (i-tile)
            pl.BlockSpec(memory_space=pltpu.MemorySpace.VMEM),    # x^T whole,
                                                                  # single copy
        ],
        out_specs=pl.BlockSpec((ti, n_pad), lambda i: (i, 0)),
        compiler_params=pltpu.CompilerParams(
            dimension_semantics=("parallel",),
            vmem_limit_bytes=vmem_limit,
        ),
        cost_estimate=pl.CostEstimate(
            flops=flops,
            transcendentals=transcendentals,
            bytes_accessed=bytes_accessed,
        ),
    )(w, x_pad, xT_pad)

    a = a_pad[:n, :n]
    # Row sums of a softmax are exactly 1 => D is the identity matrix.
    d = jnp.eye(n, dtype=jnp.float32)
    return a, d


def _reference(inputs, weight):
    # Pure-JAX reference mirroring the PyTorch forward.
    diff = jnp.abs(inputs[:, None, :] - inputs[None, :, :])
    s = jnp.exp(jax.nn.relu(jnp.sum(diff * weight[None, :, :], axis=-1)))
    a = jax.nn.softmax(s, axis=1)
    d = jnp.diag(jnp.sum(a, axis=1))
    return a, d


if __name__ == "__main__":
    # Small shapes consistent with the forward: N nodes of dim in_features.
    N = 8
    IN_FEATURES = 32

    key = jax.random.PRNGKey(0)
    kx, kw = jax.random.split(key)

    # Deterministic parameter init matching reset_parameters():
    # weight ~ U(-stdv, stdv), stdv = 1/sqrt(in_features)
    stdv = 1.0 / math.sqrt(IN_FEATURES)
    weight = jax.random.uniform(
        kw, (1, IN_FEATURES), minval=-stdv, maxval=stdv, dtype=jnp.float32
    )
    inputs = jax.random.normal(kx, (N, IN_FEATURES), dtype=jnp.float32)

    A, D = graph_learning(inputs, weight)
    A = jax.block_until_ready(A)
    D = jax.block_until_ready(D)

    A_ref, D_ref = _reference(inputs, weight)
    assert jnp.allclose(A, A_ref, atol=1e-5, rtol=1e-5), "A mismatch"
    assert jnp.allclose(D, D_ref, atol=1e-5, rtol=1e-5), "D mismatch"

    print("KERNEL_OK")
</pallas_src>

<mosaic_0001>
module attributes {stable_mosaic.version = 11 : i64} {
  func.func @_graph_learning_kernel(%arg0: i32, %arg1: memref<1x32xf32, #tpu.memory_space<smem>>, %arg2: memref<128x32xf32, #tpu.memory_space<vmem>>, %arg3: memref<32x128xf32, #tpu.memory_space<vmem>>, %arg4: memref<128x128xf32, #tpu.memory_space<vmem>>) attributes {dimension_semantics = [#tpu.dimension_semantics<parallel>], iteration_bounds = array<i64: 1>, scalar_prefetch = 0 : i64, scratch_operands = 0 : i64, tpu.core_type = #tpu.core_type<tc>, window_params = [{transform_indices = @transform_0, window_bounds = array<i64: 1, 32>}, {transform_indices = @transform_1, window_bounds = array<i64: 128, 32>}, {pipeline_mode = #tpu.pipeline_mode<synchronous>, transform_indices = @transform_2, window_bounds = array<i64: 32, 128>}, {transform_indices = @transform_3, window_bounds = array<i64: 128, 128>}]} {
    %c0 = arith.constant 0 : index
    %c0_0 = arith.constant 0 : index
    %0 = vector.load %arg2[%c0, %c0_0] : memref<128x32xf32, #tpu.memory_space<vmem>>, vector<128x32xf32>
    %cst = arith.constant 0.000000e+00 : f32
    %1 = vector.broadcast %cst : f32 to vector<128x128xf32>
    %c0_1 = arith.constant 0 : index
    %c0_2 = arith.constant 0 : index
    %2 = memref.load %arg1[%c0_1, %c0_2] : memref<1x32xf32, #tpu.memory_space<smem>>
    %3 = vector.extract_strided_slice %0 {offsets = [0, 0], sizes = [128, 1], strides = [1, 1]} : vector<128x32xf32> to vector<128x1xf32>
    %c0_3 = arith.constant 0 : index
    %c0_4 = arith.constant 0 : index
    %4 = vector.load %arg3[%c0_3, %c0_4] : memref<32x128xf32, #tpu.memory_space<vmem>>, vector<1x128xf32>
    %5 = vector.broadcast %3 : vector<128x1xf32> to vector<128x128xf32>
    %6 = vector.broadcast %4 : vector<1x128xf32> to vector<128x128xf32>
    %7 = arith.subf %5, %6 : vector<128x128xf32>
    %8 = math.absf %7 : vector<128x128xf32>
    %9 = vector.broadcast %2 : f32 to vector<128x128xf32>
    %10 = arith.mulf %9, %8 : vector<128x128xf32>
    %11 = arith.addf %1, %10 : vector<128x128xf32>
    %c0_5 = arith.constant 0 : index
    %c1 = arith.constant 1 : index
    %12 = memref.load %arg1[%c0_5, %c1] : memref<1x32xf32, #tpu.memory_space<smem>>
    %13 = vector.extract_strided_slice %0 {offsets = [0, 1], sizes = [128, 1], strides = [1, 1]} : vector<128x32xf32> to vector<128x1xf32>
    %c1_6 = arith.constant 1 : index
    %c0_7 = arith.constant 0 : index
    %14 = vector.load %arg3[%c1_6, %c0_7] : memref<32x128xf32, #tpu.memory_space<vmem>>, vector<1x128xf32>
    %15 = vector.broadcast %13 : vector<128x1xf32> to vector<128x128xf32>
    %16 = vector.broadcast %14 : vector<1x128xf32> to vector<128x128xf32>
    %17 = arith.subf %15, %16 : vector<128x128xf32>
    %18 = math.absf %17 : vector<128x128xf32>
    %19 = vector.broadcast %12 : f32 to vector<128x128xf32>
    %20 = arith.mulf %19, %18 : vector<128x128xf32>
    %21 = arith.addf %11, %20 : vector<128x128xf32>
    %c0_8 = arith.constant 0 : index
    %c2 = arith.constant 2 : index
    %22 = memref.load %arg1[%c0_8, %c2] : memref<1x32xf32, #tpu.memory_space<smem>>
    %23 = vector.extract_strided_slice %0 {offsets = [0, 2], sizes = [128, 1], strides = [1, 1]} : vector<128x32xf32> to vector<128x1xf32>
    %c2_9 = arith.constant 2 : index
    %c0_10 = arith.constant 0 : index
    %24 = vector.load %arg3[%c2_9, %c0_10] : memref<32x128xf32, #tpu.memory_space<vmem>>, vector<1x128xf32>
    %25 = vector.broadcast %23 : vector<128x1xf32> to vector<128x128xf32>
    %26 = vector.broadcast %24 : vector<1x128xf32> to vector<128x128xf32>
    %27 = arith.subf %25, %26 : vector<128x128xf32>
    %28 = math.absf %27 : vector<128x128xf32>
    %29 = vector.broadcast %22 : f32 to vector<128x128xf32>
    %30 = arith.mulf %29, %28 : vector<128x128xf32>
    %31 = arith.addf %21, %30 : vector<128x128xf32>
    %c0_11 = arith.constant 0 : index
    %c3 = arith.constant 3 : index
    %32 = memref.load %arg1[%c0_11, %c3] : memref<1x32xf32, #tpu.memory_space<smem>>
    %33 = vector.extract_strided_slice %0 {offsets = [0, 3], sizes = [128, 1], strides = [1, 1]} : vector<128x32xf32> to vector<128x1xf32>
    %c3_12 = arith.constant 3 : index
    %c0_13 = arith.constant 0 : index
    %34 = vector.load %arg3[%c3_12, %c0_13] : memref<32x128xf32, #tpu.memory_space<vmem>>, vector<1x128xf32>
    %35 = vector.broadcast %33 : vector<128x1xf32> to vector<128x128xf32>
    %36 = vector.broadcast %34 : vector<1x128xf32> to vector<128x128xf32>
    %37 = arith.subf %35, %36 : vector<128x128xf32>
    %38 = math.absf %37 : vector<128x128xf32>
    %39 = vector.broadcast %32 : f32 to vector<128x128xf32>
    %40 = arith.mulf %39, %38 : vector<128x128xf32>
    %41 = arith.addf %31, %40 : vector<128x128xf32>
    %c0_14 = arith.constant 0 : index
    %c4 = arith.constant 4 : index
    %42 = memref.load %arg1[%c0_14, %c4] : memref<1x32xf32, #tpu.memory_space<smem>>
    %43 = vector.extract_strided_slice %0 {offsets = [0, 4], sizes = [128, 1], strides = [1, 1]} : vector<128x32xf32> to vector<128x1xf32>
    %c4_15 = arith.constant 4 : index
    %c0_16 = arith.constant 0 : index
    %44 = vector.load %arg3[%c4_15, %c0_16] : memref<32x128xf32, #tpu.memory_space<vmem>>, vector<1x128xf32>
    %45 = vector.broadcast %43 : vector<128x1xf32> to vector<128x128xf32>
    %46 = vector.broadcast %44 : vector<1x128xf32> to vector<128x128xf32>
    %47 = arith.subf %45, %46 : vector<128x128xf32>
    %48 = math.absf %47 : vector<128x128xf32>
    %49 = vector.broadcast %42 : f32 to vector<128x128xf32>
    %50 = arith.mulf %49, %48 : vector<128x128xf32>
    %51 = arith.addf %41, %50 : vector<128x128xf32>
    %c0_17 = arith.constant 0 : index
    %c5 = arith.constant 5 : index
    %52 = memref.load %arg1[%c0_17, %c5] : memref<1x32xf32, #tpu.memory_space<smem>>
    %53 = vector.extract_strided_slice %0 {offsets = [0, 5], sizes = [128, 1], strides = [1, 1]} : vector<128x32xf32> to vector<128x1xf32>
    %c5_18 = arith.constant 5 : index
    %c0_19 = arith.constant 0 : index
    %54 = vector.load %arg3[%c5_18, %c0_19] : memref<32x128xf32, #tpu.memory_space<vmem>>, vector<1x128xf32>
    %55 = vector.broadcast %53 : vector<128x1xf32> to vector<128x128xf32>
    %56 = vector.broadcast %54 : vector<1x128xf32> to vector<128x128xf32>
    %57 = arith.subf %55, %56 : vector<128x128xf32>
    %58 = math.absf %57 : vector<128x128xf32>
    %59 = vector.broadcast %52 : f32 to vector<128x128xf32>
    %60 = arith.mulf %59, %58 : vector<128x128xf32>
    %61 = arith.addf %51, %60 : vector<128x128xf32>
    %c0_20 = arith.constant 0 : index
    %c6 = arith.constant 6 : index
    %62 = memref.load %arg1[%c0_20, %c6] : memref<1x32xf32, #tpu.memory_space<smem>>
    %63 = vector.extract_strided_slice %0 {offsets = [0, 6], sizes = [128, 1], strides = [1, 1]} : vector<128x32xf32> to vector<128x1xf32>
    %c6_21 = arith.constant 6 : index
    %c0_22 = arith.constant 0 : index
    %64 = vector.load %arg3[%c6_21, %c0_22] : memref<32x128xf32, #tpu.memory_space<vmem>>, vector<1x128xf32>
    %65 = vector.broadcast %63 : vector<128x1xf32> to vector<128x128xf32>
    %66 = vector.broadcast %64 : vector<1x128xf32> to vector<128x128xf32>
    %67 = arith.subf %65, %66 : vector<128x128xf32>
    %68 = math.absf %67 : vector<128x128xf32>
    %69 = vector.broadcast %62 : f32 to vector<128x128xf32>
    %70 = arith.mulf %69, %68 : vector<128x128xf32>
    %71 = arith.addf %61, %70 : vector<128x128xf32>
    %c0_23 = arith.constant 0 : index
    %c7 = arith.constant 7 : index
    %72 = memref.load %arg1[%c0_23, %c7] : memref<1x32xf32, #tpu.memory_space<smem>>
    %73 = vector.extract_strided_slice %0 {offsets = [0, 7], sizes = [128, 1], strides = [1, 1]} : vector<128x32xf32> to vector<128x1xf32>
    %c7_24 = arith.constant 7 : index
    %c0_25 = arith.constant 0 : index
    %74 = vector.load %arg3[%c7_24, %c0_25] : memref<32x128xf32, #tpu.memory_space<vmem>>, vector<1x128xf32>
    %75 = vector.broadcast %73 : vector<128x1xf32> to vector<128x128xf32>
    %76 = vector.broadcast %74 : vector<1x128xf32> to vector<128x128xf32>
    %77 = arith.subf %75, %76 : vector<128x128xf32>
    %78 = math.absf %77 : vector<128x128xf32>
    %79 = vector.broadcast %72 : f32 to vector<128x128xf32>
    %80 = arith.mulf %79, %78 : vector<128x128xf32>
    %81 = arith.addf %71, %80 : vector<128x128xf32>
    %c0_26 = arith.constant 0 : index
    %c8 = arith.constant 8 : index
    %82 = memref.load %arg1[%c0_26, %c8] : memref<1x32xf32, #tpu.memory_space<smem>>
    %83 = vector.extract_strided_slice %0 {offsets = [0, 8], sizes = [128, 1], strides = [1, 1]} : vector<128x32xf32> to vector<128x1xf32>
    %c8_27 = arith.constant 8 : index
    %c0_28 = arith.constant 0 : index
    %84 = vector.load %arg3[%c8_27, %c0_28] : memref<32x128xf32, #tpu.memory_space<vmem>>, vector<1x128xf32>
    %85 = vector.broadcast %83 : vector<128x1xf32> to vector<128x128xf32>
    %86 = vector.broadcast %84 : vector<1x128xf32> to vector<128x128xf32>
    %87 = arith.subf %85, %86 : vector<128x128xf32>
    %88 = math.absf %87 : vector<128x128xf32>
    %89 = vector.broadcast %82 : f32 to vector<128x128xf32>
    %90 = arith.mulf %89, %88 : vector<128x128xf32>
    %91 = arith.addf %81, %90 : vector<128x128xf32>
    %c0_29 = arith.constant 0 : index
    %c9 = arith.constant 9 : index
    %92 = memref.load %arg1[%c0_29, %c9] : memref<1x32xf32, #tpu.memory_space<smem>>
    %93 = vector.extract_strided_slice %0 {offsets = [0, 9], sizes = [128, 1], strides = [1, 1]} : vector<128x32xf32> to vector<128x1xf32>
    %c9_30 = arith.constant 9 : index
    %c0_31 = arith.constant 0 : index
    %94 = vector.load %arg3[%c9_30, %c0_31] : memref<32x128xf32, #tpu.memory_space<vmem>>, vector<1x128xf32>
    %95 = vector.broadcast %93 : vector<128x1xf32> to vector<128x128xf32>
    %96 = vector.broadcast %94 : vector<1x128xf32> to vector<128x128xf32>
    %97 = arith.subf %95, %96 : vector<128x128xf32>
    %98 = math.absf %97 : vector<128x128xf32>
    %99 = vector.broadcast %92 : f32 to vector<128x128xf32>
    %100 = arith.mulf %99, %98 : vector<128x128xf32>
    %101 = arith.addf %91, %100 : vector<128x128xf32>
    %c0_32 = arith.constant 0 : index
    %c10 = arith.constant 10 : index
    %102 = memref.load %arg1[%c0_32, %c10] : memref<1x32xf32, #tpu.memory_space<smem>>
    %103 = vector.extract_strided_slice %0 {offsets = [0, 10], sizes = [128, 1], strides = [1, 1]} : vector<128x32xf32> to vector<128x1xf32>
    %c10_33 = arith.constant 10 : index
    %c0_34 = arith.constant 0 : index
    %104 = vector.load %arg3[%c10_33, %c0_34] : memref<32x128xf32, #tpu.memory_space<vmem>>, vector<1x128xf32>
    %105 = vector.broadcast %103 : vector<128x1xf32> to vector<128x128xf32>
    %106 = vector.broadcast %104 : vector<1x128xf32> to vector<128x128xf32>
    %107 = arith.subf %105, %106 : vector<128x128xf32>
    %108 = math.absf %107 : vector<128x128xf32>
    %109 = vector.broadcast %102 : f32 to vector<128x128xf32>
    %110 = arith.mulf %109, %108 : vector<128x128xf32>
    %111 = arith.addf %101, %110 : vector<128x128xf32>
    %c0_35 = arith.constant 0 : index
    %c11 = arith.constant 11 : index
    %112 = memref.load %arg1[%c0_35, %c11] : memref<1x32xf32, #tpu.memory_space<smem>>
    %113 = vector.extract_strided_slice %0 {offsets = [0, 11], sizes = [128, 1], strides = [1, 1]} : vector<128x32xf32> to vector<128x1xf32>
    %c11_36 = arith.constant 11 : index
    %c0_37 = arith.constant 0 : index
    %114 = vector.load %arg3[%c11_36, %c0_37] : memref<32x128xf32, #tpu.memory_space<vmem>>, vector<1x128xf32>
    %115 = vector.broadcast %113 : vector<128x1xf32> to vector<128x128xf32>
    %116 = vector.broadcast %114 : vector<1x128xf32> to vector<128x128xf32>
    %117 = arith.subf %115, %116 : vector<128x128xf32>
    %118 = math.absf %117 : vector<128x128xf32>
    %119 = vector.broadcast %112 : f32 to vector<128x128xf32>
    %120 = arith.mulf %119, %118 : vector<128x128xf32>
    %121 = arith.addf %111, %120 : vector<128x128xf32>
    %c0_38 = arith.constant 0 : index
    %c12 = arith.constant 12 : index
    %122 = memref.load %arg1[%c0_38, %c12] : memref<1x32xf32, #tpu.memory_space<smem>>
    %123 = vector.extract_strided_slice %0 {offsets = [0, 12], sizes = [128, 1], strides = [1, 1]} : vector<128x32xf32> to vector<128x1xf32>
    %c12_39 = arith.constant 12 : index
    %c0_40 = arith.constant 0 : index
    %124 = vector.load %arg3[%c12_39, %c0_40] : memref<32x128xf32, #tpu.memory_space<vmem>>, vector<1x128xf32>
    %125 = vector.broadcast %123 : vector<128x1xf32> to vector<128x128xf32>
    %126 = vector.broadcast %124 : vector<1x128xf32> to vector<128x128xf32>
    %127 = arith.subf %125, %126 : vector<128x128xf32>
    %128 = math.absf %127 : vector<128x128xf32>
    %129 = vector.broadcast %122 : f32 to vector<128x128xf32>
    %130 = arith.mulf %129, %128 : vector<128x128xf32>
    %131 = arith.addf %121, %130 : vector<128x128xf32>
    %c0_41 = arith.constant 0 : index
    %c13 = arith.constant 13 : index
    %132 = memref.load %arg1[%c0_41, %c13] : memref<1x32xf32, #tpu.memory_space<smem>>
    %133 = vector.extract_strided_slice %0 {offsets = [0, 13], sizes = [128, 1], strides = [1, 1]} : vector<128x32xf32> to vector<128x1xf32>
    %c13_42 = arith.constant 13 : index
    %c0_43 = arith.constant 0 : index
    %134 = vector.load %arg3[%c13_42, %c0_43] : memref<32x128xf32, #tpu.memory_space<vmem>>, vector<1x128xf32>
    %135 = vector.broadcast %133 : vector<128x1xf32> to vector<128x128xf32>
    %136 = vector.broadcast %134 : vector<1x128xf32> to vector<128x128xf32>
    %137 = arith.subf %135, %136 : vector<128x128xf32>
    %138 = math.absf %137 : vector<128x128xf32>
    %139 = vector.broadcast %132 : f32 to vector<128x128xf32>
    %140 = arith.mulf %139, %138 : vector<128x128xf32>
    %141 = arith.addf %131, %140 : vector<128x128xf32>
    %c0_44 = arith.constant 0 : index
    %c14 = arith.constant 14 : index
    %142 = memref.load %arg1[%c0_44, %c14] : memref<1x32xf32, #tpu.memory_space<smem>>
    %143 = vector.extract_strided_slice %0 {offsets = [0, 14], sizes = [128, 1], strides = [1, 1]} : vector<128x32xf32> to vector<128x1xf32>
    %c14_45 = arith.constant 14 : index
    %c0_46 = arith.constant 0 : index
    %144 = vector.load %arg3[%c14_45, %c0_46] : memref<32x128xf32, #tpu.memory_space<vmem>>, vector<1x128xf32>
    %145 = vector.broadcast %143 : vector<128x1xf32> to vector<128x128xf32>
    %146 = vector.broadcast %144 : vector<1x128xf32> to vector<128x128xf32>
    %147 = arith.subf %145, %146 : vector<128x128xf32>
    %148 = math.absf %147 : vector<128x128xf32>
    %149 = vector.broadcast %142 : f32 to vector<128x128xf32>
    %150 = arith.mulf %149, %148 : vector<128x128xf32>
    %151 = arith.addf %141, %150 : vector<128x128xf32>
    %c0_47 = arith.constant 0 : index
    %c15 = arith.constant 15 : index
    %152 = memref.load %arg1[%c0_47, %c15] : memref<1x32xf32, #tpu.memory_space<smem>>
    %153 = vector.extract_strided_slice %0 {offsets = [0, 15], sizes = [128, 1], strides = [1, 1]} : vector<128x32xf32> to vector<128x1xf32>
    %c15_48 = arith.constant 15 : index
    %c0_49 = arith.constant 0 : index
    %154 = vector.load %arg3[%c15_48, %c0_49] : memref<32x128xf32, #tpu.memory_space<vmem>>, vector<1x128xf32>
    %155 = vector.broadcast %153 : vector<128x1xf32> to vector<128x128xf32>
    %156 = vector.broadcast %154 : vector<1x128xf32> to vector<128x128xf32>
    %157 = arith.subf %155, %156 : vector<128x128xf32>
    %158 = math.absf %157 : vector<128x128xf32>
    %159 = vector.broadcast %152 : f32 to vector<128x128xf32>
    %160 = arith.mulf %159, %158 : vector<128x128xf32>
    %161 = arith.addf %151, %160 : vector<128x128xf32>
    %c0_50 = arith.constant 0 : index
    %c16 = arith.constant 16 : index
    %162 = memref.load %arg1[%c0_50, %c16] : memref<1x32xf32, #tpu.memory_space<smem>>
    %163 = vector.extract_strided_slice %0 {offsets = [0, 16], sizes = [128, 1], strides = [1, 1]} : vector<128x32xf32> to vector<128x1xf32>
    %c16_51 = arith.constant 16 : index
    %c0_52 = arith.constant 0 : index
    %164 = vector.load %arg3[%c16_51, %c0_52] : memref<32x128xf32, #tpu.memory_space<vmem>>, vector<1x128xf32>
    %165 = vector.broadcast %163 : vector<128x1xf32> to vector<128x128xf32>
    %166 = vector.broadcast %164 : vector<1x128xf32> to vector<128x128xf32>
    %167 = arith.subf %165, %166 : vector<128x128xf32>
    %168 = math.absf %167 : vector<128x128xf32>
    %169 = vector.broadcast %162 : f32 to vector<128x128xf32>
    %170 = arith.mulf %169, %168 : vector<128x128xf32>
    %171 = arith.addf %161, %170 : vector<128x128xf32>
    %c0_53 = arith.constant 0 : index
    %c17 = arith.constant 17 : index
    %172 = memref.load %arg1[%c0_53, %c17] : memref<1x32xf32, #tpu.memory_space<smem>>
    %173 = vector.extract_strided_slice %0 {offsets = [0, 17], sizes = [128, 1], strides = [1, 1]} : vector<128x32xf32> to vector<128x1xf32>
    %c17_54 = arith.constant 17 : index
    %c0_55 = arith.constant 0 : index
    %174 = vector.load %arg3[%c17_54, %c0_55] : memref<32x128xf32, #tpu.memory_space<vmem>>, vector<1x128xf32>
    %175 = vector.broadcast %173 : vector<128x1xf32> to vector<128x128xf32>
    %176 = vector.broadcast %174 : vector<1x128xf32> to vector<128x128xf32>
    %177 = arith.subf %175, %176 : vector<128x128xf32>
    %178 = math.absf %177 : vector<128x128xf32>
    %179 = vector.broadcast %172 : f32 to vector<128x128xf32>
    %180 = arith.mulf %179, %178 : vector<128x128xf32>
    %181 = arith.addf %171, %180 : vector<128x128xf32>
    %c0_56 = arith.constant 0 : index
    %c18 = arith.constant 18 : index
    %182 = memref.load %arg1[%c0_56, %c18] : memref<1x32xf32, #tpu.memory_space<smem>>
    %183 = vector.extract_strided_slice %0 {offsets = [0, 18], sizes = [128, 1], strides = [1, 1]} : vector<128x32xf32> to vector<128x1xf32>
    %c18_57 = arith.constant 18 : index
    %c0_58 = arith.constant 0 : index
    %184 = vector.load %arg3[%c18_57, %c0_58] : memref<32x128xf32, #tpu.memory_space<vmem>>, vector<1x128xf32>
    %185 = vector.broadcast %183 : vector<128x1xf32> to vector<128x128xf32>
    %186 = vector.broadcast %184 : vector<1x128xf32> to vector<128x128xf32>
    %187 = arith.subf %185, %186 : vector<128x128xf32>
    %188 = math.absf %187 : vector<128x128xf32>
    %189 = vector.broadcast %182 : f32 to vector<128x128xf32>
    %190 = arith.mulf %189, %188 : vector<128x128xf32>
    %191 = arith.addf %181, %190 : vector<128x128xf32>
    %c0_59 = arith.constant 0 : index
    %c19 = arith.constant 19 : index
    %192 = memref.load %arg1[%c0_59, %c19] : memref<1x32xf32, #tpu.memory_space<smem>>
    %193 = vector.extract_strided_slice %0 {offsets = [0, 19], sizes = [128, 1], strides = [1, 1]} : vector<128x32xf32> to vector<128x1xf32>
    %c19_60 = arith.constant 19 : index
    %c0_61 = arith.constant 0 : index
    %194 = vector.load %arg3[%c19_60, %c0_61] : memref<32x128xf32, #tpu.memory_space<vmem>>, vector<1x128xf32>
    %195 = vector.broadcast %193 : vector<128x1xf32> to vector<128x128xf32>
    %196 = vector.broadcast %194 : vector<1x128xf32> to vector<128x128xf32>
    %197 = arith.subf %195, %196 : vector<128x128xf32>
    %198 = math.absf %197 : vector<128x128xf32>
    %199 = vector.broadcast %192 : f32 to vector<128x128xf32>
    %200 = arith.mulf %199, %198 : vector<128x128xf32>
    %201 = arith.addf %191, %200 : vector<128x128xf32>
    %c0_62 = arith.constant 0 : index
    %c20 = arith.constant 20 : index
    %202 = memref.load %arg1[%c0_62, %c20] : memref<1x32xf32, #tpu.memory_space<smem>>
    %203 = vector.extract_strided_slice %0 {offsets = [0, 20], sizes = [128, 1], strides = [1, 1]} : vector<128x32xf32> to vector<128x1xf32>
    %c20_63 = arith.constant 20 : index
    %c0_64 = arith.constant 0 : index
    %204 = vector.load %arg3[%c20_63, %c0_64] : memref<32x128xf32, #tpu.memory_space<vmem>>, vector<1x128xf32>
    %205 = vector.broadcast %203 : vector<128x1xf32> to vector<128x128xf32>
    %206 = vector.broadcast %204 : vector<1x128xf32> to vector<128x128xf32>
    %207 = arith.subf %205, %206 : vector<128x128xf32>
    %208 = math.absf %207 : vector<128x128xf32>
    %209 = vector.broadcast %202 : f32 to vector<128x128xf32>
    %210 = arith.mulf %209, %208 : vector<128x128xf32>
    %211 = arith.addf %201, %210 : vector<128x128xf32>
    %c0_65 = arith.constant 0 : index
    %c21 = arith.constant 21 : index
    %212 = memref.load %arg1[%c0_65, %c21] : memref<1x32xf32, #tpu.memory_space<smem>>
    %213 = vector.extract_strided_slice %0 {offsets = [0, 21], sizes = [128, 1], strides = [1, 1]} : vector<128x32xf32> to vector<128x1xf32>
    %c21_66 = arith.constant 21 : index
    %c0_67 = arith.constant 0 : index
    %214 = vector.load %arg3[%c21_66, %c0_67] : memref<32x128xf32, #tpu.memory_space<vmem>>, vector<1x128xf32>
    %215 = vector.broadcast %213 : vector<128x1xf32> to vector<128x128xf32>
    %216 = vector.broadcast %214 : vector<1x128xf32> to vector<128x128xf32>
    %217 = arith.subf %215, %216 : vector<128x128xf32>
    %218 = math.absf %217 : vector<128x128xf32>
    %219 = vector.broadcast %212 : f32 to vector<128x128xf32>
    %220 = arith.mulf %219, %218 : vector<128x128xf32>
    %221 = arith.addf %211, %220 : vector<128x128xf32>
    %c0_68 = arith.constant 0 : index
    %c22 = arith.constant 22 : index
    %222 = memref.load %arg1[%c0_68, %c22] : memref<1x32xf32, #tpu.memory_space<smem>>
    %223 = vector.extract_strided_slice %0 {offsets = [0, 22], sizes = [128, 1], strides = [1, 1]} : vector<128x32xf32> to vector<128x1xf32>
    %c22_69 = arith.constant 22 : index
    %c0_70 = arith.constant 0 : index
    %224 = vector.load %arg3[%c22_69, %c0_70] : memref<32x128xf32, #tpu.memory_space<vmem>>, vector<1x128xf32>
    %225 = vector.broadcast %223 : vector<128x1xf32> to vector<128x128xf32>
    %226 = vector.broadcast %224 : vector<1x128xf32> to vector<128x128xf32>
    %227 = arith.subf %225, %226 : vector<128x128xf32>
    %228 = math.absf %227 : vector<128x128xf32>
    %229 = vector.broadcast %222 : f32 to vector<128x128xf32>
    %230 = arith.mulf %229, %228 : vector<128x128xf32>
    %231 = arith.addf %221, %230 : vector<128x128xf32>
    %c0_71 = arith.constant 0 : index
    %c23 = arith.constant 23 : index
    %232 = memref.load %arg1[%c0_71, %c23] : memref<1x32xf32, #tpu.memory_space<smem>>
    %233 = vector.extract_strided_slice %0 {offsets = [0, 23], sizes = [128, 1], strides = [1, 1]} : vector<128x32xf32> to vector<128x1xf32>
    %c23_72 = arith.constant 23 : index
    %c0_73 = arith.constant 0 : index
    %234 = vector.load %arg3[%c23_72, %c0_73] : memref<32x128xf32, #tpu.memory_space<vmem>>, vector<1x128xf32>
    %235 = vector.broadcast %233 : vector<128x1xf32> to vector<128x128xf32>
    %236 = vector.broadcast %234 : vector<1x128xf32> to vector<128x128xf32>
    %237 = arith.subf %235, %236 : vector<128x128xf32>
    %238 = math.absf %237 : vector<128x128xf32>
    %239 = vector.broadcast %232 : f32 to vector<128x128xf32>
    %240 = arith.mulf %239, %238 : vector<128x128xf32>
    %241 = arith.addf %231, %240 : vector<128x128xf32>
    %c0_74 = arith.constant 0 : index
    %c24 = arith.constant 24 : index
    %242 = memref.load %arg1[%c0_74, %c24] : memref<1x32xf32, #tpu.memory_space<smem>>
    %243 = vector.extract_strided_slice %0 {offsets = [0, 24], sizes = [128, 1], strides = [1, 1]} : vector<128x32xf32> to vector<128x1xf32>
    %c24_75 = arith.constant 24 : index
    %c0_76 = arith.constant 0 : index
    %244 = vector.load %arg3[%c24_75, %c0_76] : memref<32x128xf32, #tpu.memory_space<vmem>>, vector<1x128xf32>
    %245 = vector.broadcast %243 : vector<128x1xf32> to vector<128x128xf32>
    %246 = vector.broadcast %244 : vector<1x128xf32> to vector<128x128xf32>
    %247 = arith.subf %245, %246 : vector<128x128xf32>
    %248 = math.absf %247 : vector<128x128xf32>
    %249 = vector.broadcast %242 : f32 to vector<128x128xf32>
    %250 = arith.mulf %249, %248 : vector<128x128xf32>
    %251 = arith.addf %241, %250 : vector<128x128xf32>
    %c0_77 = arith.constant 0 : index
    %c25 = arith.constant 25 : index
    %252 = memref.load %arg1[%c0_77, %c25] : memref<1x32xf32, #tpu.memory_space<smem>>
    %253 = vector.extract_strided_slice %0 {offsets = [0, 25], sizes = [128, 1], strides = [1, 1]} : vector<128x32xf32> to vector<128x1xf32>
    %c25_78 = arith.constant 25 : index
    %c0_79 = arith.constant 0 : index
    %254 = vector.load %arg3[%c25_78, %c0_79] : memref<32x128xf32, #tpu.memory_space<vmem>>, vector<1x128xf32>
    %255 = vector.broadcast %253 : vector<128x1xf32> to vector<128x128xf32>
    %256 = vector.broadcast %254 : vector<1x128xf32> to vector<128x128xf32>
    %257 = arith.subf %255, %256 : vector<128x128xf32>
    %258 = math.absf %257 : vector<128x128xf32>
    %259 = vector.broadcast %252 : f32 to vector<128x128xf32>
    %260 = arith.mulf %259, %258 : vector<128x128xf32>
    %261 = arith.addf %251, %260 : vector<128x128xf32>
    %c0_80 = arith.constant 0 : index
    %c26 = arith.constant 26 : index
    %262 = memref.load %arg1[%c0_80, %c26] : memref<1x32xf32, #tpu.memory_space<smem>>
    %263 = vector.extract_strided_slice %0 {offsets = [0, 26], sizes = [128, 1], strides = [1, 1]} : vector<128x32xf32> to vector<128x1xf32>
    %c26_81 = arith.constant 26 : index
    %c0_82 = arith.constant 0 : index
    %264 = vector.load %arg3[%c26_81, %c0_82] : memref<32x128xf32, #tpu.memory_space<vmem>>, vector<1x128xf32>
    %265 = vector.broadcast %263 : vector<128x1xf32> to vector<128x128xf32>
    %266 = vector.broadcast %264 : vector<1x128xf32> to vector<128x128xf32>
    %267 = arith.subf %265, %266 : vector<128x128xf32>
    %268 = math.absf %267 : vector<128x128xf32>
    %269 = vector.broadcast %262 : f32 to vector<128x128xf32>
    %270 = arith.mulf %269, %268 : vector<128x128xf32>
    %271 = arith.addf %261, %270 : vector<128x128xf32>
    %c0_83 = arith.constant 0 : index
    %c27 = arith.constant 27 : index
    %272 = memref.load %arg1[%c0_83, %c27] : memref<1x32xf32, #tpu.memory_space<smem>>
    %273 = vector.extract_strided_slice %0 {offsets = [0, 27], sizes = [128, 1], strides = [1, 1]} : vector<128x32xf32> to vector<128x1xf32>
    %c27_84 = arith.constant 27 : index
    %c0_85 = arith.constant 0 : index
    %274 = vector.load %arg3[%c27_84, %c0_85] : memref<32x128xf32, #tpu.memory_space<vmem>>, vector<1x128xf32>
    %275 = vector.broadcast %273 : vector<128x1xf32> to vector<128x128xf32>
    %276 = vector.broadcast %274 : vector<1x128xf32> to vector<128x128xf32>
    %277 = arith.subf %275, %276 : vector<128x128xf32>
    %278 = math.absf %277 : vector<128x128xf32>
    %279 = vector.broadcast %272 : f32 to vector<128x128xf32>
    %280 = arith.mulf %279, %278 : vector<128x128xf32>
    %281 = arith.addf %271, %280 : vector<128x128xf32>
    %c0_86 = arith.constant 0 : index
    %c28 = arith.constant 28 : index
    %282 = memref.load %arg1[%c0_86, %c28] : memref<1x32xf32, #tpu.memory_space<smem>>
    %283 = vector.extract_strided_slice %0 {offsets = [0, 28], sizes = [128, 1], strides = [1, 1]} : vector<128x32xf32> to vector<128x1xf32>
    %c28_87 = arith.constant 28 : index
    %c0_88 = arith.constant 0 : index
    %284 = vector.load %arg3[%c28_87, %c0_88] : memref<32x128xf32, #tpu.memory_space<vmem>>, vector<1x128xf32>
    %285 = vector.broadcast %283 : vector<128x1xf32> to vector<128x128xf32>
    %286 = vector.broadcast %284 : vector<1x128xf32> to vector<128x128xf32>
    %287 = arith.subf %285, %286 : vector<128x128xf32>
    %288 = math.absf %287 : vector<128x128xf32>
    %289 = vector.broadcast %282 : f32 to vector<128x128xf32>
    %290 = arith.mulf %289, %288 : vector<128x128xf32>
    %291 = arith.addf %281, %290 : vector<128x128xf32>
    %c0_89 = arith.constant 0 : index
    %c29 = arith.constant 29 : index
    %292 = memref.load %arg1[%c0_89, %c29] : memref<1x32xf32, #tpu.memory_space<smem>>
    %293 = vector.extract_strided_slice %0 {offsets = [0, 29], sizes = [128, 1], strides = [1, 1]} : vector<128x32xf32> to vector<128x1xf32>
    %c29_90 = arith.constant 29 : index
    %c0_91 = arith.constant 0 : index
    %294 = vector.load %arg3[%c29_90, %c0_91] : memref<32x128xf32, #tpu.memory_space<vmem>>, vector<1x128xf32>
    %295 = vector.broadcast %293 : vector<128x1xf32> to vector<128x128xf32>
    %296 = vector.broadcast %294 : vector<1x128xf32> to vector<128x128xf32>
    %297 = arith.subf %295, %296 : vector<128x128xf32>
    %298 = math.absf %297 : vector<128x128xf32>
    %299 = vector.broadcast %292 : f32 to vector<128x128xf32>
    %300 = arith.mulf %299, %298 : vector<128x128xf32>
    %301 = arith.addf %291, %300 : vector<128x128xf32>
    %c0_92 = arith.constant 0 : index
    %c30 = arith.constant 30 : index
    %302 = memref.load %arg1[%c0_92, %c30] : memref<1x32xf32, #tpu.memory_space<smem>>
    %303 = vector.extract_strided_slice %0 {offsets = [0, 30], sizes = [128, 1], strides = [1, 1]} : vector<128x32xf32> to vector<128x1xf32>
    %c30_93 = arith.constant 30 : index
    %c0_94 = arith.constant 0 : index
    %304 = vector.load %arg3[%c30_93, %c0_94] : memref<32x128xf32, #tpu.memory_space<vmem>>, vector<1x128xf32>
    %305 = vector.broadcast %303 : vector<128x1xf32> to vector<128x128xf32>
    %306 = vector.broadcast %304 : vector<1x128xf32> to vector<128x128xf32>
    %307 = arith.subf %305, %306 : vector<128x128xf32>
    %308 = math.absf %307 : vector<128x128xf32>
    %309 = vector.broadcast %302 : f32 to vector<128x128xf32>
    %310 = arith.mulf %309, %308 : vector<128x128xf32>
    %311 = arith.addf %301, %310 : vector<128x128xf32>
    %c0_95 = arith.constant 0 : index
    %c31 = arith.constant 31 : index
    %312 = memref.load %arg1[%c0_95, %c31] : memref<1x32xf32, #tpu.memory_space<smem>>
    %313 = vector.extract_strided_slice %0 {offsets = [0, 31], sizes = [128, 1], strides = [1, 1]} : vector<128x32xf32> to vector<128x1xf32>
    %c31_96 = arith.constant 31 : index
    %c0_97 = arith.constant 0 : index
    %314 = vector.load %arg3[%c31_96, %c0_97] : memref<32x128xf32, #tpu.memory_space<vmem>>, vector<1x128xf32>
    %315 = vector.broadcast %313 : vector<128x1xf32> to vector<128x128xf32>
    %316 = vector.broadcast %314 : vector<1x128xf32> to vector<128x128xf32>
    %317 = arith.subf %315, %316 : vector<128x128xf32>
    %318 = math.absf %317 : vector<128x128xf32>
    %319 = vector.broadcast %312 : f32 to vector<128x128xf32>
    %320 = arith.mulf %319, %318 : vector<128x128xf32>
    %321 = arith.addf %311, %320 : vector<128x128xf32>
    %cst_98 = arith.constant 0.000000e+00 : f32
    %322 = vector.broadcast %cst_98 : f32 to vector<128x128xf32>
    %323 = arith.maximumf %321, %322 : vector<128x128xf32>
    %324 = math.exp %323 : vector<128x128xf32>
    %325 = tpu.iota {dimensions = array<i32: 1>} : vector<128x128xi32>
    %c0_i32 = arith.constant 0 : i32
    %326 = vector.broadcast %c0_i32 : i32 to vector<128x128xi32>
    %327 = arith.addi %326, %325 : vector<128x128xi32>
    %c8_i32 = arith.constant 8 : i32
    %328 = vector.broadcast %c8_i32 : i32 to vector<128x128xi32>
    %329 = arith.cmpi slt, %327, %328 : vector<128x128xi32>
    %cst_99 = arith.constant 0xFF800000 : f32
    %330 = vector.broadcast %cst_99 : f32 to vector<128x128xf32>
    %331 = arith.select %329, %324, %330 : vector<128x128xi1>, vector<128x128xf32>
    %c0_100 = arith.constant 0 : index
    %c0_101 = arith.constant 0 : index
    %332 = vector.load %arg4[%c0_100, %c0_101] : memref<128x128xf32, #tpu.memory_space<vmem>>, vector<128x128xf32>
    tpu.vector_store %arg4[%c0_100, %c0_101], %331 {strides = array<i32>} : memref<128x128xf32, #tpu.memory_space<vmem>>, vector<128x128xf32>,
    %c0_102 = arith.constant 0 : index
    %c0_103 = arith.constant 0 : index
    %333 = vector.load %arg4[%c0_102, %c0_103] : memref<128x128xf32, #tpu.memory_space<vmem>>, vector<128x128xf32>
    %cst_104 = arith.constant dense<0xFF800000> : vector<128xf32>
    %334 = vector.multi_reduction <maximumf>, %333, %cst_104 [1] : vector<128x128xf32> to vector<128xf32>
    %335 = vector.shape_cast %334 : vector<128xf32> to vector<128x1xf32>
    %336 = vector.broadcast %335 : vector<128x1xf32> to vector<128x128xf32>
    %337 = arith.subf %333, %336 : vector<128x128xf32>
    %338 = math.exp %337 : vector<128x128xf32>
    %cst_105 = arith.constant dense<0.000000e+00> : vector<128xf32>
    %339 = vector.multi_reduction <add>, %338, %cst_105 [1] : vector<128x128xf32> to vector<128xf32>
    %340 = vector.shape_cast %339 : vector<128xf32> to vector<128x1xf32>
    %341 = tpu.reciprocal %340 {approx = true} : vector<128x1xf32> -> vector<128x1xf32>
    %342 = arith.mulf %340, %341 : vector<128x1xf32>
    %cst_106 = arith.constant 2.000000e+00 : f32
    %343 = vector.broadcast %cst_106 : f32 to vector<128x1xf32>
    %344 = arith.subf %343, %342 : vector<128x1xf32>
    %345 = arith.mulf %341, %344 : vector<128x1xf32>
    %346 = arith.mulf %340, %345 : vector<128x1xf32>
    %cst_107 = arith.constant 2.000000e+00 : f32
    %347 = vector.broadcast %cst_107 : f32 to vector<128x1xf32>
    %348 = arith.subf %347, %346 : vector<128x1xf32>
    %349 = arith.mulf %345, %348 : vector<128x1xf32>
    %350 = vector.broadcast %349 : vector<128x1xf32> to vector<128x128xf32>
    %351 = arith.mulf %338, %350 : vector<128x128xf32>
    %c0_108 = arith.constant 0 : index
    %c0_109 = arith.constant 0 : index
    %352 = vector.load %arg4[%c0_108, %c0_109] : memref<128x128xf32, #tpu.memory_space<vmem>>, vector<128x128xf32>
    tpu.vector_store %arg4[%c0_108, %c0_109], %351 {strides = array<i32>} : memref<128x128xf32, #tpu.memory_space<vmem>>, vector<128x128xf32>,
    return
  }
  func.func @transform_0(%arg0: i32) -> (i32, i32) {
    %c0_i32 = arith.constant 0 : i32
    %c0_i32_0 = arith.constant 0 : i32
    %c0_i32_1 = arith.constant 0 : i32
    return %c0_i32, %c0_i32_0 : i32, i32
  }
  func.func @transform_1(%arg0: i32) -> (i32, i32) {
    %c0_i32 = arith.constant 0 : i32
    %c0_i32_0 = arith.constant 0 : i32
    return %arg0, %c0_i32 : i32, i32
  }
  func.func @transform_2(%arg0: i32) -> (i32, i32) {
    %c0_i32 = arith.constant 0 : i32
    %c0_i32_0 = arith.constant 0 : i32
    %c0_i32_1 = arith.constant 0 : i32
    return %c0_i32, %c0_i32_0 : i32, i32
  }
  func.func @transform_3(%arg0: i32) -> (i32, i32) {
    %c0_i32 = arith.constant 0 : i32
    %c0_i32_0 = arith.constant 0 : i32
    return %arg0, %c0_i32 : i32, i32
  }
}

</mosaic_0001>

<llo_original>
// kernel: tpu_custom_call.1
$region0: #{tpu_custom_call.1}
  #allocation0 [shape = 'u32[]', space=smem, size = 0x4, offset = 0x4, fixed_abs, tag = 'smem constant byte address 0x4 - core index']
  #allocation1 [shape = 'u32[144,128]{1,0:T(1,128)}', space=vmem, size = 0x12000, scoped, tag = 'internal scratch']
  %s0 = inlined_call_operand.vmem [shape: f32[1,32], index: 0, kind: input, shape index: {}]
  %s1 = inlined_call_operand.vmem [shape: f32[128,32], index: 1, kind: input, shape index: {}]
  %s2 = inlined_call_operand.vmem [shape: f32[32,128], index: 2, kind: input, shape index: {}]
  %s3 = inlined_call_operand.hbm [shape: f32[128,128], index: 3, kind: output, shape index: {}]
  %s4 = sld [smem:[#allocation0]]
  $region26: #{tpu_custom_call.1} parent=0
    _
  %s6 = ssub.s32 1, %s4
  %s7 = scalar_select 0, %s6, %s4
  $region1: #{tpu_custom_call.1} parent=0
    #allocation2 [shape = 'u8[512]{0}', space=smem, size = 0x200, scoped, tag = 'input window, operand 0, single buffered']
    #allocation3 [shape = 's32[1]{0}', space=sflag, size = 0x4, scoped, tag = 'scoped memory for tpu_custom_call.1']
    #allocation4 [shape = 's32[1]{0}', space=sflag, size = 0x4, scoped, tag = 'scoped memory for tpu_custom_call.1']
    #allocation5 [shape = 'u8[65536]{0}', space=vmem, size = 0x10000, scoped, tag = 'output window, operand 0, single buffered']
    %8 = vsyncpa [#allocation4], 0
    %9 = vsyncpa [#allocation3], 0
    // Predicated region
    $region2: #{tpu_custom_call.1} parent=1 // pred_check
      _
    $region3: #{tpu_custom_call.1} parent=1 // pred_check_branch
      %11 = sbr.rel (0) target = $region5
    $region4: #{tpu_custom_call.1} parent=1 // pred_region
      %s13 = ssub.s32 16, 16
      %14 = vsyncadd [#allocation4], %s13
      %s16 = sshll.u32 %s0, 4
      %s17 = int_to_ptr.vmem [resolvable:$true] %s16
      %19 = dma.vmem_to_smem %s17, 16, [#allocation2], [#allocation4]
    $region5: #{tpu_custom_call.1} parent=1 // pred_fallthru
      _
    // Predicated region
    $region6: #{tpu_custom_call.1} parent=1 // pred_check
      _
    $region7: #{tpu_custom_call.1} parent=1 // pred_check_branch
      %21 = sbr.rel (0) target = $region9
    $region8: #{tpu_custom_call.1} parent=1 // pred_region
      _
    $region9: #{tpu_custom_call.1} parent=1 // pred_fallthru
      _
    // Predicated region
    $region10: #{tpu_custom_call.1} parent=1 // pred_check
      _
    $region11: #{tpu_custom_call.1} parent=1 // pred_check_branch
      %23 = sbr.rel (0) target = $region13
    $region12: #{tpu_custom_call.1} parent=1 // pred_region
      _
    $region13: #{tpu_custom_call.1} parent=1 // pred_fallthru
      _
    // Predicated region
    $region14: #{tpu_custom_call.1} parent=1 // pred_check
      _
    $region15: #{tpu_custom_call.1} parent=1 // pred_check_branch
      %25 = sbr.rel (0) target = $region17
    $region16: #{tpu_custom_call.1} parent=1 // pred_region
      %26 = dma.done [#allocation4], 16
    $region17: #{tpu_custom_call.1} parent=1 // pred_fallthru
      _
    %27 = sfence
    %v28 = vld [vmem:[%s1] sm:$0xff]
    %v29 = vld [vmem:[%s1 + $0x8] sm:$0xff]
    %v30 = vld [vmem:[%s1 + $0x10] sm:$0xff]
    %v31 = vld [vmem:[%s1 + $0x18] sm:$0xff]
    %v32 = vld [vmem:[%s1 + $0x20] sm:$0xff]
    %v33 = vld [vmem:[%s1 + $0x28] sm:$0xff]
    %v34 = vld [vmem:[%s1 + $0x30] sm:$0xff]
    %v35 = vld [vmem:[%s1 + $0x38] sm:$0xff]
    %v36 = vld [vmem:[%s1 + $0x40] sm:$0xff]
    %v37 = vld [vmem:[%s1 + $0x48] sm:$0xff]
    %v38 = vld [vmem:[%s1 + $0x50] sm:$0xff]
    %v39 = vld [vmem:[%s1 + $0x58] sm:$0xff]
    %v40 = vld [vmem:[%s1 + $0x60] sm:$0xff]
    %v41 = vld [vmem:[%s1 + $0x68] sm:$0xff]
    %v42 = vld [vmem:[%s1 + $0x70] sm:$0xff]
    %v43 = vld [vmem:[%s1 + $0x78] sm:$0xff]
    %s44 = sld [smem:[#allocation2]]
    %v45 = vld [vmem:[%s2] sm:$0x1]
    %47 = vset.pattern.permute.xlu0 0
    %48 = vperm.xlu0 %47, %v28
    %v49 = vpop.permute.xlu0 %48
    %52 = vset.pattern.permute.xlu0 0
    %53 = vperm.xlu0 %52, %v29
    %v54 = vpop.permute.xlu0 %53
    %57 = vset.pattern.permute.xlu0 0
    %58 = vperm.xlu0 %57, %v30
    %v59 = vpop.permute.xlu0 %58
    %62 = vset.pattern.permute.xlu0 0
    %63 = vperm.xlu0 %62, %v31
    %v64 = vpop.permute.xlu0 %63
    %67 = vset.pattern.permute.xlu0 0
    %68 = vperm.xlu0 %67, %v32
    %v69 = vpop.permute.xlu0 %68
    %72 = vset.pattern.permute.xlu0 0
    %73 = vperm.xlu0 %72, %v33
    %v74 = vpop.permute.xlu0 %73
    %77 = vset.pattern.permute.xlu0 0
    %78 = vperm.xlu0 %77, %v34
    %v79 = vpop.permute.xlu0 %78
    %82 = vset.pattern.permute.xlu0 0
    %83 = vperm.xlu0 %82, %v35
    %v84 = vpop.permute.xlu0 %83
    %87 = vset.pattern.permute.xlu0 0
    %88 = vperm.xlu0 %87, %v36
    %v89 = vpop.permute.xlu0 %88
    %92 = vset.pattern.permute.xlu0 0
    %93 = vperm.xlu0 %92, %v37
    %v94 = vpop.permute.xlu0 %93
    %97 = vset.pattern.permute.xlu0 0
    %98 = vperm.xlu0 %97, %v38
    %v99 = vpop.permute.xlu0 %98
    %102 = vset.pattern.permute.xlu0 0
    %103 = vperm.xlu0 %102, %v39
    %v104 = vpop.permute.xlu0 %103
    %107 = vset.pattern.permute.xlu0 0
    %108 = vperm.xlu0 %107, %v40
    %v109 = vpop.permute.xlu0 %108
    %112 = vset.pattern.permute.xlu0 0
    %113 = vperm.xlu0 %112, %v41
    %v114 = vpop.permute.xlu0 %113
    %117 = vset.pattern.permute.xlu0 0
    %118 = vperm.xlu0 %117, %v42
    %v119 = vpop.permute.xlu0 %118
    %122 = vset.pattern.permute.xlu0 0
    %123 = vperm.xlu0 %122, %v43
    %v124 = vpop.permute.xlu0 %123
    %v126 = vlaneseq
    %v127 = vshrl.u32 %v126, 7
    %v128 = vsub.s32 0, %v127
    %v129 = vrot.slane %v45, %v128
    %v130 = vsub.f32 %v49, %v129
    %v131 = vsub.f32 %v54, %v129
    %v132 = vsub.f32 %v59, %v129
    %v133 = vsub.f32 %v64, %v129
    %v134 = vsub.f32 %v69, %v129
    %v135 = vsub.f32 %v74, %v129
    %v136 = vsub.f32 %v79, %v129
    %v137 = vsub.f32 %v84, %v129
    %v138 = vsub.f32 %v89, %v129
    %v139 = vsub.f32 %v94, %v129
    %v140 = vsub.f32 %v99, %v129
    %v141 = vsub.f32 %v104, %v129
    %v142 = vsub.f32 %v109, %v129
    %v143 = vsub.f32 %v114, %v129
    %v144 = vsub.f32 %v119, %v129
    %v145 = vsub.f32 %v124, %v129
    %v146 = vand.u32 2147483647, %v130
    %v147 = vand.u32 2147483647, %v131
    %v148 = vand.u32 2147483647, %v132
    %v149 = vand.u32 2147483647, %v133
    %v150 = vand.u32 2147483647, %v134
    %v151 = vand.u32 2147483647, %v135
    %v152 = vand.u32 2147483647, %v136
    %v153 = vand.u32 2147483647, %v137
    %v154 = vand.u32 2147483647, %v138
    %v155 = vand.u32 2147483647, %v139
    %v156 = vand.u32 2147483647, %v140
    %v157 = vand.u32 2147483647, %v141
    %v158 = vand.u32 2147483647, %v142
    %v159 = vand.u32 2147483647, %v143
    %v160 = vand.u32 2147483647, %v144
    %v161 = vand.u32 2147483647, %v145
    %v162 = vstv %s44
    %v163 = vmul.f32 %v162, %v146
    %v164 = vmul.f32 %v162, %v147
    %v165 = vmul.f32 %v162, %v148
    %v166 = vmul.f32 %v162, %v149
    %v167 = vmul.f32 %v162, %v150
    %v168 = vmul.f32 %v162, %v151
    %v169 = vmul.f32 %v162, %v152
    %v170 = vmul.f32 %v162, %v153
    %v171 = vmul.f32 %v162, %v154
    %v172 = vmul.f32 %v162, %v155
    %v173 = vmul.f32 %v162, %v156
    %v174 = vmul.f32 %v162, %v157
    %v175 = vmul.f32 %v162, %v158
    %v176 = vmul.f32 %v162, %v159
    %v177 = vmul.f32 %v162, %v160
    %v178 = vmul.f32 %v162, %v161
    %v179 = vadd.f32 %v163, 0.0
    %v180 = vadd.f32 %v164, 0.0
    %v181 = vadd.f32 %v165, 0.0
    %v182 = vadd.f32 %v166, 0.0
    %v183 = vadd.f32 %v167, 0.0
    %v184 = vadd.f32 %v168, 0.0
    %v185 = vadd.f32 %v169, 0.0
    %v186 = vadd.f32 %v170, 0.0
    %v187 = vadd.f32 %v171, 0.0
    %v188 = vadd.f32 %v172, 0.0
    %v189 = vadd.f32 %v173, 0.0
    %v190 = vadd.f32 %v174, 0.0
    %v191 = vadd.f32 %v175, 0.0
    %v192 = vadd.f32 %v176, 0.0
    %v193 = vadd.f32 %v177, 0.0
    %v194 = vadd.f32 %v178, 0.0
    %s195 = sld [smem:[#allocation2 + $0x1]]
    %v196 = vld [vmem:[%s2 + $0x1] sm:$0x1]
    %197 = vset.pattern.permute.xlu0 1
    %198 = vperm.xlu0 %197, %v28
    %v199 = vpop.permute.xlu0 %198
    %201 = vset.pattern.permute.xlu0 1
    %202 = vperm.xlu0 %201, %v29
    %v203 = vpop.permute.xlu0 %202
    %205 = vset.pattern.permute.xlu0 1
    %206 = vperm.xlu0 %205, %v30
    %v207 = vpop.permute.xlu0 %206
    %209 = vset.pattern.permute.xlu0 1
    %210 = vperm.xlu0 %209, %v31
    %v211 = vpop.permute.xlu0 %210
    %213 = vset.pattern.permute.xlu0 1
    %214 = vperm.xlu0 %213, %v32
    %v215 = vpop.permute.xlu0 %214
    %217 = vset.pattern.permute.xlu0 1
    %218 = vperm.xlu0 %217, %v33
    %v219 = vpop.permute.xlu0 %218
    %221 = vset.pattern.permute.xlu0 1
    %222 = vperm.xlu0 %221, %v34
    %v223 = vpop.permute.xlu0 %222
    %225 = vset.pattern.permute.xlu0 1
    %226 = vperm.xlu0 %225, %v35
    %v227 = vpop.permute.xlu0 %226
    %229 = vset.pattern.permute.xlu0 1
    %230 = vperm.xlu0 %229, %v36
    %v231 = vpop.permute.xlu0 %230
    %233 = vset.pattern.permute.xlu0 1
    %234 = vperm.xlu0 %233, %v37
    %v235 = vpop.permute.xlu0 %234
    %237 = vset.pattern.permute.xlu0 1
    %238 = vperm.xlu0 %237, %v38
    %v239 = vpop.permute.xlu0 %238
    %241 = vset.pattern.permute.xlu0 1
    %242 = vperm.xlu0 %241, %v39
    %v243 = vpop.permute.xlu0 %242
    %245 = vset.pattern.permute.xlu0 1
    %246 = vperm.xlu0 %245, %v40
    %v247 = vpop.permute.xlu0 %246
    %249 = vset.pattern.permute.xlu0 1
    %250 = vperm.xlu0 %249, %v41
    %v251 = vpop.permute.xlu0 %250
    %253 = vset.pattern.permute.xlu0 1
    %254 = vperm.xlu0 %253, %v42
    %v255 = vpop.permute.xlu0 %254
    %257 = vset.pattern.permute.xlu0 1
    %258 = vperm.xlu0 %257, %v43
    %v259 = vpop.permute.xlu0 %258
    %v261 = vlaneseq
    %v262 = vshrl.u32 %v261, 7
    %v263 = vsub.s32 0, %v262
    %v264 = vrot.slane %v196, %v263
    %v265 = vsub.f32 %v199, %v264
    %v266 = vsub.f32 %v203, %v264
    %v267 = vsub.f32 %v207, %v264
    %v268 = vsub.f32 %v211, %v264
    %v269 = vsub.f32 %v215, %v264
    %v270 = vsub.f32 %v219, %v264
    %v271 = vsub.f32 %v223, %v264
    %v272 = vsub.f32 %v227, %v264
    %v273 = vsub.f32 %v231, %v264
    %v274 = vsub.f32 %v235, %v264
    %v275 = vsub.f32 %v239, %v264
    %v276 = vsub.f32 %v243, %v264
    %v277 = vsub.f32 %v247, %v264
    %v278 = vsub.f32 %v251, %v264
    %v279 = vsub.f32 %v255, %v264
    %v280 = vsub.f32 %v259, %v264
    %v281 = vand.u32 2147483647, %v265
    %v282 = vand.u32 2147483647, %v266
    %v283 = vand.u32 2147483647, %v267
    %v284 = vand.u32 2147483647, %v268
    %v285 = vand.u32 2147483647, %v269
    %v286 = vand.u32 2147483647, %v270
    %v287 = vand.u32 2147483647, %v271
    %v288 = vand.u32 2147483647, %v272
    %v289 = vand.u32 2147483647, %v273
    %v290 = vand.u32 2147483647, %v274
    %v291 = vand.u32 2147483647, %v275
    %v292 = vand.u32 2147483647, %v276
    %v293 = vand.u32 2147483647, %v277
    %v294 = vand.u32 2147483647, %v278
    %v295 = vand.u32 2147483647, %v279
    %v296 = vand.u32 2147483647, %v280
    %v297 = vstv %s195
    %v298 = vmul.f32 %v297, %v281
    %v299 = vmul.f32 %v297, %v282
    %v300 = vmul.f32 %v297, %v283
    %v301 = vmul.f32 %v297, %v284
    %v302 = vmul.f32 %v297, %v285
    %v303 = vmul.f32 %v297, %v286
    %v304 = vmul.f32 %v297, %v287
    %v305 = vmul.f32 %v297, %v288
    %v306 = vmul.f32 %v297, %v289
    %v307 = vmul.f32 %v297, %v290
    %v308 = vmul.f32 %v297, %v291
    %v309 = vmul.f32 %v297, %v292
    %v310 = vmul.f32 %v297, %v293
    %v311 = vmul.f32 %v297, %v294
    %v312 = vmul.f32 %v297, %v295
    %v313 = vmul.f32 %v297, %v296
    %v314 = vadd.f32 %v179, %v298
    %v315 = vadd.f32 %v180, %v299
    %v316 = vadd.f32 %v181, %v300
    %v317 = vadd.f32 %v182, %v301
    %v318 = vadd.f32 %v183, %v302
    %v319 = vadd.f32 %v184, %v303
    %v320 = vadd.f32 %v185, %v304
    %v321 = vadd.f32 %v186, %v305
    %v322 = vadd.f32 %v187, %v306
    %v323 = vadd.f32 %v188, %v307
    %v324 = vadd.f32 %v189, %v308
    %v325 = vadd.f32 %v190, %v309
    %v326 = vadd.f32 %v191, %v310
    %v327 = vadd.f32 %v192, %v311
    %v328 = vadd.f32 %v193, %v312
    %v329 = vadd.f32 %v194, %v313
    %s330 = sld [smem:[#allocation2 + $0x2]]
    %v331 = vld [vmem:[%s2 + $0x2] sm:$0x1]
    %332 = vset.pattern.permute.xlu0 2
    %333 = vperm.xlu0 %332, %v28
    %v334 = vpop.permute.xlu0 %333
    %336 = vset.pattern.permute.xlu0 2
    %337 = vperm.xlu0 %336, %v29
    %v338 = vpop.permute.xlu0 %337
    %340 = vset.pattern.permute.xlu0 2
    %341 = vperm.xlu0 %340, %v30
    %v342 = vpop.permute.xlu0 %341
    %344 = vset.pattern.permute.xlu0 2
    %345 = vperm.xlu0 %344, %v31
    %v346 = vpop.permute.xlu0 %345
    %348 = vset.pattern.permute.xlu0 2
    %349 = vperm.xlu0 %348, %v32
    %v350 = vpop.permute.xlu0 %349
    %352 = vset.pattern.permute.xlu0 2
    %353 = vperm.xlu0 %352, %v33
    %v354 = vpop.permute.xlu0 %353
    %356 = vset.pattern.permute.xlu0 2
    %357 = vperm.xlu0 %356, %v34
    %v358 = vpop.permute.xlu0 %357
    %360 = vset.pattern.permute.xlu0 2
    %361 = vperm.xlu0 %360, %v35
    %v362 = vpop.permute.xlu0 %361
    %364 = vset.pattern.permute.xlu0 2
    %365 = vperm.xlu0 %364, %v36
    %v366 = vpop.permute.xlu0 %365
    %368 = vset.pattern.permute.xlu0 2
    %369 = vperm.xlu0 %368, %v37
    %v370 = vpop.permute.xlu0 %369
    %372 = vset.pattern.permute.xlu0 2
    %373 = vperm.xlu0 %372, %v38
    %v374 = vpop.permute.xlu0 %373
    %376 = vset.pattern.permute.xlu0 2
    %377 = vperm.xlu0 %376, %v39
    %v378 = vpop.permute.xlu0 %377
    %380 = vset.pattern.permute.xlu0 2
    %381 = vperm.xlu0 %380, %v40
    %v382 = vpop.permute.xlu0 %381
    %384 = vset.pattern.permute.xlu0 2
    %385 = vperm.xlu0 %384, %v41
    %v386 = vpop.permute.xlu0 %385
    %388 = vset.pattern.permute.xlu0 2
    %389 = vperm.xlu0 %388, %v42
    %v390 = vpop.permute.xlu0 %389
    %392 = vset.pattern.permute.xlu0 2
    %393 = vperm.xlu0 %392, %v43
    %v394 = vpop.permute.xlu0 %393
    %v396 = vlaneseq
    %v397 = vshrl.u32 %v396, 7
    %v398 = vsub.s32 0, %v397
    %v399 = vrot.slane %v331, %v398
    %v400 = vsub.f32 %v334, %v399
    %v401 = vsub.f32 %v338, %v399
    %v402 = vsub.f32 %v342, %v399
    %v403 = vsub.f32 %v346, %v399
    %v404 = vsub.f32 %v350, %v399
    %v405 = vsub.f32 %v354, %v399
    %v406 = vsub.f32 %v358, %v399
    %v407 = vsub.f32 %v362, %v399
    %v408 = vsub.f32 %v366, %v399
    %v409 = vsub.f32 %v370, %v399
    %v410 = vsub.f32 %v374, %v399
    %v411 = vsub.f32 %v378, %v399
    %v412 = vsub.f32 %v382, %v399
    %v413 = vsub.f32 %v386, %v399
    %v414 = vsub.f32 %v390, %v399
    %v415 = vsub.f32 %v394, %v399
    %v416 = vand.u32 2147483647, %v400
    %v417 = vand.u32 2147483647, %v401
    %v418 = vand.u32 2147483647, %v402
    %v419 = vand.u32 2147483647, %v403
    %v420 = vand.u32 2147483647, %v404
    %v421 = vand.u32 2147483647, %v405
    %v422 = vand.u32 2147483647, %v406
    %v423 = vand.u32 2147483647, %v407
    %v424 = vand.u32 2147483647, %v408
    %v425 = vand.u32 2147483647, %v409
    %v426 = vand.u32 2147483647, %v410
    %v427 = vand.u32 2147483647, %v411
    %v428 = vand.u32 2147483647, %v412
    %v429 = vand.u32 2147483647, %v413
    %v430 = vand.u32 2147483647, %v414
    %v431 = vand.u32 2147483647, %v415
    %v432 = vstv %s330
    %v433 = vmul.f32 %v432, %v416
    %v434 = vmul.f32 %v432, %v417
    %v435 = vmul.f32 %v432, %v418
    %v436 = vmul.f32 %v432, %v419
    %v437 = vmul.f32 %v432, %v420
    %v438 = vmul.f32 %v432, %v421
    %v439 = vmul.f32 %v432, %v422
    %v440 = vmul.f32 %v432, %v423
    %v441 = vmul.f32 %v432, %v424
    %v442 = vmul.f32 %v432, %v425
    %v443 = vmul.f32 %v432, %v426
    %v444 = vmul.f32 %v432, %v427
    %v445 = vmul.f32 %v432, %v428
    %v446 = vmul.f32 %v432, %v429
    %v447 = vmul.f32 %v432, %v430
    %v448 = vmul.f32 %v432, %v431
    %v449 = vadd.f32 %v314, %v433
    %v450 = vadd.f32 %v315, %v434
    %v451 = vadd.f32 %v316, %v435
    %v452 = vadd.f32 %v317, %v436
    %v453 = vadd.f32 %v318, %v437
    %v454 = vadd.f32 %v319, %v438
    %v455 = vadd.f32 %v320, %v439
    %v456 = vadd.f32 %v321, %v440
    %v457 = vadd.f32 %v322, %v441
    %v458 = vadd.f32 %v323, %v442
    %v459 = vadd.f32 %v324, %v443
    %v460 = vadd.f32 %v325, %v444
    %v461 = vadd.f32 %v326, %v445
    %v462 = vadd.f32 %v327, %v446
    %v463 = vadd.f32 %v328, %v447
    %v464 = vadd.f32 %v329, %v448
    %s465 = sld [smem:[#allocation2 + $0x3]]
    %v466 = vld [vmem:[%s2 + $0x3] sm:$0x1]
    %467 = vset.pattern.permute.xlu0 3
    %468 = vperm.xlu0 %467, %v28
    %v469 = vpop.permute.xlu0 %468
    %471 = vset.pattern.permute.xlu0 3
    %472 = vperm.xlu0 %471, %v29
    %v473 = vpop.permute.xlu0 %472
    %475 = vset.pattern.permute.xlu0 3
    %476 = vperm.xlu0 %475, %v30
    %v477 = vpop.permute.xlu0 %476
    %479 = vset.pattern.permute.xlu0 3
    %480 = vperm.xlu0 %479, %v31
    %v481 = vpop.permute.xlu0 %480
    %483 = vset.pattern.permute.xlu0 3
    %484 = vperm.xlu0 %483, %v32
    %v485 = vpop.permute.xlu0 %484
    %487 = vset.pattern.permute.xlu0 3
    %488 = vperm.xlu0 %487, %v33
    %v489 = vpop.permute.xlu0 %488
    %491 = vset.pattern.permute.xlu0 3
    %492 = vperm.xlu0 %491, %v34
    %v493 = vpop.permute.xlu0 %492
    %495 = vset.pattern.permute.xlu0 3
    %496 = vperm.xlu0 %495, %v35
    %v497 = vpop.permute.xlu0 %496
    %499 = vset.pattern.permute.xlu0 3
    %500 = vperm.xlu0 %499, %v36
    %v501 = vpop.permute.xlu0 %500
    %503 = vset.pattern.permute.xlu0 3
    %504 = vperm.xlu0 %503, %v37
    %v505 = vpop.permute.xlu0 %504
    %507 = vset.pattern.permute.xlu0 3
    %508 = vperm.xlu0 %507, %v38
    %v509 = vpop.permute.xlu0 %508
    %511 = vset.pattern.permute.xlu0 3
    %512 = vperm.xlu0 %511, %v39
    %v513 = vpop.permute.xlu0 %512
    %515 = vset.pattern.permute.xlu0 3
    %516 = vperm.xlu0 %515, %v40
    %v517 = vpop.permute.xlu0 %516
    %519 = vset.pattern.permute.xlu0 3
    %520 = vperm.xlu0 %519, %v41
    %v521 = vpop.permute.xlu0 %520
    %523 = vset.pattern.permute.xlu0 3
    %524 = vperm.xlu0 %523, %v42
    %v525 = vpop.permute.xlu0 %524
    %527 = vset.pattern.permute.xlu0 3
    %528 = vperm.xlu0 %527, %v43
    %v529 = vpop.permute.xlu0 %528
    %v531 = vlaneseq
    %v532 = vshrl.u32 %v531, 7
    %v533 = vsub.s32 0, %v532
    %v534 = vrot.slane %v466, %v533
    %v535 = vsub.f32 %v469, %v534
    %v536 = vsub.f32 %v473, %v534
    %v537 = vsub.f32 %v477, %v534
    %v538 = vsub.f32 %v481, %v534
    %v539 = vsub.f32 %v485, %v534
    %v540 = vsub.f32 %v489, %v534
    %v541 = vsub.f32 %v493, %v534
    %v542 = vsub.f32 %v497, %v534
    %v543 = vsub.f32 %v501, %v534
    %v544 = vsub.f32 %v505, %v534
    %v545 = vsub.f32 %v509, %v534
    %v546 = vsub.f32 %v513, %v534
    %v547 = vsub.f32 %v517, %v534
    %v548 = vsub.f32 %v521, %v534
    %v549 = vsub.f32 %v525, %v534
    %v550 = vsub.f32 %v529, %v534
    %v551 = vand.u32 2147483647, %v535
    %v552 = vand.u32 2147483647, %v536
    %v553 = vand.u32 2147483647, %v537
    %v554 = vand.u32 2147483647, %v538
    %v555 = vand.u32 2147483647, %v539
    %v556 = vand.u32 2147483647, %v540
    %v557 = vand.u32 2147483647, %v541
    %v558 = vand.u32 2147483647, %v542
    %v559 = vand.u32 2147483647, %v543
    %v560 = vand.u32 2147483647, %v544
    %v561 = vand.u32 2147483647, %v545
    %v562 = vand.u32 2147483647, %v546
    %v563 = vand.u32 2147483647, %v547
    %v564 = vand.u32 2147483647, %v548
    %v565 = vand.u32 2147483647, %v549
    %v566 = vand.u32 2147483647, %v550
    %v567 = vstv %s465
    %v568 = vmul.f32 %v567, %v551
    %v569 = vmul.f32 %v567, %v552
    %v570 = vmul.f32 %v567, %v553
    %v571 = vmul.f32 %v567, %v554
    %v572 = vmul.f32 %v567, %v555
    %v573 = vmul.f32 %v567, %v556
    %v574 = vmul.f32 %v567, %v557
    %v575 = vmul.f32 %v567, %v558
    %v576 = vmul.f32 %v567, %v559
    %v577 = vmul.f32 %v567, %v560
    %v578 = vmul.f32 %v567, %v561
    %v579 = vmul.f32 %v567, %v562
    %v580 = vmul.f32 %v567, %v563
    %v581 = vmul.f32 %v567, %v564
    %v582 = vmul.f32 %v567, %v565
    %v583 = vmul.f32 %v567, %v566
    %v584 = vadd.f32 %v449, %v568
    %v585 = vadd.f32 %v450, %v569
    %v586 = vadd.f32 %v451, %v570
    %v587 = vadd.f32 %v452, %v571
    %v588 = vadd.f32 %v453, %v572
    %v589 = vadd.f32 %v454, %v573
    %v590 = vadd.f32 %v455, %v574
    %v591 = vadd.f32 %v456, %v575
    %v592 = vadd.f32 %v457, %v576
    %v593 = vadd.f32 %v458, %v577
    %v594 = vadd.f32 %v459, %v578
    %v595 = vadd.f32 %v460, %v579
    %v596 = vadd.f32 %v461, %v580
    %v597 = vadd.f32 %v462, %v581
    %v598 = vadd.f32 %v463, %v582
    %v599 = vadd.f32 %v464, %v583
    %s600 = sld [smem:[#allocation2 + $0x4]]
    %v601 = vld [vmem:[%s2 + $0x4] sm:$0x1]
    %602 = vset.pattern.permute.xlu0 4
    %603 = vperm.xlu0 %602, %v28
    %v604 = vpop.permute.xlu0 %603
    %606 = vset.pattern.permute.xlu0 4
    %607 = vperm.xlu0 %606, %v29
    %v608 = vpop.permute.xlu0 %607
    %610 = vset.pattern.permute.xlu0 4
    %611 = vperm.xlu0 %610, %v30
    %v612 = vpop.permute.xlu0 %611
    %614 = vset.pattern.permute.xlu0 4
    %615 = vperm.xlu0 %614, %v31
    %v616 = vpop.permute.xlu0 %615
    %618 = vset.pattern.permute.xlu0 4
    %619 = vperm.xlu0 %618, %v32
    %v620 = vpop.permute.xlu0 %619
    %622 = vset.pattern.permute.xlu0 4
    %623 = vperm.xlu0 %622, %v33
    %v624 = vpop.permute.xlu0 %623
    %626 = vset.pattern.permute.xlu0 4
    %627 = vperm.xlu0 %626, %v34
    %v628 = vpop.permute.xlu0 %627
    %630 = vset.pattern.permute.xlu0 4
    %631 = vperm.xlu0 %630, %v35
    %v632 = vpop.permute.xlu0 %631
    %634 = vset.pattern.permute.xlu0 4
    %635 = vperm.xlu0 %634, %v36
    %v636 = vpop.permute.xlu0 %635
    %638 = vset.pattern.permute.xlu0 4
    %639 = vperm.xlu0 %638, %v37
    %v640 = vpop.permute.xlu0 %639
    %642 = vset.pattern.permute.xlu0 4
    %643 = vperm.xlu0 %642, %v38
    %v644 = vpop.permute.xlu0 %643
    %646 = vset.pattern.permute.xlu0 4
    %647 = vperm.xlu0 %646, %v39
    %v648 = vpop.permute.xlu0 %647
    %650 = vset.pattern.permute.xlu0 4
    %651 = vperm.xlu0 %650, %v40
    %v652 = vpop.permute.xlu0 %651
    %654 = vset.pattern.permute.xlu0 4
    %655 = vperm.xlu0 %654, %v41
    %v656 = vpop.permute.xlu0 %655
    %658 = vset.pattern.permute.xlu0 4
    %659 = vperm.xlu0 %658, %v42
    %v660 = vpop.permute.xlu0 %659
    %662 = vset.pattern.permute.xlu0 4
    %663 = vperm.xlu0 %662, %v43
    %v664 = vpop.permute.xlu0 %663
    %v666 = vlaneseq
    %v667 = vshrl.u32 %v666, 7
    %v668 = vsub.s32 0, %v667
    %v669 = vrot.slane %v601, %v668
    %v670 = vsub.f32 %v604, %v669
    %v671 = vsub.f32 %v608, %v669
    %v672 = vsub.f32 %v612, %v669
    %v673 = vsub.f32 %v616, %v669
    %v674 = vsub.f32 %v620, %v669
    %v675 = vsub.f32 %v624, %v669
    %v676 = vsub.f32 %v628, %v669
    %v677 = vsub.f32 %v632, %v669
    %v678 = vsub.f32 %v636, %v669
    %v679 = vsub.f32 %v640, %v669
    %v680 = vsub.f32 %v644, %v669
    %v681 = vsub.f32 %v648, %v669
    %v682 = vsub.f32 %v652, %v669
    %v683 = vsub.f32 %v656, %v669
    %v684 = vsub.f32 %v660, %v669
    %v685 = vsub.f32 %v664, %v669
    %v686 = vand.u32 2147483647, %v670
    %v687 = vand.u32 2147483647, %v671
    %v688 = vand.u32 2147483647, %v672
    %v689 = vand.u32 2147483647, %v673
    %v690 = vand.u32 2147483647, %v674
    %v691 = vand.u32 2147483647, %v675
    %v692 = vand.u32 2147483647, %v676
    %v693 = vand.u32 2147483647, %v677
    %v694 = vand.u32 2147483647, %v678
    %v695 = vand.u32 2147483647, %v679
    %v696 = vand.u32 2147483647, %v680
    %v697 = vand.u32 2147483647, %v681
    %v698 = vand.u32 2147483647, %v682
    %v699 = vand.u32 2147483647, %v683
    %v700 = vand.u32 2147483647, %v684
    %v701 = vand.u32 2147483647, %v685
    %v702 = vstv %s600
    %v703 = vmul.f32 %v702, %v686
    %v704 = vmul.f32 %v702, %v687
    %v705 = vmul.f32 %v702, %v688
    %v706 = vmul.f32 %v702, %v689
    %v707 = vmul.f32 %v702, %v690
    %v708 = vmul.f32 %v702, %v691
    %v709 = vmul.f32 %v702, %v692
    %v710 = vmul.f32 %v702, %v693
    %v711 = vmul.f32 %v702, %v694
    %v712 = vmul.f32 %v702, %v695
    %v713 = vmul.f32 %v702, %v696
    %v714 = vmul.f32 %v702, %v697
    %v715 = vmul.f32 %v702, %v698
    %v716 = vmul.f32 %v702, %v699
    %v717 = vmul.f32 %v702, %v700
    %v718 = vmul.f32 %v702, %v701
    %v719 = vadd.f32 %v584, %v703
    %v720 = vadd.f32 %v585, %v704
    %v721 = vadd.f32 %v586, %v705
    %v722 = vadd.f32 %v587, %v706
    %v723 = vadd.f32 %v588, %v707
    %v724 = vadd.f32 %v589, %v708
    %v725 = vadd.f32 %v590, %v709
    %v726 = vadd.f32 %v591, %v710
    %v727 = vadd.f32 %v592, %v711
    %v728 = vadd.f32 %v593, %v712
    %v729 = vadd.f32 %v594, %v713
    %v730 = vadd.f32 %v595, %v714
    %v731 = vadd.f32 %v596, %v715
    %v732 = vadd.f32 %v597, %v716
    %v733 = vadd.f32 %v598, %v717
    %v734 = vadd.f32 %v599, %v718
    %s735 = sld [smem:[#allocation2 + $0x5]]
    %v736 = vld [vmem:[%s2 + $0x5] sm:$0x1]
    %737 = vset.pattern.permute.xlu0 5
    %738 = vperm.xlu0 %737, %v28
    %v739 = vpop.permute.xlu0 %738
    %741 = vset.pattern.permute.xlu0 5
    %742 = vperm.xlu0 %741, %v29
    %v743 = vpop.permute.xlu0 %742
    %745 = vset.pattern.permute.xlu0 5
    %746 = vperm.xlu0 %745, %v30
    %v747 = vpop.permute.xlu0 %746
    %749 = vset.pattern.permute.xlu0 5
    %750 = vperm.xlu0 %749, %v31
    %v751 = vpop.permute.xlu0 %750
    %753 = vset.pattern.permute.xlu0 5
    %754 = vperm.xlu0 %753, %v32
    %v755 = vpop.permute.xlu0 %754
    %757 = vset.pattern.permute.xlu0 5
    %758 = vperm.xlu0 %757, %v33
    %v759 = vpop.permute.xlu0 %758
    %761 = vset.pattern.permute.xlu0 5
    %762 = vperm.xlu0 %761, %v34
    %v763 = vpop.permute.xlu0 %762
    %765 = vset.pattern.permute.xlu0 5
    %766 = vperm.xlu0 %765, %v35
    %v767 = vpop.permute.xlu0 %766
    %769 = vset.pattern.permute.xlu0 5
    %770 = vperm.xlu0 %769, %v36
    %v771 = vpop.permute.xlu0 %770
    %773 = vset.pattern.permute.xlu0 5
    %774 = vperm.xlu0 %773, %v37
    %v775 = vpop.permute.xlu0 %774
    %777 = vset.pattern.permute.xlu0 5
    %778 = vperm.xlu0 %777, %v38
    %v779 = vpop.permute.xlu0 %778
    %781 = vset.pattern.permute.xlu0 5
    %782 = vperm.xlu0 %781, %v39
    %v783 = vpop.permute.xlu0 %782
    %785 = vset.pattern.permute.xlu0 5
    %786 = vperm.xlu0 %785, %v40
    %v787 = vpop.permute.xlu0 %786
    %789 = vset.pattern.permute.xlu0 5
    %790 = vperm.xlu0 %789, %v41
    %v791 = vpop.permute.xlu0 %790
    %793 = vset.pattern.permute.xlu0 5
    %794 = vperm.xlu0 %793, %v42
    %v795 = vpop.permute.xlu0 %794
    %797 = vset.pattern.permute.xlu0 5
    %798 = vperm.xlu0 %797, %v43
    %v799 = vpop.permute.xlu0 %798
    %v801 = vlaneseq
    %v802 = vshrl.u32 %v801, 7
    %v803 = vsub.s32 0, %v802
    %v804 = vrot.slane %v736, %v803
    %v805 = vsub.f32 %v739, %v804
    %v806 = vsub.f32 %v743, %v804
    %v807 = vsub.f32 %v747, %v804
    %v808 = vsub.f32 %v751, %v804
    %v809 = vsub.f32 %v755, %v804
    %v810 = vsub.f32 %v759, %v804
    %v811 = vsub.f32 %v763, %v804
    %v812 = vsub.f32 %v767, %v804
    %v813 = vsub.f32 %v771, %v804
    %v814 = vsub.f32 %v775, %v804
    %v815 = vsub.f32 %v779, %v804
    %v816 = vsub.f32 %v783, %v804
    %v817 = vsub.f32 %v787, %v804
    %v818 = vsub.f32 %v791, %v804
    %v819 = vsub.f32 %v795, %v804
    %v820 = vsub.f32 %v799, %v804
    %v821 = vand.u32 2147483647, %v805
    %v822 = vand.u32 2147483647, %v806
    %v823 = vand.u32 2147483647, %v807
    %v824 = vand.u32 2147483647, %v808
    %v825 = vand.u32 2147483647, %v809
    %v826 = vand.u32 2147483647, %v810
    %v827 = vand.u32 2147483647, %v811
    %v828 = vand.u32 2147483647, %v812
    %v829 = vand.u32 2147483647, %v813
    %v830 = vand.u32 2147483647, %v814
    %v831 = vand.u32 2147483647, %v815
    %v832 = vand.u32 2147483647, %v816
    %v833 = vand.u32 2147483647, %v817
    %v834 = vand.u32 2147483647, %v818
    %v835 = vand.u32 2147483647, %v819
    %v836 = vand.u32 2147483647, %v820
    %v837 = vstv %s735
    %v838 = vmul.f32 %v837, %v821
    %v839 = vmul.f32 %v837, %v822
    %v840 = vmul.f32 %v837, %v823
    %v841 = vmul.f32 %v837, %v824
    %v842 = vmul.f32 %v837, %v825
    %v843 = vmul.f32 %v837, %v826
    %v844 = vmul.f32 %v837, %v827
    %v845 = vmul.f32 %v837, %v828
    %v846 = vmul.f32 %v837, %v829
    %v847 = vmul.f32 %v837, %v830
    %v848 = vmul.f32 %v837, %v831
    %v849 = vmul.f32 %v837, %v832
    %v850 = vmul.f32 %v837, %v833
    %v851 = vmul.f32 %v837, %v834
    %v852 = vmul.f32 %v837, %v835
    %v853 = vmul.f32 %v837, %v836
    %v854 = vadd.f32 %v719, %v838
    %v855 = vadd.f32 %v720, %v839
    %v856 = vadd.f32 %v721, %v840
    %v857 = vadd.f32 %v722, %v841
    %v858 = vadd.f32 %v723, %v842
    %v859 = vadd.f32 %v724, %v843
    %v860 = vadd.f32 %v725, %v844
    %v861 = vadd.f32 %v726, %v845
    %v862 = vadd.f32 %v727, %v846
    %v863 = vadd.f32 %v728, %v847
    %v864 = vadd.f32 %v729, %v848
    %v865 = vadd.f32 %v730, %v849
    %v866 = vadd.f32 %v731, %v850
    %v867 = vadd.f32 %v732, %v851
    %v868 = vadd.f32 %v733, %v852
    %v869 = vadd.f32 %v734, %v853
    %s870 = sld [smem:[#allocation2 + $0x6]]
    %v871 = vld [vmem:[%s2 + $0x6] sm:$0x1]
    %872 = vset.pattern.permute.xlu0 6
    %873 = vperm.xlu0 %872, %v28
    %v874 = vpop.permute.xlu0 %873
    %876 = vset.pattern.permute.xlu0 6
    %877 = vperm.xlu0 %876, %v29
    %v878 = vpop.permute.xlu0 %877
    %880 = vset.pattern.permute.xlu0 6
    %881 = vperm.xlu0 %880, %v30
    %v882 = vpop.permute.xlu0 %881
    %884 = vset.pattern.permute.xlu0 6
    %885 = vperm.xlu0 %884, %v31
    %v886 = vpop.permute.xlu0 %885
    %888 = vset.pattern.permute.xlu0 6
    %889 = vperm.xlu0 %888, %v32
    %v890 = vpop.permute.xlu0 %889
    %892 = vset.pattern.permute.xlu0 6
    %893 = vperm.xlu0 %892, %v33
    %v894 = vpop.permute.xlu0 %893
    %896 = vset.pattern.permute.xlu0 6
    %897 = vperm.xlu0 %896, %v34
    %v898 = vpop.permute.xlu0 %897
    %900 = vset.pattern.permute.xlu0 6
    %901 = vperm.xlu0 %900, %v35
    %v902 = vpop.permute.xlu0 %901
    %904 = vset.pattern.permute.xlu0 6
    %905 = vperm.xlu0 %904, %v36
    %v906 = vpop.permute.xlu0 %905
    %908 = vset.pattern.permute.xlu0 6
    %909 = vperm.xlu0 %908, %v37
    %v910 = vpop.permute.xlu0 %909
    %912 = vset.pattern.permute.xlu0 6
    %913 = vperm.xlu0 %912, %v38
    %v914 = vpop.permute.xlu0 %913
    %916 = vset.pattern.permute.xlu0 6
    %917 = vperm.xlu0 %916, %v39
    %v918 = vpop.permute.xlu0 %917
    %920 = vset.pattern.permute.xlu0 6
    %921 = vperm.xlu0 %920, %v40
    %v922 = vpop.permute.xlu0 %921
    %924 = vset.pattern.permute.xlu0 6
    %925 = vperm.xlu0 %924, %v41
    %v926 = vpop.permute.xlu0 %925
    %928 = vset.pattern.permute.xlu0 6
    %929 = vperm.xlu0 %928, %v42
    %v930 = vpop.permute.xlu0 %929
    %932 = vset.pattern.permute.xlu0 6
    %933 = vperm.xlu0 %932, %v43
    %v934 = vpop.permute.xlu0 %933
    %v936 = vlaneseq
    %v937 = vshrl.u32 %v936, 7
    %v938 = vsub.s32 0, %v937
    %v939 = vrot.slane %v871, %v938
    %v940 = vsub.f32 %v874, %v939
    %v941 = vsub.f32 %v878, %v939
    %v942 = vsub.f32 %v882, %v939
    %v943 = vsub.f32 %v886, %v939
    %v944 = vsub.f32 %v890, %v939
    %v945 = vsub.f32 %v894, %v939
    %v946 = vsub.f32 %v898, %v939
    %v947 = vsub.f32 %v902, %v939
    %v948 = vsub.f32 %v906, %v939
    %v949 = vsub.f32 %v910, %v939
    %v950 = vsub.f32 %v914, %v939
    %v951 = vsub.f32 %v918, %v939
    %v952 = vsub.f32 %v922, %v939
    %v953 = vsub.f32 %v926, %v939
    %v954 = vsub.f32 %v930, %v939
    %v955 = vsub.f32 %v934, %v939
    %v956 = vand.u32 2147483647, %v940
    %v957 = vand.u32 2147483647, %v941
    %v958 = vand.u32 2147483647, %v942
    %v959 = vand.u32 2147483647, %v943
    %v960 = vand.u32 2147483647, %v944
    %v961 = vand.u32 2147483647, %v945
    %v962 = vand.u32 2147483647, %v946
    %v963 = vand.u32 2147483647, %v947
    %v964 = vand.u32 2147483647, %v948
    %v965 = vand.u32 2147483647, %v949
    %v966 = vand.u32 2147483647, %v950
    %v967 = vand.u32 2147483647, %v951
    %v968 = vand.u32 2147483647, %v952
    %v969 = vand.u32 2147483647, %v953
    %v970 = vand.u32 2147483647, %v954
    %v971 = vand.u32 2147483647, %v955
    %v972 = vstv %s870
    %v973 = vmul.f32 %v972, %v956
    %v974 = vmul.f32 %v972, %v957
    %v975 = vmul.f32 %v972, %v958
    %v976 = vmul.f32 %v972, %v959
    %v977 = vmul.f32 %v972, %v960
    %v978 = vmul.f32 %v972, %v961
    %v979 = vmul.f32 %v972, %v962
    %v980 = vmul.f32 %v972, %v963
    %v981 = vmul.f32 %v972, %v964
    %v982 = vmul.f32 %v972, %v965
    %v983 = vmul.f32 %v972, %v966
    %v984 = vmul.f32 %v972, %v967
    %v985 = vmul.f32 %v972, %v968
    %v986 = vmul.f32 %v972, %v969
    %v987 = vmul.f32 %v972, %v970
    %v988 = vmul.f32 %v972, %v971
    %v989 = vadd.f32 %v854, %v973
    %v990 = vadd.f32 %v855, %v974
    %v991 = vadd.f32 %v856, %v975
    %v992 = vadd.f32 %v857, %v976
    %v993 = vadd.f32 %v858, %v977
    %v994 = vadd.f32 %v859, %v978
    %v995 = vadd.f32 %v860, %v979
    %v996 = vadd.f32 %v861, %v980
    %v997 = vadd.f32 %v862, %v981
    %v998 = vadd.f32 %v863, %v982
    %v999 = vadd.f32 %v864, %v983
    %v1000 = vadd.f32 %v865, %v984
    %v1001 = vadd.f32 %v866, %v985
    %v1002 = vadd.f32 %v867, %v986
    %v1003 = vadd.f32 %v868, %v987
    %v1004 = vadd.f32 %v869, %v988
    %s1005 = sld [smem:[#allocation2 + $0x7]]
    %v1006 = vld [vmem:[%s2 + $0x7] sm:$0x1]
    %1007 = vset.pattern.permute.xlu0 7
    %1008 = vperm.xlu0 %1007, %v28
    %v1009 = vpop.permute.xlu0 %1008
    %1011 = vset.pattern.permute.xlu0 7
    %1012 = vperm.xlu0 %1011, %v29
    %v1013 = vpop.permute.xlu0 %1012
    %1015 = vset.pattern.permute.xlu0 7
    %1016 = vperm.xlu0 %1015, %v30
    %v1017 = vpop.permute.xlu0 %1016
    %1019 = vset.pattern.permute.xlu0 7
    %1020 = vperm.xlu0 %1019, %v31
    %v1021 = vpop.permute.xlu0 %1020
    %1023 = vset.pattern.permute.xlu0 7
    %1024 = vperm.xlu0 %1023, %v32
    %v1025 = vpop.permute.xlu0 %1024
    %1027 = vset.pattern.permute.xlu0 7
    %1028 = vperm.xlu0 %1027, %v33
    %v1029 = vpop.permute.xlu0 %1028
    %1031 = vset.pattern.permute.xlu0 7
    %1032 = vperm.xlu0 %1031, %v34
    %v1033 = vpop.permute.xlu0 %1032
    %1035 = vset.pattern.permute.xlu0 7
    %1036 = vperm.xlu0 %1035, %v35
    %v1037 = vpop.permute.xlu0 %1036
    %1039 = vset.pattern.permute.xlu0 7
    %1040 = vperm.xlu0 %1039, %v36
    %v1041 = vpop.permute.xlu0 %1040
    %1043 = vset.pattern.permute.xlu0 7
    %1044 = vperm.xlu0 %1043, %v37
    %v1045 = vpop.permute.xlu0 %1044
    %1047 = vset.pattern.permute.xlu0 7
    %1048 = vperm.xlu0 %1047, %v38
    %v1049 = vpop.permute.xlu0 %1048
    %1051 = vset.pattern.permute.xlu0 7
    %1052 = vperm.xlu0 %1051, %v39
    %v1053 = vpop.permute.xlu0 %1052
    %1055 = vset.pattern.permute.xlu0 7
    %1056 = vperm.xlu0 %1055, %v40
    %v1057 = vpop.permute.xlu0 %1056
    %1059 = vset.pattern.permute.xlu0 7
    %1060 = vperm.xlu0 %1059, %v41
    %v1061 = vpop.permute.xlu0 %1060
    %1063 = vset.pattern.permute.xlu0 7
    %1064 = vperm.xlu0 %1063, %v42
    %v1065 = vpop.permute.xlu0 %1064
    %1067 = vset.pattern.permute.xlu0 7
    %1068 = vperm.xlu0 %1067, %v43
    %v1069 = vpop.permute.xlu0 %1068
    %v1071 = vlaneseq
    %v1072 = vshrl.u32 %v1071, 7
    %v1073 = vsub.s32 0, %v1072
    %v1074 = vrot.slane %v1006, %v1073
    %v1075 = vsub.f32 %v1009, %v1074
    %v1076 = vsub.f32 %v1013, %v1074
    %v1077 = vsub.f32 %v1017, %v1074
    %v1078 = vsub.f32 %v1021, %v1074
    %v1079 = vsub.f32 %v1025, %v1074
    %v1080 = vsub.f32 %v1029, %v1074
    %v1081 = vsub.f32 %v1033, %v1074
    %v1082 = vsub.f32 %v1037, %v1074
    %v1083 = vsub.f32 %v1041, %v1074
    %v1084 = vsub.f32 %v1045, %v1074
    %v1085 = vsub.f32 %v1049, %v1074
    %v1086 = vsub.f32 %v1053, %v1074
    %v1087 = vsub.f32 %v1057, %v1074
    %v1088 = vsub.f32 %v1061, %v1074
    %v1089 = vsub.f32 %v1065, %v1074
    %v1090 = vsub.f32 %v1069, %v1074
    %v1091 = vand.u32 2147483647, %v1075
    %v1092 = vand.u32 2147483647, %v1076
    %v1093 = vand.u32 2147483647, %v1077
    %v1094 = vand.u32 2147483647, %v1078
    %v1095 = vand.u32 2147483647, %v1079
    %v1096 = vand.u32 2147483647, %v1080
    %v1097 = vand.u32 2147483647, %v1081
    %v1098 = vand.u32 2147483647, %v1082
    %v1099 = vand.u32 2147483647, %v1083
    %v1100 = vand.u32 2147483647, %v1084
    %v1101 = vand.u32 2147483647, %v1085
    %v1102 = vand.u32 2147483647, %v1086
    %v1103 = vand.u32 2147483647, %v1087
    %v1104 = vand.u32 2147483647, %v1088
    %v1105 = vand.u32 2147483647, %v1089
    %v1106 = vand.u32 2147483647, %v1090
    %v1107 = vstv %s1005
    %v1108 = vmul.f32 %v1107, %v1091
    %v1109 = vmul.f32 %v1107, %v1092
    %v1110 = vmul.f32 %v1107, %v1093
    %v1111 = vmul.f32 %v1107, %v1094
    %v1112 = vmul.f32 %v1107, %v1095
    %v1113 = vmul.f32 %v1107, %v1096
    %v1114 = vmul.f32 %v1107, %v1097
    %v1115 = vmul.f32 %v1107, %v1098
    %v1116 = vmul.f32 %v1107, %v1099
    %v1117 = vmul.f32 %v1107, %v1100
    %v1118 = vmul.f32 %v1107, %v1101
    %v1119 = vmul.f32 %v1107, %v1102
    %v1120 = vmul.f32 %v1107, %v1103
    %v1121 = vmul.f32 %v1107, %v1104
    %v1122 = vmul.f32 %v1107, %v1105
    %v1123 = vmul.f32 %v1107, %v1106
    %v1124 = vadd.f32 %v989, %v1108
    %v1125 = vadd.f32 %v990, %v1109
    %v1126 = vadd.f32 %v991, %v1110
    %v1127 = vadd.f32 %v992, %v1111
    %v1128 = vadd.f32 %v993, %v1112
    %v1129 = vadd.f32 %v994, %v1113
    %v1130 = vadd.f32 %v995, %v1114
    %v1131 = vadd.f32 %v996, %v1115
    %v1132 = vadd.f32 %v997, %v1116
    %v1133 = vadd.f32 %v998, %v1117
    %v1134 = vadd.f32 %v999, %v1118
    %v1135 = vadd.f32 %v1000, %v1119
    %v1136 = vadd.f32 %v1001, %v1120
    %v1137 = vadd.f32 %v1002, %v1121
    %v1138 = vadd.f32 %v1003, %v1122
    %v1139 = vadd.f32 %v1004, %v1123
    %s1140 = sld [smem:[#allocation2 + $0x8]]
    %v1141 = vld [vmem:[%s2 + $0x8] sm:$0x1]
    %1142 = vset.pattern.permute.xlu0 8
    %1143 = vperm.xlu0 %1142, %v28
    %v1144 = vpop.permute.xlu0 %1143
    %1146 = vset.pattern.permute.xlu0 8
    %1147 = vperm.xlu0 %1146, %v29
    %v1148 = vpop.permute.xlu0 %1147
    %1150 = vset.pattern.permute.xlu0 8
    %1151 = vperm.xlu0 %1150, %v30
    %v1152 = vpop.permute.xlu0 %1151
    %1154 = vset.pattern.permute.xlu0 8
    %1155 = vperm.xlu0 %1154, %v31
    %v1156 = vpop.permute.xlu0 %1155
    %1158 = vset.pattern.permute.xlu0 8
    %1159 = vperm.xlu0 %1158, %v32
    %v1160 = vpop.permute.xlu0 %1159
    %1162 = vset.pattern.permute.xlu0 8
    %1163 = vperm.xlu0 %1162, %v33
    %v1164 = vpop.permute.xlu0 %1163
    %1166 = vset.pattern.permute.xlu0 8
    %1167 = vperm.xlu0 %1166, %v34
    %v1168 = vpop.permute.xlu0 %1167
    %1170 = vset.pattern.permute.xlu0 8
    %1171 = vperm.xlu0 %1170, %v35
    %v1172 = vpop.permute.xlu0 %1171
    %1174 = vset.pattern.permute.xlu0 8
    %1175 = vperm.xlu0 %1174, %v36
    %v1176 = vpop.permute.xlu0 %1175
    %1178 = vset.pattern.permute.xlu0 8
    %1179 = vperm.xlu0 %1178, %v37
    %v1180 = vpop.permute.xlu0 %1179
    %1182 = vset.pattern.permute.xlu0 8
    %1183 = vperm.xlu0 %1182, %v38
    %v1184 = vpop.permute.xlu0 %1183
    %1186 = vset.pattern.permute.xlu0 8
    %1187 = vperm.xlu0 %1186, %v39
    %v1188 = vpop.permute.xlu0 %1187
    %1190 = vset.pattern.permute.xlu0 8
    %1191 = vperm.xlu0 %1190, %v40
    %v1192 = vpop.permute.xlu0 %1191
    %1194 = vset.pattern.permute.xlu0 8
    %1195 = vperm.xlu0 %1194, %v41
    %v1196 = vpop.permute.xlu0 %1195
    %1198 = vset.pattern.permute.xlu0 8
    %1199 = vperm.xlu0 %1198, %v42
    %v1200 = vpop.permute.xlu0 %1199
    %1202 = vset.pattern.permute.xlu0 8
    %1203 = vperm.xlu0 %1202, %v43
    %v1204 = vpop.permute.xlu0 %1203
    %v1206 = vlaneseq
    %v1207 = vshrl.u32 %v1206, 7
    %v1208 = vsub.s32 0, %v1207
    %v1209 = vrot.slane %v1141, %v1208
    %v1210 = vsub.f32 %v1144, %v1209
    %v1211 = vsub.f32 %v1148, %v1209
    %v1212 = vsub.f32 %v1152, %v1209
    %v1213 = vsub.f32 %v1156, %v1209
    %v1214 = vsub.f32 %v1160, %v1209
    %v1215 = vsub.f32 %v1164, %v1209
    %v1216 = vsub.f32 %v1168, %v1209
    %v1217 = vsub.f32 %v1172, %v1209
    %v1218 = vsub.f32 %v1176, %v1209
    %v1219 = vsub.f32 %v1180, %v1209
    %v1220 = vsub.f32 %v1184, %v1209
    %v1221 = vsub.f32 %v1188, %v1209
    %v1222 = vsub.f32 %v1192, %v1209
    %v1223 = vsub.f32 %v1196, %v1209
    %v1224 = vsub.f32 %v1200, %v1209
    %v1225 = vsub.f32 %v1204, %v1209
    %v1226 = vand.u32 2147483647, %v1210
    %v1227 = vand.u32 2147483647, %v1211
    %v1228 = vand.u32 2147483647, %v1212
    %v1229 = vand.u32 2147483647, %v1213
    %v1230 = vand.u32 2147483647, %v1214
    %v1231 = vand.u32 2147483647, %v1215
    %v1232 = vand.u32 2147483647, %v1216
    %v1233 = vand.u32 2147483647, %v1217
    %v1234 = vand.u32 2147483647, %v1218
    %v1235 = vand.u32 2147483647, %v1219
    %v1236 = vand.u32 2147483647, %v1220
    %v1237 = vand.u32 2147483647, %v1221
    %v1238 = vand.u32 2147483647, %v1222
    %v1239 = vand.u32 2147483647, %v1223
    %v1240 = vand.u32 2147483647, %v1224
    %v1241 = vand.u32 2147483647, %v1225
    %v1242 = vstv %s1140
    %v1243 = vmul.f32 %v1242, %v1226
    %v1244 = vmul.f32 %v1242, %v1227
    %v1245 = vmul.f32 %v1242, %v1228
    %v1246 = vmul.f32 %v1242, %v1229
    %v1247 = vmul.f32 %v1242, %v1230
    %v1248 = vmul.f32 %v1242, %v1231
    %v1249 = vmul.f32 %v1242, %v1232
    %v1250 = vmul.f32 %v1242, %v1233
    %v1251 = vmul.f32 %v1242, %v1234
    %v1252 = vmul.f32 %v1242, %v1235
    %v1253 = vmul.f32 %v1242, %v1236
    %v1254 = vmul.f32 %v1242, %v1237
    %v1255 = vmul.f32 %v1242, %v1238
    %v1256 = vmul.f32 %v1242, %v1239
    %v1257 = vmul.f32 %v1242, %v1240
    %v1258 = vmul.f32 %v1242, %v1241
    %v1259 = vadd.f32 %v1124, %v1243
    %v1260 = vadd.f32 %v1125, %v1244
    %v1261 = vadd.f32 %v1126, %v1245
    %v1262 = vadd.f32 %v1127, %v1246
    %v1263 = vadd.f32 %v1128, %v1247
    %v1264 = vadd.f32 %v1129, %v1248
    %v1265 = vadd.f32 %v1130, %v1249
    %v1266 = vadd.f32 %v1131, %v1250
    %v1267 = vadd.f32 %v1132, %v1251
    %v1268 = vadd.f32 %v1133, %v1252
    %v1269 = vadd.f32 %v1134, %v1253
    %v1270 = vadd.f32 %v1135, %v1254
    %v1271 = vadd.f32 %v1136, %v1255
    %v1272 = vadd.f32 %v1137, %v1256
    %v1273 = vadd.f32 %v1138, %v1257
    %v1274 = vadd.f32 %v1139, %v1258
    %s1275 = sld [smem:[#allocation2 + $0x9]]
    %v1276 = vld [vmem:[%s2 + $0x9] sm:$0x1]
    %1277 = vset.pattern.permute.xlu0 9
    %1278 = vperm.xlu0 %1277, %v28
    %v1279 = vpop.permute.xlu0 %1278
    %1281 = vset.pattern.permute.xlu0 9
    %1282 = vperm.xlu0 %1281, %v29
    %v1283 = vpop.permute.xlu0 %1282
    %1285 = vset.pattern.permute.xlu0 9
    %1286 = vperm.xlu0 %1285, %v30
    %v1287 = vpop.permute.xlu0 %1286
    %1289 = vset.pattern.permute.xlu0 9
    %1290 = vperm.xlu0 %1289, %v31
    %v1291 = vpop.permute.xlu0 %1290
    %1293 = vset.pattern.permute.xlu0 9
    %1294 = vperm.xlu0 %1293, %v32
    %v1295 = vpop.permute.xlu0 %1294
    %1297 = vset.pattern.permute.xlu0 9
    %1298 = vperm.xlu0 %1297, %v33
    %v1299 = vpop.permute.xlu0 %1298
    %1301 = vset.pattern.permute.xlu0 9
    %1302 = vperm.xlu0 %1301, %v34
    %v1303 = vpop.permute.xlu0 %1302
    %1305 = vset.pattern.permute.xlu0 9
    %1306 = vperm.xlu0 %1305, %v35
    %v1307 = vpop.permute.xlu0 %1306
    %1309 = vset.pattern.permute.xlu0 9
    %1310 = vperm.xlu0 %1309, %v36
    %v1311 = vpop.permute.xlu0 %1310
    %1313 = vset.pattern.permute.xlu0 9
    %1314 = vperm.xlu0 %1313, %v37
    %v1315 = vpop.permute.xlu0 %1314
    %1317 = vset.pattern.permute.xlu0 9
    %1318 = vperm.xlu0 %1317, %v38
    %v1319 = vpop.permute.xlu0 %1318
    %1321 = vset.pattern.permute.xlu0 9
    %1322 = vperm.xlu0 %1321, %v39
    %v1323 = vpop.permute.xlu0 %1322
    %1325 = vset.pattern.permute.xlu0 9
    %1326 = vperm.xlu0 %1325, %v40
    %v1327 = vpop.permute.xlu0 %1326
    %1329 = vset.pattern.permute.xlu0 9
    %1330 = vperm.xlu0 %1329, %v41
    %v1331 = vpop.permute.xlu0 %1330
    %1333 = vset.pattern.permute.xlu0 9
    %1334 = vperm.xlu0 %1333, %v42
    %v1335 = vpop.permute.xlu0 %1334
    %1337 = vset.pattern.permute.xlu0 9
    %1338 = vperm.xlu0 %1337, %v43
    %v1339 = vpop.permute.xlu0 %1338
    %v1341 = vlaneseq
    %v1342 = vshrl.u32 %v1341, 7
    %v1343 = vsub.s32 0, %v1342
    %v1344 = vrot.slane %v1276, %v1343
    %v1345 = vsub.f32 %v1279, %v1344
    %v1346 = vsub.f32 %v1283, %v1344
    %v1347 = vsub.f32 %v1287, %v1344
    %v1348 = vsub.f32 %v1291, %v1344
    %v1349 = vsub.f32 %v1295, %v1344
    %v1350 = vsub.f32 %v1299, %v1344
    %v1351 = vsub.f32 %v1303, %v1344
    %v1352 = vsub.f32 %v1307, %v1344
    %v1353 = vsub.f32 %v1311, %v1344
    %v1354 = vsub.f32 %v1315, %v1344
    %v1355 = vsub.f32 %v1319, %v1344
    %v1356 = vsub.f32 %v1323, %v1344
    %v1357 = vsub.f32 %v1327, %v1344
    %v1358 = vsub.f32 %v1331, %v1344
    %v1359 = vsub.f32 %v1335, %v1344
    %v1360 = vsub.f32 %v1339, %v1344
    %v1361 = vand.u32 2147483647, %v1345
    %v1362 = vand.u32 2147483647, %v1346
    %v1363 = vand.u32 2147483647, %v1347
    %v1364 = vand.u32 2147483647, %v1348
    %v1365 = vand.u32 2147483647, %v1349
    %v1366 = vand.u32 2147483647, %v1350
    %v1367 = vand.u32 2147483647, %v1351
    %v1368 = vand.u32 2147483647, %v1352
    %v1369 = vand.u32 2147483647, %v1353
    %v1370 = vand.u32 2147483647, %v1354
    %v1371 = vand.u32 2147483647, %v1355
    %v1372 = vand.u32 2147483647, %v1356
    %v1373 = vand.u32 2147483647, %v1357
    %v1374 = vand.u32 2147483647, %v1358
    %v1375 = vand.u32 2147483647, %v1359
    %v1376 = vand.u32 2147483647, %v1360
    %v1377 = vstv %s1275
    %v1378 = vmul.f32 %v1377, %v1361
    %v1379 = vmul.f32 %v1377, %v1362
    %v1380 = vmul.f32 %v1377, %v1363
    %v1381 = vmul.f32 %v1377, %v1364
    %v1382 = vmul.f32 %v1377, %v1365
    %v1383 = vmul.f32 %v1377, %v1366
    %v1384 = vmul.f32 %v1377, %v1367
    %v1385 = vmul.f32 %v1377, %v1368
    %v1386 = vmul.f32 %v1377, %v1369
    %v1387 = vmul.f32 %v1377, %v1370
    %v1388 = vmul.f32 %v1377, %v1371
    %v1389 = vmul.f32 %v1377, %v1372
    %v1390 = vmul.f32 %v1377, %v1373
    %v1391 = vmul.f32 %v1377, %v1374
    %v1392 = vmul.f32 %v1377, %v1375
    %v1393 = vmul.f32 %v1377, %v1376
    %v1394 = vadd.f32 %v1259, %v1378
    %v1395 = vadd.f32 %v1260, %v1379
    %v1396 = vadd.f32 %v1261, %v1380
    %v1397 = vadd.f32 %v1262, %v1381
    %v1398 = vadd.f32 %v1263, %v1382
    %v1399 = vadd.f32 %v1264, %v1383
    %v1400 = vadd.f32 %v1265, %v1384
    %v1401 = vadd.f32 %v1266, %v1385
    %v1402 = vadd.f32 %v1267, %v1386
    %v1403 = vadd.f32 %v1268, %v1387
    %v1404 = vadd.f32 %v1269, %v1388
    %v1405 = vadd.f32 %v1270, %v1389
    %v1406 = vadd.f32 %v1271, %v1390
    %v1407 = vadd.f32 %v1272, %v1391
    %v1408 = vadd.f32 %v1273, %v1392
    %v1409 = vadd.f32 %v1274, %v1393
    %s1410 = sld [smem:[#allocation2 + $0xa]]
    %v1411 = vld [vmem:[%s2 + $0xa] sm:$0x1]
    %1412 = vset.pattern.permute.xlu0 10
    %1413 = vperm.xlu0 %1412, %v28
    %v1414 = vpop.permute.xlu0 %1413
    %1416 = vset.pattern.permute.xlu0 10
    %1417 = vperm.xlu0 %1416, %v29
    %v1418 = vpop.permute.xlu0 %1417
    %1420 = vset.pattern.permute.xlu0 10
    %1421 = vperm.xlu0 %1420, %v30
    %v1422 = vpop.permute.xlu0 %1421
    %1424 = vset.pattern.permute.xlu0 10
    %1425 = vperm.xlu0 %1424, %v31
    %v1426 = vpop.permute.xlu0 %1425
    %1428 = vset.pattern.permute.xlu0 10
    %1429 = vperm.xlu0 %1428, %v32
    %v1430 = vpop.permute.xlu0 %1429
    %1432 = vset.pattern.permute.xlu0 10
    %1433 = vperm.xlu0 %1432, %v33
    %v1434 = vpop.permute.xlu0 %1433
    %1436 = vset.pattern.permute.xlu0 10
    %1437 = vperm.xlu0 %1436, %v34
    %v1438 = vpop.permute.xlu0 %1437
    %1440 = vset.pattern.permute.xlu0 10
    %1441 = vperm.xlu0 %1440, %v35
    %v1442 = vpop.permute.xlu0 %1441
    %1444 = vset.pattern.permute.xlu0 10
    %1445 = vperm.xlu0 %1444, %v36
    %v1446 = vpop.permute.xlu0 %1445
    %1448 = vset.pattern.permute.xlu0 10
    %1449 = vperm.xlu0 %1448, %v37
    %v1450 = vpop.permute.xlu0 %1449
    %1452 = vset.pattern.permute.xlu0 10
    %1453 = vperm.xlu0 %1452, %v38
    %v1454 = vpop.permute.xlu0 %1453
    %1456 = vset.pattern.permute.xlu0 10
    %1457 = vperm.xlu0 %1456, %v39
    %v1458 = vpop.permute.xlu0 %1457
    %1460 = vset.pattern.permute.xlu0 10
    %1461 = vperm.xlu0 %1460, %v40
    %v1462 = vpop.permute.xlu0 %1461
    %1464 = vset.pattern.permute.xlu0 10
    %1465 = vperm.xlu0 %1464, %v41
    %v1466 = vpop.permute.xlu0 %1465
    %1468 = vset.pattern.permute.xlu0 10
    %1469 = vperm.xlu0 %1468, %v42
    %v1470 = vpop.permute.xlu0 %1469
    %1472 = vset.pattern.permute.xlu0 10
    %1473 = vperm.xlu0 %1472, %v43
    %v1474 = vpop.permute.xlu0 %1473
    %v1476 = vlaneseq
    %v1477 = vshrl.u32 %v1476, 7
    %v1478 = vsub.s32 0, %v1477
    %v1479 = vrot.slane %v1411, %v1478
    %v1480 = vsub.f32 %v1414, %v1479
    %v1481 = vsub.f32 %v1418, %v1479
    %v1482 = vsub.f32 %v1422, %v1479
    %v1483 = vsub.f32 %v1426, %v1479
    %v1484 = vsub.f32 %v1430, %v1479
    %v1485 = vsub.f32 %v1434, %v1479
    %v1486 = vsub.f32 %v1438, %v1479
    %v1487 = vsub.f32 %v1442, %v1479
    %v1488 = vsub.f32 %v1446, %v1479
    %v1489 = vsub.f32 %v1450, %v1479
    %v1490 = vsub.f32 %v1454, %v1479
    %v1491 = vsub.f32 %v1458, %v1479
    %v1492 = vsub.f32 %v1462, %v1479
    %v1493 = vsub.f32 %v1466, %v1479
    %v1494 = vsub.f32 %v1470, %v1479
    %v1495 = vsub.f32 %v1474, %v1479
    %v1496 = vand.u32 2147483647, %v1480
    %v1497 = vand.u32 2147483647, %v1481
    %v1498 = vand.u32 2147483647, %v1482
    %v1499 = vand.u32 2147483647, %v1483
    %v1500 = vand.u32 2147483647, %v1484
    %v1501 = vand.u32 2147483647, %v1485
    %v1502 = vand.u32 2147483647, %v1486
    %v1503 = vand.u32 2147483647, %v1487
    %v1504 = vand.u32 2147483647, %v1488
    %v1505 = vand.u32 2147483647, %v1489
    %v1506 = vand.u32 2147483647, %v1490
    %v1507 = vand.u32 2147483647, %v1491
    %v1508 = vand.u32 2147483647, %v1492
    %v1509 = vand.u32 2147483647, %v1493
    %v1510 = vand.u32 2147483647, %v1494
    %v1511 = vand.u32 2147483647, %v1495
    %v1512 = vstv %s1410
    %v1513 = vmul.f32 %v1512, %v1496
    %v1514 = vmul.f32 %v1512, %v1497
    %v1515 = vmul.f32 %v1512, %v1498
    %v1516 = vmul.f32 %v1512, %v1499
    %v1517 = vmul.f32 %v1512, %v1500
    %v1518 = vmul.f32 %v1512, %v1501
    %v1519 = vmul.f32 %v1512, %v1502
    %v1520 = vmul.f32 %v1512, %v1503
    %v1521 = vmul.f32 %v1512, %v1504
    %v1522 = vmul.f32 %v1512, %v1505
    %v1523 = vmul.f32 %v1512, %v1506
    %v1524 = vmul.f32 %v1512, %v1507
    %v1525 = vmul.f32 %v1512, %v1508
    %v1526 = vmul.f32 %v1512, %v1509
    %v1527 = vmul.f32 %v1512, %v1510
    %v1528 = vmul.f32 %v1512, %v1511
    %v1529 = vadd.f32 %v1394, %v1513
    %v1530 = vadd.f32 %v1395, %v1514
    %v1531 = vadd.f32 %v1396, %v1515
    %v1532 = vadd.f32 %v1397, %v1516
    %v1533 = vadd.f32 %v1398, %v1517
    %v1534 = vadd.f32 %v1399, %v1518
    %v1535 = vadd.f32 %v1400, %v1519
    %v1536 = vadd.f32 %v1401, %v1520
    %v1537 = vadd.f32 %v1402, %v1521
    %v1538 = vadd.f32 %v1403, %v1522
    %v1539 = vadd.f32 %v1404, %v1523
    %v1540 = vadd.f32 %v1405, %v1524
    %v1541 = vadd.f32 %v1406, %v1525
    %v1542 = vadd.f32 %v1407, %v1526
    %v1543 = vadd.f32 %v1408, %v1527
    %v1544 = vadd.f32 %v1409, %v1528
    %s1545 = sld [smem:[#allocation2 + $0xb]]
    %v1546 = vld [vmem:[%s2 + $0xb] sm:$0x1]
    %1547 = vset.pattern.permute.xlu0 11
    %1548 = vperm.xlu0 %1547, %v28
    %v1549 = vpop.permute.xlu0 %1548
    %1551 = vset.pattern.permute.xlu0 11
    %1552 = vperm.xlu0 %1551, %v29
    %v1553 = vpop.permute.xlu0 %1552
    %1555 = vset.pattern.permute.xlu0 11
    %1556 = vperm.xlu0 %1555, %v30
    %v1557 = vpop.permute.xlu0 %1556
    %1559 = vset.pattern.permute.xlu0 11
    %1560 = vperm.xlu0 %1559, %v31
    %v1561 = vpop.permute.xlu0 %1560
    %1563 = vset.pattern.permute.xlu0 11
    %1564 = vperm.xlu0 %1563, %v32
    %v1565 = vpop.permute.xlu0 %1564
    %1567 = vset.pattern.permute.xlu0 11
    %1568 = vperm.xlu0 %1567, %v33
    %v1569 = vpop.permute.xlu0 %1568
    %1571 = vset.pattern.permute.xlu0 11
    %1572 = vperm.xlu0 %1571, %v34
    %v1573 = vpop.permute.xlu0 %1572
    %1575 = vset.pattern.permute.xlu0 11
    %1576 = vperm.xlu0 %1575, %v35
    %v1577 = vpop.permute.xlu0 %1576
    %1579 = vset.pattern.permute.xlu0 11
    %1580 = vperm.xlu0 %1579, %v36
    %v1581 = vpop.permute.xlu0 %1580
    %1583 = vset.pattern.permute.xlu0 11
    %1584 = vperm.xlu0 %1583, %v37
    %v1585 = vpop.permute.xlu0 %1584
    %1587 = vset.pattern.permute.xlu0 11
    %1588 = vperm.xlu0 %1587, %v38
    %v1589 = vpop.permute.xlu0 %1588
    %1591 = vset.pattern.permute.xlu0 11
    %1592 = vperm.xlu0 %1591, %v39
    %v1593 = vpop.permute.xlu0 %1592
    %1595 = vset.pattern.permute.xlu0 11
    %1596 = vperm.xlu0 %1595, %v40
    %v1597 = vpop.permute.xlu0 %1596
    %1599 = vset.pattern.permute.xlu0 11
    %1600 = vperm.xlu0 %1599, %v41
    %v1601 = vpop.permute.xlu0 %1600
    %1603 = vset.pattern.permute.xlu0 11
    %1604 = vperm.xlu0 %1603, %v42
    %v1605 = vpop.permute.xlu0 %1604
    %1607 = vset.pattern.permute.xlu0 11
    %1608 = vperm.xlu0 %1607, %v43
    %v1609 = vpop.permute.xlu0 %1608
    %v1611 = vlaneseq
    %v1612 = vshrl.u32 %v1611, 7
    %v1613 = vsub.s32 0, %v1612
    %v1614 = vrot.slane %v1546, %v1613
    %v1615 = vsub.f32 %v1549, %v1614
    %v1616 = vsub.f32 %v1553, %v1614
    %v1617 = vsub.f32 %v1557, %v1614
    %v1618 = vsub.f32 %v1561, %v1614
    %v1619 = vsub.f32 %v1565, %v1614
    %v1620 = vsub.f32 %v1569, %v1614
    %v1621 = vsub.f32 %v1573, %v1614
    %v1622 = vsub.f32 %v1577, %v1614
    %v1623 = vsub.f32 %v1581, %v1614
    %v1624 = vsub.f32 %v1585, %v1614
    %v1625 = vsub.f32 %v1589, %v1614
    %v1626 = vsub.f32 %v1593, %v1614
    %v1627 = vsub.f32 %v1597, %v1614
    %v1628 = vsub.f32 %v1601, %v1614
    %v1629 = vsub.f32 %v1605, %v1614
    %v1630 = vsub.f32 %v1609, %v1614
    %v1631 = vand.u32 2147483647, %v1615
    %v1632 = vand.u32 2147483647, %v1616
    %v1633 = vand.u32 2147483647, %v1617
    %v1634 = vand.u32 2147483647, %v1618
    %v1635 = vand.u32 2147483647, %v1619
    %v1636 = vand.u32 2147483647, %v1620
    %v1637 = vand.u32 2147483647, %v1621
    %v1638 = vand.u32 2147483647, %v1622
    %v1639 = vand.u32 2147483647, %v1623
    %v1640 = vand.u32 2147483647, %v1624
    %v1641 = vand.u32 2147483647, %v1625
    %v1642 = vand.u32 2147483647, %v1626
    %v1643 = vand.u32 2147483647, %v1627
    %v1644 = vand.u32 2147483647, %v1628
    %v1645 = vand.u32 2147483647, %v1629
    %v1646 = vand.u32 2147483647, %v1630
    %v1647 = vstv %s1545
    %v1648 = vmul.f32 %v1647, %v1631
    %v1649 = vmul.f32 %v1647, %v1632
    %v1650 = vmul.f32 %v1647, %v1633
    %v1651 = vmul.f32 %v1647, %v1634
    %v1652 = vmul.f32 %v1647, %v1635
    %v1653 = vmul.f32 %v1647, %v1636
    %v1654 = vmul.f32 %v1647, %v1637
    %v1655 = vmul.f32 %v1647, %v1638
    %v1656 = vmul.f32 %v1647, %v1639
    %v1657 = vmul.f32 %v1647, %v1640
    %v1658 = vmul.f32 %v1647, %v1641
    %v1659 = vmul.f32 %v1647, %v1642
    %v1660 = vmul.f32 %v1647, %v1643
    %v1661 = vmul.f32 %v1647, %v1644
    %v1662 = vmul.f32 %v1647, %v1645
    %v1663 = vmul.f32 %v1647, %v1646
    %v1664 = vadd.f32 %v1529, %v1648
    %v1665 = vadd.f32 %v1530, %v1649
    %v1666 = vadd.f32 %v1531, %v1650
    %v1667 = vadd.f32 %v1532, %v1651
    %v1668 = vadd.f32 %v1533, %v1652
    %v1669 = vadd.f32 %v1534, %v1653
    %v1670 = vadd.f32 %v1535, %v1654
    %v1671 = vadd.f32 %v1536, %v1655
    %v1672 = vadd.f32 %v1537, %v1656
    %v1673 = vadd.f32 %v1538, %v1657
    %v1674 = vadd.f32 %v1539, %v1658
    %v1675 = vadd.f32 %v1540, %v1659
    %v1676 = vadd.f32 %v1541, %v1660
    %v1677 = vadd.f32 %v1542, %v1661
    %v1678 = vadd.f32 %v1543, %v1662
    %v1679 = vadd.f32 %v1544, %v1663
    %s1680 = sld [smem:[#allocation2 + $0xc]]
    %v1681 = vld [vmem:[%s2 + $0xc] sm:$0x1]
    %1682 = vset.pattern.permute.xlu0 12
    %1683 = vperm.xlu0 %1682, %v28
    %v1684 = vpop.permute.xlu0 %1683
    %1686 = vset.pattern.permute.xlu0 12
    %1687 = vperm.xlu0 %1686, %v29
    %v1688 = vpop.permute.xlu0 %1687
    %1690 = vset.pattern.permute.xlu0 12
    %1691 = vperm.xlu0 %1690, %v30
    %v1692 = vpop.permute.xlu0 %1691
    %1694 = vset.pattern.permute.xlu0 12
    %1695 = vperm.xlu0 %1694, %v31
    %v1696 = vpop.permute.xlu0 %1695
    %1698 = vset.pattern.permute.xlu0 12
    %1699 = vperm.xlu0 %1698, %v32
    %v1700 = vpop.permute.xlu0 %1699
    %1702 = vset.pattern.permute.xlu0 12
    %1703 = vperm.xlu0 %1702, %v33
    %v1704 = vpop.permute.xlu0 %1703
    %1706 = vset.pattern.permute.xlu0 12
    %1707 = vperm.xlu0 %1706, %v34
    %v1708 = vpop.permute.xlu0 %1707
    %1710 = vset.pattern.permute.xlu0 12
    %1711 = vperm.xlu0 %1710, %v35
    %v1712 = vpop.permute.xlu0 %1711
    %1714 = vset.pattern.permute.xlu0 12
    %1715 = vperm.xlu0 %1714, %v36
    %v1716 = vpop.permute.xlu0 %1715
    %1718 = vset.pattern.permute.xlu0 12
    %1719 = vperm.xlu0 %1718, %v37
    %v1720 = vpop.permute.xlu0 %1719
    %1722 = vset.pattern.permute.xlu0 12
    %1723 = vperm.xlu0 %1722, %v38
    %v1724 = vpop.permute.xlu0 %1723
    %1726 = vset.pattern.permute.xlu0 12
    %1727 = vperm.xlu0 %1726, %v39
    %v1728 = vpop.permute.xlu0 %1727
    %1730 = vset.pattern.permute.xlu0 12
    %1731 = vperm.xlu0 %1730, %v40
    %v1732 = vpop.permute.xlu0 %1731
    %1734 = vset.pattern.permute.xlu0 12
    %1735 = vperm.xlu0 %1734, %v41
    %v1736 = vpop.permute.xlu0 %1735
    %1738 = vset.pattern.permute.xlu0 12
    %1739 = vperm.xlu0 %1738, %v42
    %v1740 = vpop.permute.xlu0 %1739
    %1742 = vset.pattern.permute.xlu0 12
    %1743 = vperm.xlu0 %1742, %v43
    %v1744 = vpop.permute.xlu0 %1743
    %v1746 = vlaneseq
    %v1747 = vshrl.u32 %v1746, 7
    %v1748 = vsub.s32 0, %v1747
    %v1749 = vrot.slane %v1681, %v1748
    %v1750 = vsub.f32 %v1684, %v1749
    %v1751 = vsub.f32 %v1688, %v1749
    %v1752 = vsub.f32 %v1692, %v1749
    %v1753 = vsub.f32 %v1696, %v1749
    %v1754 = vsub.f32 %v1700, %v1749
    %v1755 = vsub.f32 %v1704, %v1749
    %v1756 = vsub.f32 %v1708, %v1749
    %v1757 = vsub.f32 %v1712, %v1749
    %v1758 = vsub.f32 %v1716, %v1749
    %v1759 = vsub.f32 %v1720, %v1749
    %v1760 = vsub.f32 %v1724, %v1749
    %v1761 = vsub.f32 %v1728, %v1749
    %v1762 = vsub.f32 %v1732, %v1749
    %v1763 = vsub.f32 %v1736, %v1749
    %v1764 = vsub.f32 %v1740, %v1749
    %v1765 = vsub.f32 %v1744, %v1749
    %v1766 = vand.u32 2147483647, %v1750
    %v1767 = vand.u32 2147483647, %v1751
    %v1768 = vand.u32 2147483647, %v1752
    %v1769 = vand.u32 2147483647, %v1753
    %v1770 = vand.u32 2147483647, %v1754
    %v1771 = vand.u32 2147483647, %v1755
    %v1772 = vand.u32 2147483647, %v1756
    %v1773 = vand.u32 2147483647, %v1757
    %v1774 = vand.u32 2147483647, %v1758
    %v1775 = vand.u32 2147483647, %v1759
    %v1776 = vand.u32 2147483647, %v1760
    %v1777 = vand.u32 2147483647, %v1761
    %v1778 = vand.u32 2147483647, %v1762
    %v1779 = vand.u32 2147483647, %v1763
    %v1780 = vand.u32 2147483647, %v1764
    %v1781 = vand.u32 2147483647, %v1765
    %v1782 = vstv %s1680
    %v1783 = vmul.f32 %v1782, %v1766
    %v1784 = vmul.f32 %v1782, %v1767
    %v1785 = vmul.f32 %v1782, %v1768
    %v1786 = vmul.f32 %v1782, %v1769
    %v1787 = vmul.f32 %v1782, %v1770
    %v1788 = vmul.f32 %v1782, %v1771
    %v1789 = vmul.f32 %v1782, %v1772
    %v1790 = vmul.f32 %v1782, %v1773
    %v1791 = vmul.f32 %v1782, %v1774
    %v1792 = vmul.f32 %v1782, %v1775
    %v1793 = vmul.f32 %v1782, %v1776
    %v1794 = vmul.f32 %v1782, %v1777
    %v1795 = vmul.f32 %v1782, %v1778
    %v1796 = vmul.f32 %v1782, %v1779
    %v1797 = vmul.f32 %v1782, %v1780
    %v1798 = vmul.f32 %v1782, %v1781
    %v1799 = vadd.f32 %v1664, %v1783
    %v1800 = vadd.f32 %v1665, %v1784
    %v1801 = vadd.f32 %v1666, %v1785
    %v1802 = vadd.f32 %v1667, %v1786
    %v1803 = vadd.f32 %v1668, %v1787
    %v1804 = vadd.f32 %v1669, %v1788
    %v1805 = vadd.f32 %v1670, %v1789
    %v1806 = vadd.f32 %v1671, %v1790
    %v1807 = vadd.f32 %v1672, %v1791
    %v1808 = vadd.f32 %v1673, %v1792
    %v1809 = vadd.f32 %v1674, %v1793
    %v1810 = vadd.f32 %v1675, %v1794
    %v1811 = vadd.f32 %v1676, %v1795
    %v1812 = vadd.f32 %v1677, %v1796
    %v1813 = vadd.f32 %v1678, %v1797
    %v1814 = vadd.f32 %v1679, %v1798
    %s1815 = sld [smem:[#allocation2 + $0xd]]
    %v1816 = vld [vmem:[%s2 + $0xd] sm:$0x1]
    %1817 = vset.pattern.permute.xlu0 13
    %1818 = vperm.xlu0 %1817, %v28
    %v1819 = vpop.permute.xlu0 %1818
    %1821 = vset.pattern.permute.xlu0 13
    %1822 = vperm.xlu0 %1821, %v29
    %v1823 = vpop.permute.xlu0 %1822
    %1825 = vset.pattern.permute.xlu0 13
    %1826 = vperm.xlu0 %1825, %v30
    %v1827 = vpop.permute.xlu0 %1826
    %1829 = vset.pattern.permute.xlu0 13
    %1830 = vperm.xlu0 %1829, %v31
    %v1831 = vpop.permute.xlu0 %1830
    %1833 = vset.pattern.permute.xlu0 13
    %1834 = vperm.xlu0 %1833, %v32
    %v1835 = vpop.permute.xlu0 %1834
    %1837 = vset.pattern.permute.xlu0 13
    %1838 = vperm.xlu0 %1837, %v33
    %v1839 = vpop.permute.xlu0 %1838
    %1841 = vset.pattern.permute.xlu0 13
    %1842 = vperm.xlu0 %1841, %v34
    %v1843 = vpop.permute.xlu0 %1842
    %1845 = vset.pattern.permute.xlu0 13
    %1846 = vperm.xlu0 %1845, %v35
    %v1847 = vpop.permute.xlu0 %1846
    %1849 = vset.pattern.permute.xlu0 13
    %1850 = vperm.xlu0 %1849, %v36
    %v1851 = vpop.permute.xlu0 %1850
    %1853 = vset.pattern.permute.xlu0 13
    %1854 = vperm.xlu0 %1853, %v37
    %v1855 = vpop.permute.xlu0 %1854
    %1857 = vset.pattern.permute.xlu0 13
    %1858 = vperm.xlu0 %1857, %v38
    %v1859 = vpop.permute.xlu0 %1858
    %1861 = vset.pattern.permute.xlu0 13
    %1862 = vperm.xlu0 %1861, %v39
    %v1863 = vpop.permute.xlu0 %1862
    %1865 = vset.pattern.permute.xlu0 13
    %1866 = vperm.xlu0 %1865, %v40
    %v1867 = vpop.permute.xlu0 %1866
    %1869 = vset.pattern.permute.xlu0 13
    %1870 = vperm.xlu0 %1869, %v41
    %v1871 = vpop.permute.xlu0 %1870
    %1873 = vset.pattern.permute.xlu0 13
    %1874 = vperm.xlu0 %1873, %v42
    %v1875 = vpop.permute.xlu0 %1874
    %1877 = vset.pattern.permute.xlu0 13
    %1878 = vperm.xlu0 %1877, %v43
    %v1879 = vpop.permute.xlu0 %1878
    %v1881 = vlaneseq
    %v1882 = vshrl.u32 %v1881, 7
    %v1883 = vsub.s32 0, %v1882
    %v1884 = vrot.slane %v1816, %v1883
    %v1885 = vsub.f32 %v1819, %v1884
    %v1886 = vsub.f32 %v1823, %v1884
    %v1887 = vsub.f32 %v1827, %v1884
    %v1888 = vsub.f32 %v1831, %v1884
    %v1889 = vsub.f32 %v1835, %v1884
    %v1890 = vsub.f32 %v1839, %v1884
    %v1891 = vsub.f32 %v1843, %v1884
    %v1892 = vsub.f32 %v1847, %v1884
    %v1893 = vsub.f32 %v1851, %v1884
    %v1894 = vsub.f32 %v1855, %v1884
    %v1895 = vsub.f32 %v1859, %v1884
    %v1896 = vsub.f32 %v1863, %v1884
    %v1897 = vsub.f32 %v1867, %v1884
    %v1898 = vsub.f32 %v1871, %v1884
    %v1899 = vsub.f32 %v1875, %v1884
    %v1900 = vsub.f32 %v1879, %v1884
    %v1901 = vand.u32 2147483647, %v1885
    %v1902 = vand.u32 2147483647, %v1886
    %v1903 = vand.u32 2147483647, %v1887
    %v1904 = vand.u32 2147483647, %v1888
    %v1905 = vand.u32 2147483647, %v1889
    %v1906 = vand.u32 2147483647, %v1890
    %v1907 = vand.u32 2147483647, %v1891
    %v1908 = vand.u32 2147483647, %v1892
    %v1909 = vand.u32 2147483647, %v1893
    %v1910 = vand.u32 2147483647, %v1894
    %v1911 = vand.u32 2147483647, %v1895
    %v1912 = vand.u32 2147483647, %v1896
    %v1913 = vand.u32 2147483647, %v1897
    %v1914 = vand.u32 2147483647, %v1898
    %v1915 = vand.u32 2147483647, %v1899
    %v1916 = vand.u32 2147483647, %v1900
    %v1917 = vstv %s1815
    %v1918 = vmul.f32 %v1917, %v1901
    %v1919 = vmul.f32 %v1917, %v1902
    %v1920 = vmul.f32 %v1917, %v1903
    %v1921 = vmul.f32 %v1917, %v1904
    %v1922 = vmul.f32 %v1917, %v1905
    %v1923 = vmul.f32 %v1917, %v1906
    %v1924 = vmul.f32 %v1917, %v1907
    %v1925 = vmul.f32 %v1917, %v1908
    %v1926 = vmul.f32 %v1917, %v1909
    %v1927 = vmul.f32 %v1917, %v1910
    %v1928 = vmul.f32 %v1917, %v1911
    %v1929 = vmul.f32 %v1917, %v1912
    %v1930 = vmul.f32 %v1917, %v1913
    %v1931 = vmul.f32 %v1917, %v1914
    %v1932 = vmul.f32 %v1917, %v1915
    %v1933 = vmul.f32 %v1917, %v1916
    %v1934 = vadd.f32 %v1799, %v1918
    %v1935 = vadd.f32 %v1800, %v1919
    %v1936 = vadd.f32 %v1801, %v1920
    %v1937 = vadd.f32 %v1802, %v1921
    %v1938 = vadd.f32 %v1803, %v1922
    %v1939 = vadd.f32 %v1804, %v1923
    %v1940 = vadd.f32 %v1805, %v1924
    %v1941 = vadd.f32 %v1806, %v1925
    %v1942 = vadd.f32 %v1807, %v1926
    %v1943 = vadd.f32 %v1808, %v1927
    %v1944 = vadd.f32 %v1809, %v1928
    %v1945 = vadd.f32 %v1810, %v1929
    %v1946 = vadd.f32 %v1811, %v1930
    %v1947 = vadd.f32 %v1812, %v1931
    %v1948 = vadd.f32 %v1813, %v1932
    %v1949 = vadd.f32 %v1814, %v1933
    %s1950 = sld [smem:[#allocation2 + $0xe]]
    %v1951 = vld [vmem:[%s2 + $0xe] sm:$0x1]
    %1952 = vset.pattern.permute.xlu0 14
    %1953 = vperm.xlu0 %1952, %v28
    %v1954 = vpop.permute.xlu0 %1953
    %1956 = vset.pattern.permute.xlu0 14
    %1957 = vperm.xlu0 %1956, %v29
    %v1958 = vpop.permute.xlu0 %1957
    %1960 = vset.pattern.permute.xlu0 14
    %1961 = vperm.xlu0 %1960, %v30
    %v1962 = vpop.permute.xlu0 %1961
    %1964 = vset.pattern.permute.xlu0 14
    %1965 = vperm.xlu0 %1964, %v31
    %v1966 = vpop.permute.xlu0 %1965
    %1968 = vset.pattern.permute.xlu0 14
    %1969 = vperm.xlu0 %1968, %v32
    %v1970 = vpop.permute.xlu0 %1969
    %1972 = vset.pattern.permute.xlu0 14
    %1973 = vperm.xlu0 %1972, %v33
    %v1974 = vpop.permute.xlu0 %1973
    %1976 = vset.pattern.permute.xlu0 14
    %1977 = vperm.xlu0 %1976, %v34
    %v1978 = vpop.permute.xlu0 %1977
    %1980 = vset.pattern.permute.xlu0 14
    %1981 = vperm.xlu0 %1980, %v35
    %v1982 = vpop.permute.xlu0 %1981
    %1984 = vset.pattern.permute.xlu0 14
    %1985 = vperm.xlu0 %1984, %v36
    %v1986 = vpop.permute.xlu0 %1985
    %1988 = vset.pattern.permute.xlu0 14
    %1989 = vperm.xlu0 %1988, %v37
    %v1990 = vpop.permute.xlu0 %1989
    %1992 = vset.pattern.permute.xlu0 14
    %1993 = vperm.xlu0 %1992, %v38
    %v1994 = vpop.permute.xlu0 %1993
    %1996 = vset.pattern.permute.xlu0 14
    %1997 = vperm.xlu0 %1996, %v39
    %v1998 = vpop.permute.xlu0 %1997
    %2000 = vset.pattern.permute.xlu0 14
    %2001 = vperm.xlu0 %2000, %v40
    %v2002 = vpop.permute.xlu0 %2001
    %2004 = vset.pattern.permute.xlu0 14
    %2005 = vperm.xlu0 %2004, %v41
    %v2006 = vpop.permute.xlu0 %2005
    %2008 = vset.pattern.permute.xlu0 14
    %2009 = vperm.xlu0 %2008, %v42
    %v2010 = vpop.permute.xlu0 %2009
    %2012 = vset.pattern.permute.xlu0 14
    %2013 = vperm.xlu0 %2012, %v43
    %v2014 = vpop.permute.xlu0 %2013
    %v2016 = vlaneseq
    %v2017 = vshrl.u32 %v2016, 7
    %v2018 = vsub.s32 0, %v2017
    %v2019 = vrot.slane %v1951, %v2018
    %v2020 = vsub.f32 %v1954, %v2019
    %v2021 = vsub.f32 %v1958, %v2019
    %v2022 = vsub.f32 %v1962, %v2019
    %v2023 = vsub.f32 %v1966, %v2019
    %v2024 = vsub.f32 %v1970, %v2019
    %v2025 = vsub.f32 %v1974, %v2019
    %v2026 = vsub.f32 %v1978, %v2019
    %v2027 = vsub.f32 %v1982, %v2019
    %v2028 = vsub.f32 %v1986, %v2019
    %v2029 = vsub.f32 %v1990, %v2019
    %v2030 = vsub.f32 %v1994, %v2019
    %v2031 = vsub.f32 %v1998, %v2019
    %v2032 = vsub.f32 %v2002, %v2019
    %v2033 = vsub.f32 %v2006, %v2019
    %v2034 = vsub.f32 %v2010, %v2019
    %v2035 = vsub.f32 %v2014, %v2019
    %v2036 = vand.u32 2147483647, %v2020
    %v2037 = vand.u32 2147483647, %v2021
    %v2038 = vand.u32 2147483647, %v2022
    %v2039 = vand.u32 2147483647, %v2023
    %v2040 = vand.u32 2147483647, %v2024
    %v2041 = vand.u32 2147483647, %v2025
    %v2042 = vand.u32 2147483647, %v2026
    %v2043 = vand.u32 2147483647, %v2027
    %v2044 = vand.u32 2147483647, %v2028
    %v2045 = vand.u32 2147483647, %v2029
    %v2046 = vand.u32 2147483647, %v2030
    %v2047 = vand.u32 2147483647, %v2031
    %v2048 = vand.u32 2147483647, %v2032
    %v2049 = vand.u32 2147483647, %v2033
    %v2050 = vand.u32 2147483647, %v2034
    %v2051 = vand.u32 2147483647, %v2035
    %v2052 = vstv %s1950
    %v2053 = vmul.f32 %v2052, %v2036
    %v2054 = vmul.f32 %v2052, %v2037
    %v2055 = vmul.f32 %v2052, %v2038
    %v2056 = vmul.f32 %v2052, %v2039
    %v2057 = vmul.f32 %v2052, %v2040
    %v2058 = vmul.f32 %v2052, %v2041
    %v2059 = vmul.f32 %v2052, %v2042
    %v2060 = vmul.f32 %v2052, %v2043
    %v2061 = vmul.f32 %v2052, %v2044
    %v2062 = vmul.f32 %v2052, %v2045
    %v2063 = vmul.f32 %v2052, %v2046
    %v2064 = vmul.f32 %v2052, %v2047
    %v2065 = vmul.f32 %v2052, %v2048
    %v2066 = vmul.f32 %v2052, %v2049
    %v2067 = vmul.f32 %v2052, %v2050
    %v2068 = vmul.f32 %v2052, %v2051
    %v2069 = vadd.f32 %v1934, %v2053
    %v2070 = vadd.f32 %v1935, %v2054
    %v2071 = vadd.f32 %v1936, %v2055
    %v2072 = vadd.f32 %v1937, %v2056
    %v2073 = vadd.f32 %v1938, %v2057
    %v2074 = vadd.f32 %v1939, %v2058
    %v2075 = vadd.f32 %v1940, %v2059
    %v2076 = vadd.f32 %v1941, %v2060
    %v2077 = vadd.f32 %v1942, %v2061
    %v2078 = vadd.f32 %v1943, %v2062
    %v2079 = vadd.f32 %v1944, %v2063
    %v2080 = vadd.f32 %v1945, %v2064
    %v2081 = vadd.f32 %v1946, %v2065
    %v2082 = vadd.f32 %v1947, %v2066
    %v2083 = vadd.f32 %v1948, %v2067
    %v2084 = vadd.f32 %v1949, %v2068
    %s2085 = sld [smem:[#allocation2 + $0xf]]
    %v2086 = vld [vmem:[%s2 + $0xf] sm:$0x1]
    %2087 = vset.pattern.permute.xlu0 15
    %2088 = vperm.xlu0 %2087, %v28
    %v2089 = vpop.permute.xlu0 %2088
    %2091 = vset.pattern.permute.xlu0 15
    %2092 = vperm.xlu0 %2091, %v29
    %v2093 = vpop.permute.xlu0 %2092
    %2095 = vset.pattern.permute.xlu0 15
    %2096 = vperm.xlu0 %2095, %v30
    %v2097 = vpop.permute.xlu0 %2096
    %2099 = vset.pattern.permute.xlu0 15
    %2100 = vperm.xlu0 %2099, %v31
    %v2101 = vpop.permute.xlu0 %2100
    %2103 = vset.pattern.permute.xlu0 15
    %2104 = vperm.xlu0 %2103, %v32
    %v2105 = vpop.permute.xlu0 %2104
    %2107 = vset.pattern.permute.xlu0 15
    %2108 = vperm.xlu0 %2107, %v33
    %v2109 = vpop.permute.xlu0 %2108
    %2111 = vset.pattern.permute.xlu0 15
    %2112 = vperm.xlu0 %2111, %v34
    %v2113 = vpop.permute.xlu0 %2112
    %2115 = vset.pattern.permute.xlu0 15
    %2116 = vperm.xlu0 %2115, %v35
    %v2117 = vpop.permute.xlu0 %2116
    %2119 = vset.pattern.permute.xlu0 15
    %2120 = vperm.xlu0 %2119, %v36
    %v2121 = vpop.permute.xlu0 %2120
    %2123 = vset.pattern.permute.xlu0 15
    %2124 = vperm.xlu0 %2123, %v37
    %v2125 = vpop.permute.xlu0 %2124
    %2127 = vset.pattern.permute.xlu0 15
    %2128 = vperm.xlu0 %2127, %v38
    %v2129 = vpop.permute.xlu0 %2128
    %2131 = vset.pattern.permute.xlu0 15
    %2132 = vperm.xlu0 %2131, %v39
    %v2133 = vpop.permute.xlu0 %2132
    %2135 = vset.pattern.permute.xlu0 15
    %2136 = vperm.xlu0 %2135, %v40
    %v2137 = vpop.permute.xlu0 %2136
    %2139 = vset.pattern.permute.xlu0 15
    %2140 = vperm.xlu0 %2139, %v41
    %v2141 = vpop.permute.xlu0 %2140
    %2143 = vset.pattern.permute.xlu0 15
    %2144 = vperm.xlu0 %2143, %v42
    %v2145 = vpop.permute.xlu0 %2144
    %2147 = vset.pattern.permute.xlu0 15
    %2148 = vperm.xlu0 %2147, %v43
    %v2149 = vpop.permute.xlu0 %2148
    %v2151 = vlaneseq
    %v2152 = vshrl.u32 %v2151, 7
    %v2153 = vsub.s32 0, %v2152
    %v2154 = vrot.slane %v2086, %v2153
    %v2155 = vsub.f32 %v2089, %v2154
    %v2156 = vsub.f32 %v2093, %v2154
    %v2157 = vsub.f32 %v2097, %v2154
    %v2158 = vsub.f32 %v2101, %v2154
    %v2159 = vsub.f32 %v2105, %v2154
    %v2160 = vsub.f32 %v2109, %v2154
    %v2161 = vsub.f32 %v2113, %v2154
    %v2162 = vsub.f32 %v2117, %v2154
    %v2163 = vsub.f32 %v2121, %v2154
    %v2164 = vsub.f32 %v2125, %v2154
    %v2165 = vsub.f32 %v2129, %v2154
    %v2166 = vsub.f32 %v2133, %v2154
    %v2167 = vsub.f32 %v2137, %v2154
    %v2168 = vsub.f32 %v2141, %v2154
    %v2169 = vsub.f32 %v2145, %v2154
    %v2170 = vsub.f32 %v2149, %v2154
    %v2171 = vand.u32 2147483647, %v2155
    %v2172 = vand.u32 2147483647, %v2156
    %v2173 = vand.u32 2147483647, %v2157
    %v2174 = vand.u32 2147483647, %v2158
    %v2175 = vand.u32 2147483647, %v2159
    %v2176 = vand.u32 2147483647, %v2160
    %v2177 = vand.u32 2147483647, %v2161
    %v2178 = vand.u32 2147483647, %v2162
    %v2179 = vand.u32 2147483647, %v2163
    %v2180 = vand.u32 2147483647, %v2164
    %v2181 = vand.u32 2147483647, %v2165
    %v2182 = vand.u32 2147483647, %v2166
    %v2183 = vand.u32 2147483647, %v2167
    %v2184 = vand.u32 2147483647, %v2168
    %v2185 = vand.u32 2147483647, %v2169
    %v2186 = vand.u32 2147483647, %v2170
    %v2187 = vstv %s2085
    %v2188 = vmul.f32 %v2187, %v2171
    %v2189 = vmul.f32 %v2187, %v2172
    %v2190 = vmul.f32 %v2187, %v2173
    %v2191 = vmul.f32 %v2187, %v2174
    %v2192 = vmul.f32 %v2187, %v2175
    %v2193 = vmul.f32 %v2187, %v2176
    %v2194 = vmul.f32 %v2187, %v2177
    %v2195 = vmul.f32 %v2187, %v2178
    %v2196 = vmul.f32 %v2187, %v2179
    %v2197 = vmul.f32 %v2187, %v2180
    %v2198 = vmul.f32 %v2187, %v2181
    %v2199 = vmul.f32 %v2187, %v2182
    %v2200 = vmul.f32 %v2187, %v2183
    %v2201 = vmul.f32 %v2187, %v2184
    %v2202 = vmul.f32 %v2187, %v2185
    %v2203 = vmul.f32 %v2187, %v2186
    %v2204 = vadd.f32 %v2069, %v2188
    %v2205 = vadd.f32 %v2070, %v2189
    %v2206 = vadd.f32 %v2071, %v2190
    %v2207 = vadd.f32 %v2072, %v2191
    %v2208 = vadd.f32 %v2073, %v2192
    %v2209 = vadd.f32 %v2074, %v2193
    %v2210 = vadd.f32 %v2075, %v2194
    %v2211 = vadd.f32 %v2076, %v2195
    %v2212 = vadd.f32 %v2077, %v2196
    %v2213 = vadd.f32 %v2078, %v2197
    %v2214 = vadd.f32 %v2079, %v2198
    %v2215 = vadd.f32 %v2080, %v2199
    %v2216 = vadd.f32 %v2081, %v2200
    %v2217 = vadd.f32 %v2082, %v2201
    %v2218 = vadd.f32 %v2083, %v2202
    %v2219 = vadd.f32 %v2084, %v2203
    %s2220 = sld [smem:[#allocation2 + $0x10]]
    %v2221 = vld [vmem:[%s2 + $0x10] sm:$0x1]
    %2222 = vset.pattern.permute.xlu0 16
    %2223 = vperm.xlu0 %2222, %v28
    %v2224 = vpop.permute.xlu0 %2223
    %2226 = vset.pattern.permute.xlu0 16
    %2227 = vperm.xlu0 %2226, %v29
    %v2228 = vpop.permute.xlu0 %2227
    %2230 = vset.pattern.permute.xlu0 16
    %2231 = vperm.xlu0 %2230, %v30
    %v2232 = vpop.permute.xlu0 %2231
    %2234 = vset.pattern.permute.xlu0 16
    %2235 = vperm.xlu0 %2234, %v31
    %v2236 = vpop.permute.xlu0 %2235
    %2238 = vset.pattern.permute.xlu0 16
    %2239 = vperm.xlu0 %2238, %v32
    %v2240 = vpop.permute.xlu0 %2239
    %2242 = vset.pattern.permute.xlu0 16
    %2243 = vperm.xlu0 %2242, %v33
    %v2244 = vpop.permute.xlu0 %2243
    %2246 = vset.pattern.permute.xlu0 16
    %2247 = vperm.xlu0 %2246, %v34
    %v2248 = vpop.permute.xlu0 %2247
    %2250 = vset.pattern.permute.xlu0 16
    %2251 = vperm.xlu0 %2250, %v35
    %v2252 = vpop.permute.xlu0 %2251
    %2254 = vset.pattern.permute.xlu0 16
    %2255 = vperm.xlu0 %2254, %v36
    %v2256 = vpop.permute.xlu0 %2255
    %2258 = vset.pattern.permute.xlu0 16
    %2259 = vperm.xlu0 %2258, %v37
    %v2260 = vpop.permute.xlu0 %2259
    %2262 = vset.pattern.permute.xlu0 16
    %2263 = vperm.xlu0 %2262, %v38
    %v2264 = vpop.permute.xlu0 %2263
    %2266 = vset.pattern.permute.xlu0 16
    %2267 = vperm.xlu0 %2266, %v39
    %v2268 = vpop.permute.xlu0 %2267
    %2270 = vset.pattern.permute.xlu0 16
    %2271 = vperm.xlu0 %2270, %v40
    %v2272 = vpop.permute.xlu0 %2271
    %2274 = vset.pattern.permute.xlu0 16
    %2275 = vperm.xlu0 %2274, %v41
    %v2276 = vpop.permute.xlu0 %2275
    %2278 = vset.pattern.permute.xlu0 16
    %2279 = vperm.xlu0 %2278, %v42
    %v2280 = vpop.permute.xlu0 %2279
    %2282 = vset.pattern.permute.xlu0 16
    %2283 = vperm.xlu0 %2282, %v43
    %v2284 = vpop.permute.xlu0 %2283
    %v2286 = vlaneseq
    %v2287 = vshrl.u32 %v2286, 7
    %v2288 = vsub.s32 0, %v2287
    %v2289 = vrot.slane %v2221, %v2288
    %v2290 = vsub.f32 %v2224, %v2289
    %v2291 = vsub.f32 %v2228, %v2289
    %v2292 = vsub.f32 %v2232, %v2289
    %v2293 = vsub.f32 %v2236, %v2289
    %v2294 = vsub.f32 %v2240, %v2289
    %v2295 = vsub.f32 %v2244, %v2289
    %v2296 = vsub.f32 %v2248, %v2289
    %v2297 = vsub.f32 %v2252, %v2289
    %v2298 = vsub.f32 %v2256, %v2289
    %v2299 = vsub.f32 %v2260, %v2289
    %v2300 = vsub.f32 %v2264, %v2289
    %v2301 = vsub.f32 %v2268, %v2289
    %v2302 = vsub.f32 %v2272, %v2289
    %v2303 = vsub.f32 %v2276, %v2289
    %v2304 = vsub.f32 %v2280, %v2289
    %v2305 = vsub.f32 %v2284, %v2289
    %v2306 = vand.u32 2147483647, %v2290
    %v2307 = vand.u32 2147483647, %v2291
    %v2308 = vand.u32 2147483647, %v2292
    %v2309 = vand.u32 2147483647, %v2293
    %v2310 = vand.u32 2147483647, %v2294
    %v2311 = vand.u32 2147483647, %v2295
    %v2312 = vand.u32 2147483647, %v2296
    %v2313 = vand.u32 2147483647, %v2297
    %v2314 = vand.u32 2147483647, %v2298
    %v2315 = vand.u32 2147483647, %v2299
    %v2316 = vand.u32 2147483647, %v2300
    %v2317 = vand.u32 2147483647, %v2301
    %v2318 = vand.u32 2147483647, %v2302
    %v2319 = vand.u32 2147483647, %v2303
    %v2320 = vand.u32 2147483647, %v2304
    %v2321 = vand.u32 2147483647, %v2305
    %v2322 = vstv %s2220
    %v2323 = vmul.f32 %v2322, %v2306
    %v2324 = vmul.f32 %v2322, %v2307
    %v2325 = vmul.f32 %v2322, %v2308
    %v2326 = vmul.f32 %v2322, %v2309
    %v2327 = vmul.f32 %v2322, %v2310
    %v2328 = vmul.f32 %v2322, %v2311
    %v2329 = vmul.f32 %v2322, %v2312
    %v2330 = vmul.f32 %v2322, %v2313
    %v2331 = vmul.f32 %v2322, %v2314
    %v2332 = vmul.f32 %v2322, %v2315
    %v2333 = vmul.f32 %v2322, %v2316
    %v2334 = vmul.f32 %v2322, %v2317
    %v2335 = vmul.f32 %v2322, %v2318
    %v2336 = vmul.f32 %v2322, %v2319
    %v2337 = vmul.f32 %v2322, %v2320
    %v2338 = vmul.f32 %v2322, %v2321
    %v2339 = vadd.f32 %v2204, %v2323
    %v2340 = vadd.f32 %v2205, %v2324
    %v2341 = vadd.f32 %v2206, %v2325
    %v2342 = vadd.f32 %v2207, %v2326
    %v2343 = vadd.f32 %v2208, %v2327
    %v2344 = vadd.f32 %v2209, %v2328
    %v2345 = vadd.f32 %v2210, %v2329
    %v2346 = vadd.f32 %v2211, %v2330
    %v2347 = vadd.f32 %v2212, %v2331
    %v2348 = vadd.f32 %v2213, %v2332
    %v2349 = vadd.f32 %v2214, %v2333
    %v2350 = vadd.f32 %v2215, %v2334
    %v2351 = vadd.f32 %v2216, %v2335
    %v2352 = vadd.f32 %v2217, %v2336
    %v2353 = vadd.f32 %v2218, %v2337
    %v2354 = vadd.f32 %v2219, %v2338
    %s2355 = sld [smem:[#allocation2 + $0x11]]
    %v2356 = vld [vmem:[%s2 + $0x11] sm:$0x1]
    %2357 = vset.pattern.permute.xlu0 17
    %2358 = vperm.xlu0 %2357, %v28
    %v2359 = vpop.permute.xlu0 %2358
    %2361 = vset.pattern.permute.xlu0 17
    %2362 = vperm.xlu0 %2361, %v29
    %v2363 = vpop.permute.xlu0 %2362
    %2365 = vset.pattern.permute.xlu0 17
    %2366 = vperm.xlu0 %2365, %v30
    %v2367 = vpop.permute.xlu0 %2366
    %2369 = vset.pattern.permute.xlu0 17
    %2370 = vperm.xlu0 %2369, %v31
    %v2371 = vpop.permute.xlu0 %2370
    %2373 = vset.pattern.permute.xlu0 17
    %2374 = vperm.xlu0 %2373, %v32
    %v2375 = vpop.permute.xlu0 %2374
    %2377 = vset.pattern.permute.xlu0 17
    %2378 = vperm.xlu0 %2377, %v33
    %v2379 = vpop.permute.xlu0 %2378
    %2381 = vset.pattern.permute.xlu0 17
    %2382 = vperm.xlu0 %2381, %v34
    %v2383 = vpop.permute.xlu0 %2382
    %2385 = vset.pattern.permute.xlu0 17
    %2386 = vperm.xlu0 %2385, %v35
    %v2387 = vpop.permute.xlu0 %2386
    %2389 = vset.pattern.permute.xlu0 17
    %2390 = vperm.xlu0 %2389, %v36
    %v2391 = vpop.permute.xlu0 %2390
    %2393 = vset.pattern.permute.xlu0 17
    %2394 = vperm.xlu0 %2393, %v37
    %v2395 = vpop.permute.xlu0 %2394
    %2397 = vset.pattern.permute.xlu0 17
    %2398 = vperm.xlu0 %2397, %v38
    %v2399 = vpop.permute.xlu0 %2398
    %2401 = vset.pattern.permute.xlu0 17
    %2402 = vperm.xlu0 %2401, %v39
    %v2403 = vpop.permute.xlu0 %2402
    %2405 = vset.pattern.permute.xlu0 17
    %2406 = vperm.xlu0 %2405, %v40
    %v2407 = vpop.permute.xlu0 %2406
    %2409 = vset.pattern.permute.xlu0 17
    %2410 = vperm.xlu0 %2409, %v41
    %v2411 = vpop.permute.xlu0 %2410
    %2413 = vset.pattern.permute.xlu0 17
    %2414 = vperm.xlu0 %2413, %v42
    %v2415 = vpop.permute.xlu0 %2414
    %2417 = vset.pattern.permute.xlu0 17
    %2418 = vperm.xlu0 %2417, %v43
    %v2419 = vpop.permute.xlu0 %2418
    %v2421 = vlaneseq
    %v2422 = vshrl.u32 %v2421, 7
    %v2423 = vsub.s32 0, %v2422
    %v2424 = vrot.slane %v2356, %v2423
    %v2425 = vsub.f32 %v2359, %v2424
    %v2426 = vsub.f32 %v2363, %v2424
    %v2427 = vsub.f32 %v2367, %v2424
    %v2428 = vsub.f32 %v2371, %v2424
    %v2429 = vsub.f32 %v2375, %v2424
    %v2430 = vsub.f32 %v2379, %v2424
    %v2431 = vsub.f32 %v2383, %v2424
    %v2432 = vsub.f32 %v2387, %v2424
    %v2433 = vsub.f32 %v2391, %v2424
    %v2434 = vsub.f32 %v2395, %v2424
    %v2435 = vsub.f32 %v2399, %v2424
    %v2436 = vsub.f32 %v2403, %v2424
    %v2437 = vsub.f32 %v2407, %v2424
    %v2438 = vsub.f32 %v2411, %v2424
    %v2439 = vsub.f32 %v2415, %v2424
    %v2440 = vsub.f32 %v2419, %v2424
    %v2441 = vand.u32 2147483647, %v2425
    %v2442 = vand.u32 2147483647, %v2426
    %v2443 = vand.u32 2147483647, %v2427
    %v2444 = vand.u32 2147483647, %v2428
    %v2445 = vand.u32 2147483647, %v2429
    %v2446 = vand.u32 2147483647, %v2430
    %v2447 = vand.u32 2147483647, %v2431
    %v2448 = vand.u32 2147483647, %v2432
    %v2449 = vand.u32 2147483647, %v2433
    %v2450 = vand.u32 2147483647, %v2434
    %v2451 = vand.u32 2147483647, %v2435
    %v2452 = vand.u32 2147483647, %v2436
    %v2453 = vand.u32 2147483647, %v2437
    %v2454 = vand.u32 2147483647, %v2438
    %v2455 = vand.u32 2147483647, %v2439
    %v2456 = vand.u32 2147483647, %v2440
    %v2457 = vstv %s2355
    %v2458 = vmul.f32 %v2457, %v2441
    %v2459 = vmul.f32 %v2457, %v2442
    %v2460 = vmul.f32 %v2457, %v2443
    %v2461 = vmul.f32 %v2457, %v2444
    %v2462 = vmul.f32 %v2457, %v2445
    %v2463 = vmul.f32 %v2457, %v2446
    %v2464 = vmul.f32 %v2457, %v2447
    %v2465 = vmul.f32 %v2457, %v2448
    %v2466 = vmul.f32 %v2457, %v2449
    %v2467 = vmul.f32 %v2457, %v2450
    %v2468 = vmul.f32 %v2457, %v2451
    %v2469 = vmul.f32 %v2457, %v2452
    %v2470 = vmul.f32 %v2457, %v2453
    %v2471 = vmul.f32 %v2457, %v2454
    %v2472 = vmul.f32 %v2457, %v2455
    %v2473 = vmul.f32 %v2457, %v2456
    %v2474 = vadd.f32 %v2339, %v2458
    %v2475 = vadd.f32 %v2340, %v2459
    %v2476 = vadd.f32 %v2341, %v2460
    %v2477 = vadd.f32 %v2342, %v2461
    %v2478 = vadd.f32 %v2343, %v2462
    %v2479 = vadd.f32 %v2344, %v2463
    %v2480 = vadd.f32 %v2345, %v2464
    %v2481 = vadd.f32 %v2346, %v2465
    %v2482 = vadd.f32 %v2347, %v2466
    %v2483 = vadd.f32 %v2348, %v2467
    %v2484 = vadd.f32 %v2349, %v2468
    %v2485 = vadd.f32 %v2350, %v2469
    %v2486 = vadd.f32 %v2351, %v2470
    %v2487 = vadd.f32 %v2352, %v2471
    %v2488 = vadd.f32 %v2353, %v2472
    %v2489 = vadd.f32 %v2354, %v2473
    %s2490 = sld [smem:[#allocation2 + $0x12]]
    %v2491 = vld [vmem:[%s2 + $0x12] sm:$0x1]
    %2492 = vset.pattern.permute.xlu0 18
    %2493 = vperm.xlu0 %2492, %v28
    %v2494 = vpop.permute.xlu0 %2493
    %2496 = vset.pattern.permute.xlu0 18
    %2497 = vperm.xlu0 %2496, %v29
    %v2498 = vpop.permute.xlu0 %2497
    %2500 = vset.pattern.permute.xlu0 18
    %2501 = vperm.xlu0 %2500, %v30
    %v2502 = vpop.permute.xlu0 %2501
    %2504 = vset.pattern.permute.xlu0 18
    %2505 = vperm.xlu0 %2504, %v31
    %v2506 = vpop.permute.xlu0 %2505
    %2508 = vset.pattern.permute.xlu0 18
    %2509 = vperm.xlu0 %2508, %v32
    %v2510 = vpop.permute.xlu0 %2509
    %2512 = vset.pattern.permute.xlu0 18
    %2513 = vperm.xlu0 %2512, %v33
    %v2514 = vpop.permute.xlu0 %2513
    %2516 = vset.pattern.permute.xlu0 18
    %2517 = vperm.xlu0 %2516, %v34
    %v2518 = vpop.permute.xlu0 %2517
    %2520 = vset.pattern.permute.xlu0 18
    %2521 = vperm.xlu0 %2520, %v35
    %v2522 = vpop.permute.xlu0 %2521
    %2524 = vset.pattern.permute.xlu0 18
    %2525 = vperm.xlu0 %2524, %v36
    %v2526 = vpop.permute.xlu0 %2525
    %2528 = vset.pattern.permute.xlu0 18
    %2529 = vperm.xlu0 %2528, %v37
    %v2530 = vpop.permute.xlu0 %2529
    %2532 = vset.pattern.permute.xlu0 18
    %2533 = vperm.xlu0 %2532, %v38
    %v2534 = vpop.permute.xlu0 %2533
    %2536 = vset.pattern.permute.xlu0 18
    %2537 = vperm.xlu0 %2536, %v39
    %v2538 = vpop.permute.xlu0 %2537
    %2540 = vset.pattern.permute.xlu0 18
    %2541 = vperm.xlu0 %2540, %v40
    %v2542 = vpop.permute.xlu0 %2541
    %2544 = vset.pattern.permute.xlu0 18
    %2545 = vperm.xlu0 %2544, %v41
    %v2546 = vpop.permute.xlu0 %2545
    %2548 = vset.pattern.permute.xlu0 18
    %2549 = vperm.xlu0 %2548, %v42
    %v2550 = vpop.permute.xlu0 %2549
    %2552 = vset.pattern.permute.xlu0 18
    %2553 = vperm.xlu0 %2552, %v43
    %v2554 = vpop.permute.xlu0 %2553
    %v2556 = vlaneseq
    %v2557 = vshrl.u32 %v2556, 7
    %v2558 = vsub.s32 0, %v2557
    %v2559 = vrot.slane %v2491, %v2558
    %v2560 = vsub.f32 %v2494, %v2559
    %v2561 = vsub.f32 %v2498, %v2559
    %v2562 = vsub.f32 %v2502, %v2559
    %v2563 = vsub.f32 %v2506, %v2559
    %v2564 = vsub.f32 %v2510, %v2559
    %v2565 = vsub.f32 %v2514, %v2559
    %v2566 = vsub.f32 %v2518, %v2559
    %v2567 = vsub.f32 %v2522, %v2559
    %v2568 = vsub.f32 %v2526, %v2559
    %v2569 = vsub.f32 %v2530, %v2559
    %v2570 = vsub.f32 %v2534, %v2559
    %v2571 = vsub.f32 %v2538, %v2559
    %v2572 = vsub.f32 %v2542, %v2559
    %v2573 = vsub.f32 %v2546, %v2559
    %v2574 = vsub.f32 %v2550, %v2559
    %v2575 = vsub.f32 %v2554, %v2559
    %v2576 = vand.u32 2147483647, %v2560
    %v2577 = vand.u32 2147483647, %v2561
    %v2578 = vand.u32 2147483647, %v2562
    %v2579 = vand.u32 2147483647, %v2563
    %v2580 = vand.u32 2147483647, %v2564
    %v2581 = vand.u32 2147483647, %v2565
    %v2582 = vand.u32 2147483647, %v2566
    %v2583 = vand.u32 2147483647, %v2567
    %v2584 = vand.u32 2147483647, %v2568
    %v2585 = vand.u32 2147483647, %v2569
    %v2586 = vand.u32 2147483647, %v2570
    %v2587 = vand.u32 2147483647, %v2571
    %v2588 = vand.u32 2147483647, %v2572
    %v2589 = vand.u32 2147483647, %v2573
    %v2590 = vand.u32 2147483647, %v2574
    %v2591 = vand.u32 2147483647, %v2575
    %v2592 = vstv %s2490
    %v2593 = vmul.f32 %v2592, %v2576
    %v2594 = vmul.f32 %v2592, %v2577
    %v2595 = vmul.f32 %v2592, %v2578
    %v2596 = vmul.f32 %v2592, %v2579
    %v2597 = vmul.f32 %v2592, %v2580
    %v2598 = vmul.f32 %v2592, %v2581
    %v2599 = vmul.f32 %v2592, %v2582
    %v2600 = vmul.f32 %v2592, %v2583
    %v2601 = vmul.f32 %v2592, %v2584
    %v2602 = vmul.f32 %v2592, %v2585
    %v2603 = vmul.f32 %v2592, %v2586
    %v2604 = vmul.f32 %v2592, %v2587
    %v2605 = vmul.f32 %v2592, %v2588
    %v2606 = vmul.f32 %v2592, %v2589
    %v2607 = vmul.f32 %v2592, %v2590
    %v2608 = vmul.f32 %v2592, %v2591
    %v2609 = vadd.f32 %v2474, %v2593
    %v2610 = vadd.f32 %v2475, %v2594
    %v2611 = vadd.f32 %v2476, %v2595
    %v2612 = vadd.f32 %v2477, %v2596
    %v2613 = vadd.f32 %v2478, %v2597
    %v2614 = vadd.f32 %v2479, %v2598
    %v2615 = vadd.f32 %v2480, %v2599
    %v2616 = vadd.f32 %v2481, %v2600
    %v2617 = vadd.f32 %v2482, %v2601
    %v2618 = vadd.f32 %v2483, %v2602
    %v2619 = vadd.f32 %v2484, %v2603
    %v2620 = vadd.f32 %v2485, %v2604
    %v2621 = vadd.f32 %v2486, %v2605
    %v2622 = vadd.f32 %v2487, %v2606
    %v2623 = vadd.f32 %v2488, %v2607
    %v2624 = vadd.f32 %v2489, %v2608
    %s2625 = sld [smem:[#allocation2 + $0x13]]
    %v2626 = vld [vmem:[%s2 + $0x13] sm:$0x1]
    %2627 = vset.pattern.permute.xlu0 19
    %2628 = vperm.xlu0 %2627, %v28
    %v2629 = vpop.permute.xlu0 %2628
    %2631 = vset.pattern.permute.xlu0 19
    %2632 = vperm.xlu0 %2631, %v29
    %v2633 = vpop.permute.xlu0 %2632
    %2635 = vset.pattern.permute.xlu0 19
    %2636 = vperm.xlu0 %2635, %v30
    %v2637 = vpop.permute.xlu0 %2636
    %2639 = vset.pattern.permute.xlu0 19
    %2640 = vperm.xlu0 %2639, %v31
    %v2641 = vpop.permute.xlu0 %2640
    %2643 = vset.pattern.permute.xlu0 19
    %2644 = vperm.xlu0 %2643, %v32
    %v2645 = vpop.permute.xlu0 %2644
    %2647 = vset.pattern.permute.xlu0 19
    %2648 = vperm.xlu0 %2647, %v33
    %v2649 = vpop.permute.xlu0 %2648
    %2651 = vset.pattern.permute.xlu0 19
    %2652 = vperm.xlu0 %2651, %v34
    %v2653 = vpop.permute.xlu0 %2652
    %2655 = vset.pattern.permute.xlu0 19
    %2656 = vperm.xlu0 %2655, %v35
    %v2657 = vpop.permute.xlu0 %2656
    %2659 = vset.pattern.permute.xlu0 19
    %2660 = vperm.xlu0 %2659, %v36
    %v2661 = vpop.permute.xlu0 %2660
    %2663 = vset.pattern.permute.xlu0 19
    %2664 = vperm.xlu0 %2663, %v37
    %v2665 = vpop.permute.xlu0 %2664
    %2667 = vset.pattern.permute.xlu0 19
    %2668 = vperm.xlu0 %2667, %v38
    %v2669 = vpop.permute.xlu0 %2668
    %2671 = vset.pattern.permute.xlu0 19
    %2672 = vperm.xlu0 %2671, %v39
    %v2673 = vpop.permute.xlu0 %2672
    %2675 = vset.pattern.permute.xlu0 19
    %2676 = vperm.xlu0 %2675, %v40
    %v2677 = vpop.permute.xlu0 %2676
    %2679 = vset.pattern.permute.xlu0 19
    %2680 = vperm.xlu0 %2679, %v41
    %v2681 = vpop.permute.xlu0 %2680
    %2683 = vset.pattern.permute.xlu0 19
    %2684 = vperm.xlu0 %2683, %v42
    %v2685 = vpop.permute.xlu0 %2684
    %2687 = vset.pattern.permute.xlu0 19
    %2688 = vperm.xlu0 %2687, %v43
    %v2689 = vpop.permute.xlu0 %2688
    %v2691 = vlaneseq
    %v2692 = vshrl.u32 %v2691, 7
    %v2693 = vsub.s32 0, %v2692
    %v2694 = vrot.slane %v2626, %v2693
    %v2695 = vsub.f32 %v2629, %v2694
    %v2696 = vsub.f32 %v2633, %v2694
    %v2697 = vsub.f32 %v2637, %v2694
    %v2698 = vsub.f32 %v2641, %v2694
    %v2699 = vsub.f32 %v2645, %v2694
    %v2700 = vsub.f32 %v2649, %v2694
    %v2701 = vsub.f32 %v2653, %v2694
    %v2702 = vsub.f32 %v2657, %v2694
    %v2703 = vsub.f32 %v2661, %v2694
    %v2704 = vsub.f32 %v2665, %v2694
    %v2705 = vsub.f32 %v2669, %v2694
    %v2706 = vsub.f32 %v2673, %v2694
    %v2707 = vsub.f32 %v2677, %v2694
    %v2708 = vsub.f32 %v2681, %v2694
    %v2709 = vsub.f32 %v2685, %v2694
    %v2710 = vsub.f32 %v2689, %v2694
    %v2711 = vand.u32 2147483647, %v2695
    %v2712 = vand.u32 2147483647, %v2696
    %v2713 = vand.u32 2147483647, %v2697
    %v2714 = vand.u32 2147483647, %v2698
    %v2715 = vand.u32 2147483647, %v2699
    %v2716 = vand.u32 2147483647, %v2700
    %v2717 = vand.u32 2147483647, %v2701
    %v2718 = vand.u32 2147483647, %v2702
    %v2719 = vand.u32 2147483647, %v2703
    %v2720 = vand.u32 2147483647, %v2704
    %v2721 = vand.u32 2147483647, %v2705
    %v2722 = vand.u32 2147483647, %v2706
    %v2723 = vand.u32 2147483647, %v2707
    %v2724 = vand.u32 2147483647, %v2708
    %v2725 = vand.u32 2147483647, %v2709
    %v2726 = vand.u32 2147483647, %v2710
    %v2727 = vstv %s2625
    %v2728 = vmul.f32 %v2727, %v2711
    %v2729 = vmul.f32 %v2727, %v2712
    %v2730 = vmul.f32 %v2727, %v2713
    %v2731 = vmul.f32 %v2727, %v2714
    %v2732 = vmul.f32 %v2727, %v2715
    %v2733 = vmul.f32 %v2727, %v2716
    %v2734 = vmul.f32 %v2727, %v2717
    %v2735 = vmul.f32 %v2727, %v2718
    %v2736 = vmul.f32 %v2727, %v2719
    %v2737 = vmul.f32 %v2727, %v2720
    %v2738 = vmul.f32 %v2727, %v2721
    %v2739 = vmul.f32 %v2727, %v2722
    %v2740 = vmul.f32 %v2727, %v2723
    %v2741 = vmul.f32 %v2727, %v2724
    %v2742 = vmul.f32 %v2727, %v2725
    %v2743 = vmul.f32 %v2727, %v2726
    %v2744 = vadd.f32 %v2609, %v2728
    %v2745 = vadd.f32 %v2610, %v2729
    %v2746 = vadd.f32 %v2611, %v2730
    %v2747 = vadd.f32 %v2612, %v2731
    %v2748 = vadd.f32 %v2613, %v2732
    %v2749 = vadd.f32 %v2614, %v2733
    %v2750 = vadd.f32 %v2615, %v2734
    %v2751 = vadd.f32 %v2616, %v2735
    %v2752 = vadd.f32 %v2617, %v2736
    %v2753 = vadd.f32 %v2618, %v2737
    %v2754 = vadd.f32 %v2619, %v2738
    %v2755 = vadd.f32 %v2620, %v2739
    %v2756 = vadd.f32 %v2621, %v2740
    %v2757 = vadd.f32 %v2622, %v2741
    %v2758 = vadd.f32 %v2623, %v2742
    %v2759 = vadd.f32 %v2624, %v2743
    %s2760 = sld [smem:[#allocation2 + $0x14]]
    %v2761 = vld [vmem:[%s2 + $0x14] sm:$0x1]
    %2762 = vset.pattern.permute.xlu0 20
    %2763 = vperm.xlu0 %2762, %v28
    %v2764 = vpop.permute.xlu0 %2763
    %2766 = vset.pattern.permute.xlu0 20
    %2767 = vperm.xlu0 %2766, %v29
    %v2768 = vpop.permute.xlu0 %2767
    %2770 = vset.pattern.permute.xlu0 20
    %2771 = vperm.xlu0 %2770, %v30
    %v2772 = vpop.permute.xlu0 %2771
    %2774 = vset.pattern.permute.xlu0 20
    %2775 = vperm.xlu0 %2774, %v31
    %v2776 = vpop.permute.xlu0 %2775
    %2778 = vset.pattern.permute.xlu0 20
    %2779 = vperm.xlu0 %2778, %v32
    %v2780 = vpop.permute.xlu0 %2779
    %2782 = vset.pattern.permute.xlu0 20
    %2783 = vperm.xlu0 %2782, %v33
    %v2784 = vpop.permute.xlu0 %2783
    %2786 = vset.pattern.permute.xlu0 20
    %2787 = vperm.xlu0 %2786, %v34
    %v2788 = vpop.permute.xlu0 %2787
    %2790 = vset.pattern.permute.xlu0 20
    %2791 = vperm.xlu0 %2790, %v35
    %v2792 = vpop.permute.xlu0 %2791
    %2794 = vset.pattern.permute.xlu0 20
    %2795 = vperm.xlu0 %2794, %v36
    %v2796 = vpop.permute.xlu0 %2795
    %2798 = vset.pattern.permute.xlu0 20
    %2799 = vperm.xlu0 %2798, %v37
    %v2800 = vpop.permute.xlu0 %2799
    %2802 = vset.pattern.permute.xlu0 20
    %2803 = vperm.xlu0 %2802, %v38
    %v2804 = vpop.permute.xlu0 %2803
    %2806 = vset.pattern.permute.xlu0 20
    %2807 = vperm.xlu0 %2806, %v39
    %v2808 = vpop.permute.xlu0 %2807
    %2810 = vset.pattern.permute.xlu0 20
    %2811 = vperm.xlu0 %2810, %v40
    %v2812 = vpop.permute.xlu0 %2811
    %2814 = vset.pattern.permute.xlu0 20
    %2815 = vperm.xlu0 %2814, %v41
    %v2816 = vpop.permute.xlu0 %2815
    %2818 = vset.pattern.permute.xlu0 20
    %2819 = vperm.xlu0 %2818, %v42
    %v2820 = vpop.permute.xlu0 %2819
    %2822 = vset.pattern.permute.xlu0 20
    %2823 = vperm.xlu0 %2822, %v43
    %v2824 = vpop.permute.xlu0 %2823
    %v2826 = vlaneseq
    %v2827 = vshrl.u32 %v2826, 7
    %v2828 = vsub.s32 0, %v2827
    %v2829 = vrot.slane %v2761, %v2828
    %v2830 = vsub.f32 %v2764, %v2829
    %v2831 = vsub.f32 %v2768, %v2829
    %v2832 = vsub.f32 %v2772, %v2829
    %v2833 = vsub.f32 %v2776, %v2829
    %v2834 = vsub.f32 %v2780, %v2829
    %v2835 = vsub.f32 %v2784, %v2829
    %v2836 = vsub.f32 %v2788, %v2829
    %v2837 = vsub.f32 %v2792, %v2829
    %v2838 = vsub.f32 %v2796, %v2829
    %v2839 = vsub.f32 %v2800, %v2829
    %v2840 = vsub.f32 %v2804, %v2829
    %v2841 = vsub.f32 %v2808, %v2829
    %v2842 = vsub.f32 %v2812, %v2829
    %v2843 = vsub.f32 %v2816, %v2829
    %v2844 = vsub.f32 %v2820, %v2829
    %v2845 = vsub.f32 %v2824, %v2829
    %v2846 = vand.u32 2147483647, %v2830
    %v2847 = vand.u32 2147483647, %v2831
    %v2848 = vand.u32 2147483647, %v2832
    %v2849 = vand.u32 2147483647, %v2833
    %v2850 = vand.u32 2147483647, %v2834
    %v2851 = vand.u32 2147483647, %v2835
    %v2852 = vand.u32 2147483647, %v2836
    %v2853 = vand.u32 2147483647, %v2837
    %v2854 = vand.u32 2147483647, %v2838
    %v2855 = vand.u32 2147483647, %v2839
    %v2856 = vand.u32 2147483647, %v2840
    %v2857 = vand.u32 2147483647, %v2841
    %v2858 = vand.u32 2147483647, %v2842
    %v2859 = vand.u32 2147483647, %v2843
    %v2860 = vand.u32 2147483647, %v2844
    %v2861 = vand.u32 2147483647, %v2845
    %v2862 = vstv %s2760
    %v2863 = vmul.f32 %v2862, %v2846
    %v2864 = vmul.f32 %v2862, %v2847
    %v2865 = vmul.f32 %v2862, %v2848
    %v2866 = vmul.f32 %v2862, %v2849
    %v2867 = vmul.f32 %v2862, %v2850
    %v2868 = vmul.f32 %v2862, %v2851
    %v2869 = vmul.f32 %v2862, %v2852
    %v2870 = vmul.f32 %v2862, %v2853
    %v2871 = vmul.f32 %v2862, %v2854
    %v2872 = vmul.f32 %v2862, %v2855
    %v2873 = vmul.f32 %v2862, %v2856
    %v2874 = vmul.f32 %v2862, %v2857
    %v2875 = vmul.f32 %v2862, %v2858
    %v2876 = vmul.f32 %v2862, %v2859
    %v2877 = vmul.f32 %v2862, %v2860
    %v2878 = vmul.f32 %v2862, %v2861
    %v2879 = vadd.f32 %v2744, %v2863
    %v2880 = vadd.f32 %v2745, %v2864
    %v2881 = vadd.f32 %v2746, %v2865
    %v2882 = vadd.f32 %v2747, %v2866
    %v2883 = vadd.f32 %v2748, %v2867
    %v2884 = vadd.f32 %v2749, %v2868
    %v2885 = vadd.f32 %v2750, %v2869
    %v2886 = vadd.f32 %v2751, %v2870
    %v2887 = vadd.f32 %v2752, %v2871
    %v2888 = vadd.f32 %v2753, %v2872
    %v2889 = vadd.f32 %v2754, %v2873
    %v2890 = vadd.f32 %v2755, %v2874
    %v2891 = vadd.f32 %v2756, %v2875
    %v2892 = vadd.f32 %v2757, %v2876
    %v2893 = vadd.f32 %v2758, %v2877
    %v2894 = vadd.f32 %v2759, %v2878
    %s2895 = sld [smem:[#allocation2 + $0x15]]
    %v2896 = vld [vmem:[%s2 + $0x15] sm:$0x1]
    %2897 = vset.pattern.permute.xlu0 21
    %2898 = vperm.xlu0 %2897, %v28
    %v2899 = vpop.permute.xlu0 %2898
    %2901 = vset.pattern.permute.xlu0 21
    %2902 = vperm.xlu0 %2901, %v29
    %v2903 = vpop.permute.xlu0 %2902
    %2905 = vset.pattern.permute.xlu0 21
    %2906 = vperm.xlu0 %2905, %v30
    %v2907 = vpop.permute.xlu0 %2906
    %2909 = vset.pattern.permute.xlu0 21
    %2910 = vperm.xlu0 %2909, %v31
    %v2911 = vpop.permute.xlu0 %2910
    %2913 = vset.pattern.permute.xlu0 21
    %2914 = vperm.xlu0 %2913, %v32
    %v2915 = vpop.permute.xlu0 %2914
    %2917 = vset.pattern.permute.xlu0 21
    %2918 = vperm.xlu0 %2917, %v33
    %v2919 = vpop.permute.xlu0 %2918
    %2921 = vset.pattern.permute.xlu0 21
    %2922 = vperm.xlu0 %2921, %v34
    %v2923 = vpop.permute.xlu0 %2922
    %2925 = vset.pattern.permute.xlu0 21
    %2926 = vperm.xlu0 %2925, %v35
    %v2927 = vpop.permute.xlu0 %2926
    %2929 = vset.pattern.permute.xlu0 21
    %2930 = vperm.xlu0 %2929, %v36
    %v2931 = vpop.permute.xlu0 %2930
    %2933 = vset.pattern.permute.xlu0 21
    %2934 = vperm.xlu0 %2933, %v37
    %v2935 = vpop.permute.xlu0 %2934
    %2937 = vset.pattern.permute.xlu0 21
    %2938 = vperm.xlu0 %2937, %v38
    %v2939 = vpop.permute.xlu0 %2938
    %2941 = vset.pattern.permute.xlu0 21
    %2942 = vperm.xlu0 %2941, %v39
    %v2943 = vpop.permute.xlu0 %2942
    %2945 = vset.pattern.permute.xlu0 21
    %2946 = vperm.xlu0 %2945, %v40
    %v2947 = vpop.permute.xlu0 %2946
    %2949 = vset.pattern.permute.xlu0 21
    %2950 = vperm.xlu0 %2949, %v41
    %v2951 = vpop.permute.xlu0 %2950
    %2953 = vset.pattern.permute.xlu0 21
    %2954 = vperm.xlu0 %2953, %v42
    %v2955 = vpop.permute.xlu0 %2954
    %2957 = vset.pattern.permute.xlu0 21
    %2958 = vperm.xlu0 %2957, %v43
    %v2959 = vpop.permute.xlu0 %2958
    %v2961 = vlaneseq
    %v2962 = vshrl.u32 %v2961, 7
    %v2963 = vsub.s32 0, %v2962
    %v2964 = vrot.slane %v2896, %v2963
    %v2965 = vsub.f32 %v2899, %v2964
    %v2966 = vsub.f32 %v2903, %v2964
    %v2967 = vsub.f32 %v2907, %v2964
    %v2968 = vsub.f32 %v2911, %v2964
    %v2969 = vsub.f32 %v2915, %v2964
    %v2970 = vsub.f32 %v2919, %v2964
    %v2971 = vsub.f32 %v2923, %v2964
    %v2972 = vsub.f32 %v2927, %v2964
    %v2973 = vsub.f32 %v2931, %v2964
    %v2974 = vsub.f32 %v2935, %v2964
    %v2975 = vsub.f32 %v2939, %v2964
    %v2976 = vsub.f32 %v2943, %v2964
    %v2977 = vsub.f32 %v2947, %v2964
    %v2978 = vsub.f32 %v2951, %v2964
    %v2979 = vsub.f32 %v2955, %v2964
    %v2980 = vsub.f32 %v2959, %v2964
    %v2981 = vand.u32 2147483647, %v2965
    %v2982 = vand.u32 2147483647, %v2966
    %v2983 = vand.u32 2147483647, %v2967
    %v2984 = vand.u32 2147483647, %v2968
    %v2985 = vand.u32 2147483647, %v2969
    %v2986 = vand.u32 2147483647, %v2970
    %v2987 = vand.u32 2147483647, %v2971
    %v2988 = vand.u32 2147483647, %v2972
    %v2989 = vand.u32 2147483647, %v2973
    %v2990 = vand.u32 2147483647, %v2974
    %v2991 = vand.u32 2147483647, %v2975
    %v2992 = vand.u32 2147483647, %v2976
    %v2993 = vand.u32 2147483647, %v2977
    %v2994 = vand.u32 2147483647, %v2978
    %v2995 = vand.u32 2147483647, %v2979
    %v2996 = vand.u32 2147483647, %v2980
    %v2997 = vstv %s2895
    %v2998 = vmul.f32 %v2997, %v2981
    %v2999 = vmul.f32 %v2997, %v2982
    %v3000 = vmul.f32 %v2997, %v2983
    %v3001 = vmul.f32 %v2997, %v2984
    %v3002 = vmul.f32 %v2997, %v2985
    %v3003 = vmul.f32 %v2997, %v2986
    %v3004 = vmul.f32 %v2997, %v2987
    %v3005 = vmul.f32 %v2997, %v2988
    %v3006 = vmul.f32 %v2997, %v2989
    %v3007 = vmul.f32 %v2997, %v2990
    %v3008 = vmul.f32 %v2997, %v2991
    %v3009 = vmul.f32 %v2997, %v2992
    %v3010 = vmul.f32 %v2997, %v2993
    %v3011 = vmul.f32 %v2997, %v2994
    %v3012 = vmul.f32 %v2997, %v2995
    %v3013 = vmul.f32 %v2997, %v2996
    %v3014 = vadd.f32 %v2879, %v2998
    %v3015 = vadd.f32 %v2880, %v2999
    %v3016 = vadd.f32 %v2881, %v3000
    %v3017 = vadd.f32 %v2882, %v3001
    %v3018 = vadd.f32 %v2883, %v3002
    %v3019 = vadd.f32 %v2884, %v3003
    %v3020 = vadd.f32 %v2885, %v3004
    %v3021 = vadd.f32 %v2886, %v3005
    %v3022 = vadd.f32 %v2887, %v3006
    %v3023 = vadd.f32 %v2888, %v3007
    %v3024 = vadd.f32 %v2889, %v3008
    %v3025 = vadd.f32 %v2890, %v3009
    %v3026 = vadd.f32 %v2891, %v3010
    %v3027 = vadd.f32 %v2892, %v3011
    %v3028 = vadd.f32 %v2893, %v3012
    %v3029 = vadd.f32 %v2894, %v3013
    %s3030 = sld [smem:[#allocation2 + $0x16]]
    %v3031 = vld [vmem:[%s2 + $0x16] sm:$0x1]
    %3032 = vset.pattern.permute.xlu0 22
    %3033 = vperm.xlu0 %3032, %v28
    %v3034 = vpop.permute.xlu0 %3033
    %3036 = vset.pattern.permute.xlu0 22
    %3037 = vperm.xlu0 %3036, %v29
    %v3038 = vpop.permute.xlu0 %3037
    %3040 = vset.pattern.permute.xlu0 22
    %3041 = vperm.xlu0 %3040, %v30
    %v3042 = vpop.permute.xlu0 %3041
    %3044 = vset.pattern.permute.xlu0 22
    %3045 = vperm.xlu0 %3044, %v31
    %v3046 = vpop.permute.xlu0 %3045
    %3048 = vset.pattern.permute.xlu0 22
    %3049 = vperm.xlu0 %3048, %v32
    %v3050 = vpop.permute.xlu0 %3049
    %3052 = vset.pattern.permute.xlu0 22
    %3053 = vperm.xlu0 %3052, %v33
    %v3054 = vpop.permute.xlu0 %3053
    %3056 = vset.pattern.permute.xlu0 22
    %3057 = vperm.xlu0 %3056, %v34
    %v3058 = vpop.permute.xlu0 %3057
    %3060 = vset.pattern.permute.xlu0 22
    %3061 = vperm.xlu0 %3060, %v35
    %v3062 = vpop.permute.xlu0 %3061
    %3064 = vset.pattern.permute.xlu0 22
    %3065 = vperm.xlu0 %3064, %v36
    %v3066 = vpop.permute.xlu0 %3065
    %3068 = vset.pattern.permute.xlu0 22
    %3069 = vperm.xlu0 %3068, %v37
    %v3070 = vpop.permute.xlu0 %3069
    %3072 = vset.pattern.permute.xlu0 22
    %3073 = vperm.xlu0 %3072, %v38
    %v3074 = vpop.permute.xlu0 %3073
    %3076 = vset.pattern.permute.xlu0 22
    %3077 = vperm.xlu0 %3076, %v39
    %v3078 = vpop.permute.xlu0 %3077
    %3080 = vset.pattern.permute.xlu0 22
    %3081 = vperm.xlu0 %3080, %v40
    %v3082 = vpop.permute.xlu0 %3081
    %3084 = vset.pattern.permute.xlu0 22
    %3085 = vperm.xlu0 %3084, %v41
    %v3086 = vpop.permute.xlu0 %3085
    %3088 = vset.pattern.permute.xlu0 22
    %3089 = vperm.xlu0 %3088, %v42
    %v3090 = vpop.permute.xlu0 %3089
    %3092 = vset.pattern.permute.xlu0 22
    %3093 = vperm.xlu0 %3092, %v43
    %v3094 = vpop.permute.xlu0 %3093
    %v3096 = vlaneseq
    %v3097 = vshrl.u32 %v3096, 7
    %v3098 = vsub.s32 0, %v3097
    %v3099 = vrot.slane %v3031, %v3098
    %v3100 = vsub.f32 %v3034, %v3099
    %v3101 = vsub.f32 %v3038, %v3099
    %v3102 = vsub.f32 %v3042, %v3099
    %v3103 = vsub.f32 %v3046, %v3099
    %v3104 = vsub.f32 %v3050, %v3099
    %v3105 = vsub.f32 %v3054, %v3099
    %v3106 = vsub.f32 %v3058, %v3099
    %v3107 = vsub.f32 %v3062, %v3099
    %v3108 = vsub.f32 %v3066, %v3099
    %v3109 = vsub.f32 %v3070, %v3099
    %v3110 = vsub.f32 %v3074, %v3099
    %v3111 = vsub.f32 %v3078, %v3099
    %v3112 = vsub.f32 %v3082, %v3099
    %v3113 = vsub.f32 %v3086, %v3099
    %v3114 = vsub.f32 %v3090, %v3099
    %v3115 = vsub.f32 %v3094, %v3099
    %v3116 = vand.u32 2147483647, %v3100
    %v3117 = vand.u32 2147483647, %v3101
    %v3118 = vand.u32 2147483647, %v3102
    %v3119 = vand.u32 2147483647, %v3103
    %v3120 = vand.u32 2147483647, %v3104
    %v3121 = vand.u32 2147483647, %v3105
    %v3122 = vand.u32 2147483647, %v3106
    %v3123 = vand.u32 2147483647, %v3107
    %v3124 = vand.u32 2147483647, %v3108
    %v3125 = vand.u32 2147483647, %v3109
    %v3126 = vand.u32 2147483647, %v3110
    %v3127 = vand.u32 2147483647, %v3111
    %v3128 = vand.u32 2147483647, %v3112
    %v3129 = vand.u32 2147483647, %v3113
    %v3130 = vand.u32 2147483647, %v3114
    %v3131 = vand.u32 2147483647, %v3115
    %v3132 = vstv %s3030
    %v3133 = vmul.f32 %v3132, %v3116
    %v3134 = vmul.f32 %v3132, %v3117
    %v3135 = vmul.f32 %v3132, %v3118
    %v3136 = vmul.f32 %v3132, %v3119
    %v3137 = vmul.f32 %v3132, %v3120
    %v3138 = vmul.f32 %v3132, %v3121
    %v3139 = vmul.f32 %v3132, %v3122
    %v3140 = vmul.f32 %v3132, %v3123
    %v3141 = vmul.f32 %v3132, %v3124
    %v3142 = vmul.f32 %v3132, %v3125
    %v3143 = vmul.f32 %v3132, %v3126
    %v3144 = vmul.f32 %v3132, %v3127
    %v3145 = vmul.f32 %v3132, %v3128
    %v3146 = vmul.f32 %v3132, %v3129
    %v3147 = vmul.f32 %v3132, %v3130
    %v3148 = vmul.f32 %v3132, %v3131
    %v3149 = vadd.f32 %v3014, %v3133
    %v3150 = vadd.f32 %v3015, %v3134
    %v3151 = vadd.f32 %v3016, %v3135
    %v3152 = vadd.f32 %v3017, %v3136
    %v3153 = vadd.f32 %v3018, %v3137
    %v3154 = vadd.f32 %v3019, %v3138
    %v3155 = vadd.f32 %v3020, %v3139
    %v3156 = vadd.f32 %v3021, %v3140
    %v3157 = vadd.f32 %v3022, %v3141
    %v3158 = vadd.f32 %v3023, %v3142
    %v3159 = vadd.f32 %v3024, %v3143
    %v3160 = vadd.f32 %v3025, %v3144
    %v3161 = vadd.f32 %v3026, %v3145
    %v3162 = vadd.f32 %v3027, %v3146
    %v3163 = vadd.f32 %v3028, %v3147
    %v3164 = vadd.f32 %v3029, %v3148
    %s3165 = sld [smem:[#allocation2 + $0x17]]
    %v3166 = vld [vmem:[%s2 + $0x17] sm:$0x1]
    %3167 = vset.pattern.permute.xlu0 23
    %3168 = vperm.xlu0 %3167, %v28
    %v3169 = vpop.permute.xlu0 %3168
    %3171 = vset.pattern.permute.xlu0 23
    %3172 = vperm.xlu0 %3171, %v29
    %v3173 = vpop.permute.xlu0 %3172
    %3175 = vset.pattern.permute.xlu0 23
    %3176 = vperm.xlu0 %3175, %v30
    %v3177 = vpop.permute.xlu0 %3176
    %3179 = vset.pattern.permute.xlu0 23
    %3180 = vperm.xlu0 %3179, %v31
    %v3181 = vpop.permute.xlu0 %3180
    %3183 = vset.pattern.permute.xlu0 23
    %3184 = vperm.xlu0 %3183, %v32
    %v3185 = vpop.permute.xlu0 %3184
    %3187 = vset.pattern.permute.xlu0 23
    %3188 = vperm.xlu0 %3187, %v33
    %v3189 = vpop.permute.xlu0 %3188
    %3191 = vset.pattern.permute.xlu0 23
    %3192 = vperm.xlu0 %3191, %v34
    %v3193 = vpop.permute.xlu0 %3192
    %3195 = vset.pattern.permute.xlu0 23
    %3196 = vperm.xlu0 %3195, %v35
    %v3197 = vpop.permute.xlu0 %3196
    %3199 = vset.pattern.permute.xlu0 23
    %3200 = vperm.xlu0 %3199, %v36
    %v3201 = vpop.permute.xlu0 %3200
    %3203 = vset.pattern.permute.xlu0 23
    %3204 = vperm.xlu0 %3203, %v37
    %v3205 = vpop.permute.xlu0 %3204
    %3207 = vset.pattern.permute.xlu0 23
    %3208 = vperm.xlu0 %3207, %v38
    %v3209 = vpop.permute.xlu0 %3208
    %3211 = vset.pattern.permute.xlu0 23
    %3212 = vperm.xlu0 %3211, %v39
    %v3213 = vpop.permute.xlu0 %3212
    %3215 = vset.pattern.permute.xlu0 23
    %3216 = vperm.xlu0 %3215, %v40
    %v3217 = vpop.permute.xlu0 %3216
    %3219 = vset.pattern.permute.xlu0 23
    %3220 = vperm.xlu0 %3219, %v41
    %v3221 = vpop.permute.xlu0 %3220
    %3223 = vset.pattern.permute.xlu0 23
    %3224 = vperm.xlu0 %3223, %v42
    %v3225 = vpop.permute.xlu0 %3224
    %3227 = vset.pattern.permute.xlu0 23
    %3228 = vperm.xlu0 %3227, %v43
    %v3229 = vpop.permute.xlu0 %3228
    %v3231 = vlaneseq
    %v3232 = vshrl.u32 %v3231, 7
    %v3233 = vsub.s32 0, %v3232
    %v3234 = vrot.slane %v3166, %v3233
    %v3235 = vsub.f32 %v3169, %v3234
    %v3236 = vsub.f32 %v3173, %v3234
    %v3237 = vsub.f32 %v3177, %v3234
    %v3238 = vsub.f32 %v3181, %v3234
    %v3239 = vsub.f32 %v3185, %v3234
    %v3240 = vsub.f32 %v3189, %v3234
    %v3241 = vsub.f32 %v3193, %v3234
    %v3242 = vsub.f32 %v3197, %v3234
    %v3243 = vsub.f32 %v3201, %v3234
    %v3244 = vsub.f32 %v3205, %v3234
    %v3245 = vsub.f32 %v3209, %v3234
    %v3246 = vsub.f32 %v3213, %v3234
    %v3247 = vsub.f32 %v3217, %v3234
    %v3248 = vsub.f32 %v3221, %v3234
    %v3249 = vsub.f32 %v3225, %v3234
    %v3250 = vsub.f32 %v3229, %v3234
    %v3251 = vand.u32 2147483647, %v3235
    %v3252 = vand.u32 2147483647, %v3236
    %v3253 = vand.u32 2147483647, %v3237
    %v3254 = vand.u32 2147483647, %v3238
    %v3255 = vand.u32 2147483647, %v3239
    %v3256 = vand.u32 2147483647, %v3240
    %v3257 = vand.u32 2147483647, %v3241
    %v3258 = vand.u32 2147483647, %v3242
    %v3259 = vand.u32 2147483647, %v3243
    %v3260 = vand.u32 2147483647, %v3244
    %v3261 = vand.u32 2147483647, %v3245
    %v3262 = vand.u32 2147483647, %v3246
    %v3263 = vand.u32 2147483647, %v3247
    %v3264 = vand.u32 2147483647, %v3248
    %v3265 = vand.u32 2147483647, %v3249
    %v3266 = vand.u32 2147483647, %v3250
    %v3267 = vstv %s3165
    %v3268 = vmul.f32 %v3267, %v3251
    %v3269 = vmul.f32 %v3267, %v3252
    %v3270 = vmul.f32 %v3267, %v3253
    %v3271 = vmul.f32 %v3267, %v3254
    %v3272 = vmul.f32 %v3267, %v3255
    %v3273 = vmul.f32 %v3267, %v3256
    %v3274 = vmul.f32 %v3267, %v3257
    %v3275 = vmul.f32 %v3267, %v3258
    %v3276 = vmul.f32 %v3267, %v3259
    %v3277 = vmul.f32 %v3267, %v3260
    %v3278 = vmul.f32 %v3267, %v3261
    %v3279 = vmul.f32 %v3267, %v3262
    %v3280 = vmul.f32 %v3267, %v3263
    %v3281 = vmul.f32 %v3267, %v3264
    %v3282 = vmul.f32 %v3267, %v3265
    %v3283 = vmul.f32 %v3267, %v3266
    %v3284 = vadd.f32 %v3149, %v3268
    %v3285 = vadd.f32 %v3150, %v3269
    %v3286 = vadd.f32 %v3151, %v3270
    %v3287 = vadd.f32 %v3152, %v3271
    %v3288 = vadd.f32 %v3153, %v3272
    %v3289 = vadd.f32 %v3154, %v3273
    %v3290 = vadd.f32 %v3155, %v3274
    %v3291 = vadd.f32 %v3156, %v3275
    %v3292 = vadd.f32 %v3157, %v3276
    %v3293 = vadd.f32 %v3158, %v3277
    %v3294 = vadd.f32 %v3159, %v3278
    %v3295 = vadd.f32 %v3160, %v3279
    %v3296 = vadd.f32 %v3161, %v3280
    %v3297 = vadd.f32 %v3162, %v3281
    %v3298 = vadd.f32 %v3163, %v3282
    %v3299 = vadd.f32 %v3164, %v3283
    %s3300 = sld [smem:[#allocation2 + $0x18]]
    %v3301 = vld [vmem:[%s2 + $0x18] sm:$0x1]
    %3302 = vset.pattern.permute.xlu0 24
    %3303 = vperm.xlu0 %3302, %v28
    %v3304 = vpop.permute.xlu0 %3303
    %3306 = vset.pattern.permute.xlu0 24
    %3307 = vperm.xlu0 %3306, %v29
    %v3308 = vpop.permute.xlu0 %3307
    %3310 = vset.pattern.permute.xlu0 24
    %3311 = vperm.xlu0 %3310, %v30
    %v3312 = vpop.permute.xlu0 %3311
    %3314 = vset.pattern.permute.xlu0 24
    %3315 = vperm.xlu0 %3314, %v31
    %v3316 = vpop.permute.xlu0 %3315
    %3318 = vset.pattern.permute.xlu0 24
    %3319 = vperm.xlu0 %3318, %v32
    %v3320 = vpop.permute.xlu0 %3319
    %3322 = vset.pattern.permute.xlu0 24
    %3323 = vperm.xlu0 %3322, %v33
    %v3324 = vpop.permute.xlu0 %3323
    %3326 = vset.pattern.permute.xlu0 24
    %3327 = vperm.xlu0 %3326, %v34
    %v3328 = vpop.permute.xlu0 %3327
    %3330 = vset.pattern.permute.xlu0 24
    %3331 = vperm.xlu0 %3330, %v35
    %v3332 = vpop.permute.xlu0 %3331
    %3334 = vset.pattern.permute.xlu0 24
    %3335 = vperm.xlu0 %3334, %v36
    %v3336 = vpop.permute.xlu0 %3335
    %3338 = vset.pattern.permute.xlu0 24
    %3339 = vperm.xlu0 %3338, %v37
    %v3340 = vpop.permute.xlu0 %3339
    %3342 = vset.pattern.permute.xlu0 24
    %3343 = vperm.xlu0 %3342, %v38
    %v3344 = vpop.permute.xlu0 %3343
    %3346 = vset.pattern.permute.xlu0 24
    %3347 = vperm.xlu0 %3346, %v39
    %v3348 = vpop.permute.xlu0 %3347
    %3350 = vset.pattern.permute.xlu0 24
    %3351 = vperm.xlu0 %3350, %v40
    %v3352 = vpop.permute.xlu0 %3351
    %3354 = vset.pattern.permute.xlu0 24
    %3355 = vperm.xlu0 %3354, %v41
    %v3356 = vpop.permute.xlu0 %3355
    %3358 = vset.pattern.permute.xlu0 24
    %3359 = vperm.xlu0 %3358, %v42
    %v3360 = vpop.permute.xlu0 %3359
    %3362 = vset.pattern.permute.xlu0 24
    %3363 = vperm.xlu0 %3362, %v43
    %v3364 = vpop.permute.xlu0 %3363
    %v3366 = vlaneseq
    %v3367 = vshrl.u32 %v3366, 7
    %v3368 = vsub.s32 0, %v3367
    %v3369 = vrot.slane %v3301, %v3368
    %v3370 = vsub.f32 %v3304, %v3369
    %v3371 = vsub.f32 %v3308, %v3369
    %v3372 = vsub.f32 %v3312, %v3369
    %v3373 = vsub.f32 %v3316, %v3369
    %v3374 = vsub.f32 %v3320, %v3369
    %v3375 = vsub.f32 %v3324, %v3369
    %v3376 = vsub.f32 %v3328, %v3369
    %v3377 = vsub.f32 %v3332, %v3369
    %v3378 = vsub.f32 %v3336, %v3369
    %v3379 = vsub.f32 %v3340, %v3369
    %v3380 = vsub.f32 %v3344, %v3369
    %v3381 = vsub.f32 %v3348, %v3369
    %v3382 = vsub.f32 %v3352, %v3369
    %v3383 = vsub.f32 %v3356, %v3369
    %v3384 = vsub.f32 %v3360, %v3369
    %v3385 = vsub.f32 %v3364, %v3369
    %v3386 = vand.u32 2147483647, %v3370
    %v3387 = vand.u32 2147483647, %v3371
    %v3388 = vand.u32 2147483647, %v3372
    %v3389 = vand.u32 2147483647, %v3373
    %v3390 = vand.u32 2147483647, %v3374
    %v3391 = vand.u32 2147483647, %v3375
    %v3392 = vand.u32 2147483647, %v3376
    %v3393 = vand.u32 2147483647, %v3377
    %v3394 = vand.u32 2147483647, %v3378
    %v3395 = vand.u32 2147483647, %v3379
    %v3396 = vand.u32 2147483647, %v3380
    %v3397 = vand.u32 2147483647, %v3381
    %v3398 = vand.u32 2147483647, %v3382
    %v3399 = vand.u32 2147483647, %v3383
    %v3400 = vand.u32 2147483647, %v3384
    %v3401 = vand.u32 2147483647, %v3385
    %v3402 = vstv %s3300
    %v3403 = vmul.f32 %v3402, %v3386
    %v3404 = vmul.f32 %v3402, %v3387
    %v3405 = vmul.f32 %v3402, %v3388
    %v3406 = vmul.f32 %v3402, %v3389
    %v3407 = vmul.f32 %v3402, %v3390
    %v3408 = vmul.f32 %v3402, %v3391
    %v3409 = vmul.f32 %v3402, %v3392
    %v3410 = vmul.f32 %v3402, %v3393
    %v3411 = vmul.f32 %v3402, %v3394
    %v3412 = vmul.f32 %v3402, %v3395
    %v3413 = vmul.f32 %v3402, %v3396
    %v3414 = vmul.f32 %v3402, %v3397
    %v3415 = vmul.f32 %v3402, %v3398
    %v3416 = vmul.f32 %v3402, %v3399
    %v3417 = vmul.f32 %v3402, %v3400
    %v3418 = vmul.f32 %v3402, %v3401
    %v3419 = vadd.f32 %v3284, %v3403
    %v3420 = vadd.f32 %v3285, %v3404
    %v3421 = vadd.f32 %v3286, %v3405
    %v3422 = vadd.f32 %v3287, %v3406
    %v3423 = vadd.f32 %v3288, %v3407
    %v3424 = vadd.f32 %v3289, %v3408
    %v3425 = vadd.f32 %v3290, %v3409
    %v3426 = vadd.f32 %v3291, %v3410
    %v3427 = vadd.f32 %v3292, %v3411
    %v3428 = vadd.f32 %v3293, %v3412
    %v3429 = vadd.f32 %v3294, %v3413
    %v3430 = vadd.f32 %v3295, %v3414
    %v3431 = vadd.f32 %v3296, %v3415
    %v3432 = vadd.f32 %v3297, %v3416
    %v3433 = vadd.f32 %v3298, %v3417
    %v3434 = vadd.f32 %v3299, %v3418
    %s3435 = sld [smem:[#allocation2 + $0x19]]
    %v3436 = vld [vmem:[%s2 + $0x19] sm:$0x1]
    %3437 = vset.pattern.permute.xlu0 25
    %3438 = vperm.xlu0 %3437, %v28
    %v3439 = vpop.permute.xlu0 %3438
    %3441 = vset.pattern.permute.xlu0 25
    %3442 = vperm.xlu0 %3441, %v29
    %v3443 = vpop.permute.xlu0 %3442
    %3445 = vset.pattern.permute.xlu0 25
    %3446 = vperm.xlu0 %3445, %v30
    %v3447 = vpop.permute.xlu0 %3446
    %3449 = vset.pattern.permute.xlu0 25
    %3450 = vperm.xlu0 %3449, %v31
    %v3451 = vpop.permute.xlu0 %3450
    %3453 = vset.pattern.permute.xlu0 25
    %3454 = vperm.xlu0 %3453, %v32
    %v3455 = vpop.permute.xlu0 %3454
    %3457 = vset.pattern.permute.xlu0 25
    %3458 = vperm.xlu0 %3457, %v33
    %v3459 = vpop.permute.xlu0 %3458
    %3461 = vset.pattern.permute.xlu0 25
    %3462 = vperm.xlu0 %3461, %v34
    %v3463 = vpop.permute.xlu0 %3462
    %3465 = vset.pattern.permute.xlu0 25
    %3466 = vperm.xlu0 %3465, %v35
    %v3467 = vpop.permute.xlu0 %3466
    %3469 = vset.pattern.permute.xlu0 25
    %3470 = vperm.xlu0 %3469, %v36
    %v3471 = vpop.permute.xlu0 %3470
    %3473 = vset.pattern.permute.xlu0 25
    %3474 = vperm.xlu0 %3473, %v37
    %v3475 = vpop.permute.xlu0 %3474
    %3477 = vset.pattern.permute.xlu0 25
    %3478 = vperm.xlu0 %3477, %v38
    %v3479 = vpop.permute.xlu0 %3478
    %3481 = vset.pattern.permute.xlu0 25
    %3482 = vperm.xlu0 %3481, %v39
    %v3483 = vpop.permute.xlu0 %3482
    %3485 = vset.pattern.permute.xlu0 25
    %3486 = vperm.xlu0 %3485, %v40
    %v3487 = vpop.permute.xlu0 %3486
    %3489 = vset.pattern.permute.xlu0 25
    %3490 = vperm.xlu0 %3489, %v41
    %v3491 = vpop.permute.xlu0 %3490
    %3493 = vset.pattern.permute.xlu0 25
    %3494 = vperm.xlu0 %3493, %v42
    %v3495 = vpop.permute.xlu0 %3494
    %3497 = vset.pattern.permute.xlu0 25
    %3498 = vperm.xlu0 %3497, %v43
    %v3499 = vpop.permute.xlu0 %3498
    %v3501 = vlaneseq
    %v3502 = vshrl.u32 %v3501, 7
    %v3503 = vsub.s32 0, %v3502
    %v3504 = vrot.slane %v3436, %v3503
    %v3505 = vsub.f32 %v3439, %v3504
    %v3506 = vsub.f32 %v3443, %v3504
    %v3507 = vsub.f32 %v3447, %v3504
    %v3508 = vsub.f32 %v3451, %v3504
    %v3509 = vsub.f32 %v3455, %v3504
    %v3510 = vsub.f32 %v3459, %v3504
    %v3511 = vsub.f32 %v3463, %v3504
    %v3512 = vsub.f32 %v3467, %v3504
    %v3513 = vsub.f32 %v3471, %v3504
    %v3514 = vsub.f32 %v3475, %v3504
    %v3515 = vsub.f32 %v3479, %v3504
    %v3516 = vsub.f32 %v3483, %v3504
    %v3517 = vsub.f32 %v3487, %v3504
    %v3518 = vsub.f32 %v3491, %v3504
    %v3519 = vsub.f32 %v3495, %v3504
    %v3520 = vsub.f32 %v3499, %v3504
    %v3521 = vand.u32 2147483647, %v3505
    %v3522 = vand.u32 2147483647, %v3506
    %v3523 = vand.u32 2147483647, %v3507
    %v3524 = vand.u32 2147483647, %v3508
    %v3525 = vand.u32 2147483647, %v3509
    %v3526 = vand.u32 2147483647, %v3510
    %v3527 = vand.u32 2147483647, %v3511
    %v3528 = vand.u32 2147483647, %v3512
    %v3529 = vand.u32 2147483647, %v3513
    %v3530 = vand.u32 2147483647, %v3514
    %v3531 = vand.u32 2147483647, %v3515
    %v3532 = vand.u32 2147483647, %v3516
    %v3533 = vand.u32 2147483647, %v3517
    %v3534 = vand.u32 2147483647, %v3518
    %v3535 = vand.u32 2147483647, %v3519
    %v3536 = vand.u32 2147483647, %v3520
    %v3537 = vstv %s3435
    %v3538 = vmul.f32 %v3537, %v3521
    %v3539 = vmul.f32 %v3537, %v3522
    %v3540 = vmul.f32 %v3537, %v3523
    %v3541 = vmul.f32 %v3537, %v3524
    %v3542 = vmul.f32 %v3537, %v3525
    %v3543 = vmul.f32 %v3537, %v3526
    %v3544 = vmul.f32 %v3537, %v3527
    %v3545 = vmul.f32 %v3537, %v3528
    %v3546 = vmul.f32 %v3537, %v3529
    %v3547 = vmul.f32 %v3537, %v3530
    %v3548 = vmul.f32 %v3537, %v3531
    %v3549 = vmul.f32 %v3537, %v3532
    %v3550 = vmul.f32 %v3537, %v3533
    %v3551 = vmul.f32 %v3537, %v3534
    %v3552 = vmul.f32 %v3537, %v3535
    %v3553 = vmul.f32 %v3537, %v3536
    %v3554 = vadd.f32 %v3419, %v3538
    %v3555 = vadd.f32 %v3420, %v3539
    %v3556 = vadd.f32 %v3421, %v3540
    %v3557 = vadd.f32 %v3422, %v3541
    %v3558 = vadd.f32 %v3423, %v3542
    %v3559 = vadd.f32 %v3424, %v3543
    %v3560 = vadd.f32 %v3425, %v3544
    %v3561 = vadd.f32 %v3426, %v3545
    %v3562 = vadd.f32 %v3427, %v3546
    %v3563 = vadd.f32 %v3428, %v3547
    %v3564 = vadd.f32 %v3429, %v3548
    %v3565 = vadd.f32 %v3430, %v3549
    %v3566 = vadd.f32 %v3431, %v3550
    %v3567 = vadd.f32 %v3432, %v3551
    %v3568 = vadd.f32 %v3433, %v3552
    %v3569 = vadd.f32 %v3434, %v3553
    %s3570 = sld [smem:[#allocation2 + $0x1a]]
    %v3571 = vld [vmem:[%s2 + $0x1a] sm:$0x1]
    %3572 = vset.pattern.permute.xlu0 26
    %3573 = vperm.xlu0 %3572, %v28
    %v3574 = vpop.permute.xlu0 %3573
    %3576 = vset.pattern.permute.xlu0 26
    %3577 = vperm.xlu0 %3576, %v29
    %v3578 = vpop.permute.xlu0 %3577
    %3580 = vset.pattern.permute.xlu0 26
    %3581 = vperm.xlu0 %3580, %v30
    %v3582 = vpop.permute.xlu0 %3581
    %3584 = vset.pattern.permute.xlu0 26
    %3585 = vperm.xlu0 %3584, %v31
    %v3586 = vpop.permute.xlu0 %3585
    %3588 = vset.pattern.permute.xlu0 26
    %3589 = vperm.xlu0 %3588, %v32
    %v3590 = vpop.permute.xlu0 %3589
    %3592 = vset.pattern.permute.xlu0 26
    %3593 = vperm.xlu0 %3592, %v33
    %v3594 = vpop.permute.xlu0 %3593
    %3596 = vset.pattern.permute.xlu0 26
    %3597 = vperm.xlu0 %3596, %v34
    %v3598 = vpop.permute.xlu0 %3597
    %3600 = vset.pattern.permute.xlu0 26
    %3601 = vperm.xlu0 %3600, %v35
    %v3602 = vpop.permute.xlu0 %3601
    %3604 = vset.pattern.permute.xlu0 26
    %3605 = vperm.xlu0 %3604, %v36
    %v3606 = vpop.permute.xlu0 %3605
    %3608 = vset.pattern.permute.xlu0 26
    %3609 = vperm.xlu0 %3608, %v37
    %v3610 = vpop.permute.xlu0 %3609
    %3612 = vset.pattern.permute.xlu0 26
    %3613 = vperm.xlu0 %3612, %v38
    %v3614 = vpop.permute.xlu0 %3613
    %3616 = vset.pattern.permute.xlu0 26
    %3617 = vperm.xlu0 %3616, %v39
    %v3618 = vpop.permute.xlu0 %3617
    %3620 = vset.pattern.permute.xlu0 26
    %3621 = vperm.xlu0 %3620, %v40
    %v3622 = vpop.permute.xlu0 %3621
    %3624 = vset.pattern.permute.xlu0 26
    %3625 = vperm.xlu0 %3624, %v41
    %v3626 = vpop.permute.xlu0 %3625
    %3628 = vset.pattern.permute.xlu0 26
    %3629 = vperm.xlu0 %3628, %v42
    %v3630 = vpop.permute.xlu0 %3629
    %3632 = vset.pattern.permute.xlu0 26
    %3633 = vperm.xlu0 %3632, %v43
    %v3634 = vpop.permute.xlu0 %3633
    %v3636 = vlaneseq
    %v3637 = vshrl.u32 %v3636, 7
    %v3638 = vsub.s32 0, %v3637
    %v3639 = vrot.slane %v3571, %v3638
    %v3640 = vsub.f32 %v3574, %v3639
    %v3641 = vsub.f32 %v3578, %v3639
    %v3642 = vsub.f32 %v3582, %v3639
    %v3643 = vsub.f32 %v3586, %v3639
    %v3644 = vsub.f32 %v3590, %v3639
    %v3645 = vsub.f32 %v3594, %v3639
    %v3646 = vsub.f32 %v3598, %v3639
    %v3647 = vsub.f32 %v3602, %v3639
    %v3648 = vsub.f32 %v3606, %v3639
    %v3649 = vsub.f32 %v3610, %v3639
    %v3650 = vsub.f32 %v3614, %v3639
    %v3651 = vsub.f32 %v3618, %v3639
    %v3652 = vsub.f32 %v3622, %v3639
    %v3653 = vsub.f32 %v3626, %v3639
    %v3654 = vsub.f32 %v3630, %v3639
    %v3655 = vsub.f32 %v3634, %v3639
    %v3656 = vand.u32 2147483647, %v3640
    %v3657 = vand.u32 2147483647, %v3641
    %v3658 = vand.u32 2147483647, %v3642
    %v3659 = vand.u32 2147483647, %v3643
    %v3660 = vand.u32 2147483647, %v3644
    %v3661 = vand.u32 2147483647, %v3645
    %v3662 = vand.u32 2147483647, %v3646
    %v3663 = vand.u32 2147483647, %v3647
    %v3664 = vand.u32 2147483647, %v3648
    %v3665 = vand.u32 2147483647, %v3649
    %v3666 = vand.u32 2147483647, %v3650
    %v3667 = vand.u32 2147483647, %v3651
    %v3668 = vand.u32 2147483647, %v3652
    %v3669 = vand.u32 2147483647, %v3653
    %v3670 = vand.u32 2147483647, %v3654
    %v3671 = vand.u32 2147483647, %v3655
    %v3672 = vstv %s3570
    %v3673 = vmul.f32 %v3672, %v3656
    %v3674 = vmul.f32 %v3672, %v3657
    %v3675 = vmul.f32 %v3672, %v3658
    %v3676 = vmul.f32 %v3672, %v3659
    %v3677 = vmul.f32 %v3672, %v3660
    %v3678 = vmul.f32 %v3672, %v3661
    %v3679 = vmul.f32 %v3672, %v3662
    %v3680 = vmul.f32 %v3672, %v3663
    %v3681 = vmul.f32 %v3672, %v3664
    %v3682 = vmul.f32 %v3672, %v3665
    %v3683 = vmul.f32 %v3672, %v3666
    %v3684 = vmul.f32 %v3672, %v3667
    %v3685 = vmul.f32 %v3672, %v3668
    %v3686 = vmul.f32 %v3672, %v3669
    %v3687 = vmul.f32 %v3672, %v3670
    %v3688 = vmul.f32 %v3672, %v3671
    %v3689 = vadd.f32 %v3554, %v3673
    %v3690 = vadd.f32 %v3555, %v3674
    %v3691 = vadd.f32 %v3556, %v3675
    %v3692 = vadd.f32 %v3557, %v3676
    %v3693 = vadd.f32 %v3558, %v3677
    %v3694 = vadd.f32 %v3559, %v3678
    %v3695 = vadd.f32 %v3560, %v3679
    %v3696 = vadd.f32 %v3561, %v3680
    %v3697 = vadd.f32 %v3562, %v3681
    %v3698 = vadd.f32 %v3563, %v3682
    %v3699 = vadd.f32 %v3564, %v3683
    %v3700 = vadd.f32 %v3565, %v3684
    %v3701 = vadd.f32 %v3566, %v3685
    %v3702 = vadd.f32 %v3567, %v3686
    %v3703 = vadd.f32 %v3568, %v3687
    %v3704 = vadd.f32 %v3569, %v3688
    %s3705 = sld [smem:[#allocation2 + $0x1b]]
    %v3706 = vld [vmem:[%s2 + $0x1b] sm:$0x1]
    %3707 = vset.pattern.permute.xlu0 27
    %3708 = vperm.xlu0 %3707, %v28
    %v3709 = vpop.permute.xlu0 %3708
    %3711 = vset.pattern.permute.xlu0 27
    %3712 = vperm.xlu0 %3711, %v29
    %v3713 = vpop.permute.xlu0 %3712
    %3715 = vset.pattern.permute.xlu0 27
    %3716 = vperm.xlu0 %3715, %v30
    %v3717 = vpop.permute.xlu0 %3716
    %3719 = vset.pattern.permute.xlu0 27
    %3720 = vperm.xlu0 %3719, %v31
    %v3721 = vpop.permute.xlu0 %3720
    %3723 = vset.pattern.permute.xlu0 27
    %3724 = vperm.xlu0 %3723, %v32
    %v3725 = vpop.permute.xlu0 %3724
    %3727 = vset.pattern.permute.xlu0 27
    %3728 = vperm.xlu0 %3727, %v33
    %v3729 = vpop.permute.xlu0 %3728
    %3731 = vset.pattern.permute.xlu0 27
    %3732 = vperm.xlu0 %3731, %v34
    %v3733 = vpop.permute.xlu0 %3732
    %3735 = vset.pattern.permute.xlu0 27
    %3736 = vperm.xlu0 %3735, %v35
    %v3737 = vpop.permute.xlu0 %3736
    %3739 = vset.pattern.permute.xlu0 27
    %3740 = vperm.xlu0 %3739, %v36
    %v3741 = vpop.permute.xlu0 %3740
    %3743 = vset.pattern.permute.xlu0 27
    %3744 = vperm.xlu0 %3743, %v37
    %v3745 = vpop.permute.xlu0 %3744
    %3747 = vset.pattern.permute.xlu0 27
    %3748 = vperm.xlu0 %3747, %v38
    %v3749 = vpop.permute.xlu0 %3748
    %3751 = vset.pattern.permute.xlu0 27
    %3752 = vperm.xlu0 %3751, %v39
    %v3753 = vpop.permute.xlu0 %3752
    %3755 = vset.pattern.permute.xlu0 27
    %3756 = vperm.xlu0 %3755, %v40
    %v3757 = vpop.permute.xlu0 %3756
    %3759 = vset.pattern.permute.xlu0 27
    %3760 = vperm.xlu0 %3759, %v41
    %v3761 = vpop.permute.xlu0 %3760
    %3763 = vset.pattern.permute.xlu0 27
    %3764 = vperm.xlu0 %3763, %v42
    %v3765 = vpop.permute.xlu0 %3764
    %3767 = vset.pattern.permute.xlu0 27
    %3768 = vperm.xlu0 %3767, %v43
    %v3769 = vpop.permute.xlu0 %3768
    %v3771 = vlaneseq
    %v3772 = vshrl.u32 %v3771, 7
    %v3773 = vsub.s32 0, %v3772
    %v3774 = vrot.slane %v3706, %v3773
    %v3775 = vsub.f32 %v3709, %v3774
    %v3776 = vsub.f32 %v3713, %v3774
    %v3777 = vsub.f32 %v3717, %v3774
    %v3778 = vsub.f32 %v3721, %v3774
    %v3779 = vsub.f32 %v3725, %v3774
    %v3780 = vsub.f32 %v3729, %v3774
    %v3781 = vsub.f32 %v3733, %v3774
    %v3782 = vsub.f32 %v3737, %v3774
    %v3783 = vsub.f32 %v3741, %v3774
    %v3784 = vsub.f32 %v3745, %v3774
    %v3785 = vsub.f32 %v3749, %v3774
    %v3786 = vsub.f32 %v3753, %v3774
    %v3787 = vsub.f32 %v3757, %v3774
    %v3788 = vsub.f32 %v3761, %v3774
    %v3789 = vsub.f32 %v3765, %v3774
    %v3790 = vsub.f32 %v3769, %v3774
    %v3791 = vand.u32 2147483647, %v3775
    %v3792 = vand.u32 2147483647, %v3776
    %v3793 = vand.u32 2147483647, %v3777
    %v3794 = vand.u32 2147483647, %v3778
    %v3795 = vand.u32 2147483647, %v3779
    %v3796 = vand.u32 2147483647, %v3780
    %v3797 = vand.u32 2147483647, %v3781
    %v3798 = vand.u32 2147483647, %v3782
    %v3799 = vand.u32 2147483647, %v3783
    %v3800 = vand.u32 2147483647, %v3784
    %v3801 = vand.u32 2147483647, %v3785
    %v3802 = vand.u32 2147483647, %v3786
    %v3803 = vand.u32 2147483647, %v3787
    %v3804 = vand.u32 2147483647, %v3788
    %v3805 = vand.u32 2147483647, %v3789
    %v3806 = vand.u32 2147483647, %v3790
    %v3807 = vstv %s3705
    %v3808 = vmul.f32 %v3807, %v3791
    %v3809 = vmul.f32 %v3807, %v3792
    %v3810 = vmul.f32 %v3807, %v3793
    %v3811 = vmul.f32 %v3807, %v3794
    %v3812 = vmul.f32 %v3807, %v3795
    %v3813 = vmul.f32 %v3807, %v3796
    %v3814 = vmul.f32 %v3807, %v3797
    %v3815 = vmul.f32 %v3807, %v3798
    %v3816 = vmul.f32 %v3807, %v3799
    %v3817 = vmul.f32 %v3807, %v3800
    %v3818 = vmul.f32 %v3807, %v3801
    %v3819 = vmul.f32 %v3807, %v3802
    %v3820 = vmul.f32 %v3807, %v3803
    %v3821 = vmul.f32 %v3807, %v3804
    %v3822 = vmul.f32 %v3807, %v3805
    %v3823 = vmul.f32 %v3807, %v3806
    %v3824 = vadd.f32 %v3689, %v3808
    %v3825 = vadd.f32 %v3690, %v3809
    %v3826 = vadd.f32 %v3691, %v3810
    %v3827 = vadd.f32 %v3692, %v3811
    %v3828 = vadd.f32 %v3693, %v3812
    %v3829 = vadd.f32 %v3694, %v3813
    %v3830 = vadd.f32 %v3695, %v3814
    %v3831 = vadd.f32 %v3696, %v3815
    %v3832 = vadd.f32 %v3697, %v3816
    %v3833 = vadd.f32 %v3698, %v3817
    %v3834 = vadd.f32 %v3699, %v3818
    %v3835 = vadd.f32 %v3700, %v3819
    %v3836 = vadd.f32 %v3701, %v3820
    %v3837 = vadd.f32 %v3702, %v3821
    %v3838 = vadd.f32 %v3703, %v3822
    %v3839 = vadd.f32 %v3704, %v3823
    %s3840 = sld [smem:[#allocation2 + $0x1c]]
    %v3841 = vld [vmem:[%s2 + $0x1c] sm:$0x1]
    %3842 = vset.pattern.permute.xlu0 28
    %3843 = vperm.xlu0 %3842, %v28
    %v3844 = vpop.permute.xlu0 %3843
    %3846 = vset.pattern.permute.xlu0 28
    %3847 = vperm.xlu0 %3846, %v29
    %v3848 = vpop.permute.xlu0 %3847
    %3850 = vset.pattern.permute.xlu0 28
    %3851 = vperm.xlu0 %3850, %v30
    %v3852 = vpop.permute.xlu0 %3851
    %3854 = vset.pattern.permute.xlu0 28
    %3855 = vperm.xlu0 %3854, %v31
    %v3856 = vpop.permute.xlu0 %3855
    %3858 = vset.pattern.permute.xlu0 28
    %3859 = vperm.xlu0 %3858, %v32
    %v3860 = vpop.permute.xlu0 %3859
    %3862 = vset.pattern.permute.xlu0 28
    %3863 = vperm.xlu0 %3862, %v33
    %v3864 = vpop.permute.xlu0 %3863
    %3866 = vset.pattern.permute.xlu0 28
    %3867 = vperm.xlu0 %3866, %v34
    %v3868 = vpop.permute.xlu0 %3867
    %3870 = vset.pattern.permute.xlu0 28
    %3871 = vperm.xlu0 %3870, %v35
    %v3872 = vpop.permute.xlu0 %3871
    %3874 = vset.pattern.permute.xlu0 28
    %3875 = vperm.xlu0 %3874, %v36
    %v3876 = vpop.permute.xlu0 %3875
    %3878 = vset.pattern.permute.xlu0 28
    %3879 = vperm.xlu0 %3878, %v37
    %v3880 = vpop.permute.xlu0 %3879
    %3882 = vset.pattern.permute.xlu0 28
    %3883 = vperm.xlu0 %3882, %v38
    %v3884 = vpop.permute.xlu0 %3883
    %3886 = vset.pattern.permute.xlu0 28
    %3887 = vperm.xlu0 %3886, %v39
    %v3888 = vpop.permute.xlu0 %3887
    %3890 = vset.pattern.permute.xlu0 28
    %3891 = vperm.xlu0 %3890, %v40
    %v3892 = vpop.permute.xlu0 %3891
    %3894 = vset.pattern.permute.xlu0 28
    %3895 = vperm.xlu0 %3894, %v41
    %v3896 = vpop.permute.xlu0 %3895
    %3898 = vset.pattern.permute.xlu0 28
    %3899 = vperm.xlu0 %3898, %v42
    %v3900 = vpop.permute.xlu0 %3899
    %3902 = vset.pattern.permute.xlu0 28
    %3903 = vperm.xlu0 %3902, %v43
    %v3904 = vpop.permute.xlu0 %3903
    %v3906 = vlaneseq
    %v3907 = vshrl.u32 %v3906, 7
    %v3908 = vsub.s32 0, %v3907
    %v3909 = vrot.slane %v3841, %v3908
    %v3910 = vsub.f32 %v3844, %v3909
    %v3911 = vsub.f32 %v3848, %v3909
    %v3912 = vsub.f32 %v3852, %v3909
    %v3913 = vsub.f32 %v3856, %v3909
    %v3914 = vsub.f32 %v3860, %v3909
    %v3915 = vsub.f32 %v3864, %v3909
    %v3916 = vsub.f32 %v3868, %v3909
    %v3917 = vsub.f32 %v3872, %v3909
    %v3918 = vsub.f32 %v3876, %v3909
    %v3919 = vsub.f32 %v3880, %v3909
    %v3920 = vsub.f32 %v3884, %v3909
    %v3921 = vsub.f32 %v3888, %v3909
    %v3922 = vsub.f32 %v3892, %v3909
    %v3923 = vsub.f32 %v3896, %v3909
    %v3924 = vsub.f32 %v3900, %v3909
    %v3925 = vsub.f32 %v3904, %v3909
    %v3926 = vand.u32 2147483647, %v3910
    %v3927 = vand.u32 2147483647, %v3911
    %v3928 = vand.u32 2147483647, %v3912
    %v3929 = vand.u32 2147483647, %v3913
    %v3930 = vand.u32 2147483647, %v3914
    %v3931 = vand.u32 2147483647, %v3915
    %v3932 = vand.u32 2147483647, %v3916
    %v3933 = vand.u32 2147483647, %v3917
    %v3934 = vand.u32 2147483647, %v3918
    %v3935 = vand.u32 2147483647, %v3919
    %v3936 = vand.u32 2147483647, %v3920
    %v3937 = vand.u32 2147483647, %v3921
    %v3938 = vand.u32 2147483647, %v3922
    %v3939 = vand.u32 2147483647, %v3923
    %v3940 = vand.u32 2147483647, %v3924
    %v3941 = vand.u32 2147483647, %v3925
    %v3942 = vstv %s3840
    %v3943 = vmul.f32 %v3942, %v3926
    %v3944 = vmul.f32 %v3942, %v3927
    %v3945 = vmul.f32 %v3942, %v3928
    %v3946 = vmul.f32 %v3942, %v3929
    %v3947 = vmul.f32 %v3942, %v3930
    %v3948 = vmul.f32 %v3942, %v3931
    %v3949 = vmul.f32 %v3942, %v3932
    %v3950 = vmul.f32 %v3942, %v3933
    %v3951 = vmul.f32 %v3942, %v3934
    %v3952 = vmul.f32 %v3942, %v3935
    %v3953 = vmul.f32 %v3942, %v3936
    %v3954 = vmul.f32 %v3942, %v3937
    %v3955 = vmul.f32 %v3942, %v3938
    %v3956 = vmul.f32 %v3942, %v3939
    %v3957 = vmul.f32 %v3942, %v3940
    %v3958 = vmul.f32 %v3942, %v3941
    %v3959 = vadd.f32 %v3824, %v3943
    %v3960 = vadd.f32 %v3825, %v3944
    %v3961 = vadd.f32 %v3826, %v3945
    %v3962 = vadd.f32 %v3827, %v3946
    %v3963 = vadd.f32 %v3828, %v3947
    %v3964 = vadd.f32 %v3829, %v3948
    %v3965 = vadd.f32 %v3830, %v3949
    %v3966 = vadd.f32 %v3831, %v3950
    %v3967 = vadd.f32 %v3832, %v3951
    %v3968 = vadd.f32 %v3833, %v3952
    %v3969 = vadd.f32 %v3834, %v3953
    %v3970 = vadd.f32 %v3835, %v3954
    %v3971 = vadd.f32 %v3836, %v3955
    %v3972 = vadd.f32 %v3837, %v3956
    %v3973 = vadd.f32 %v3838, %v3957
    %v3974 = vadd.f32 %v3839, %v3958
    %s3975 = sld [smem:[#allocation2 + $0x1d]]
    %v3976 = vld [vmem:[%s2 + $0x1d] sm:$0x1]
    %3977 = vset.pattern.permute.xlu0 29
    %3978 = vperm.xlu0 %3977, %v28
    %v3979 = vpop.permute.xlu0 %3978
    %3981 = vset.pattern.permute.xlu0 29
    %3982 = vperm.xlu0 %3981, %v29
    %v3983 = vpop.permute.xlu0 %3982
    %3985 = vset.pattern.permute.xlu0 29
    %3986 = vperm.xlu0 %3985, %v30
    %v3987 = vpop.permute.xlu0 %3986
    %3989 = vset.pattern.permute.xlu0 29
    %3990 = vperm.xlu0 %3989, %v31
    %v3991 = vpop.permute.xlu0 %3990
    %3993 = vset.pattern.permute.xlu0 29
    %3994 = vperm.xlu0 %3993, %v32
    %v3995 = vpop.permute.xlu0 %3994
    %3997 = vset.pattern.permute.xlu0 29
    %3998 = vperm.xlu0 %3997, %v33
    %v3999 = vpop.permute.xlu0 %3998
    %4001 = vset.pattern.permute.xlu0 29
    %4002 = vperm.xlu0 %4001, %v34
    %v4003 = vpop.permute.xlu0 %4002
    %4005 = vset.pattern.permute.xlu0 29
    %4006 = vperm.xlu0 %4005, %v35
    %v4007 = vpop.permute.xlu0 %4006
    %4009 = vset.pattern.permute.xlu0 29
    %4010 = vperm.xlu0 %4009, %v36
    %v4011 = vpop.permute.xlu0 %4010
    %4013 = vset.pattern.permute.xlu0 29
    %4014 = vperm.xlu0 %4013, %v37
    %v4015 = vpop.permute.xlu0 %4014
    %4017 = vset.pattern.permute.xlu0 29
    %4018 = vperm.xlu0 %4017, %v38
    %v4019 = vpop.permute.xlu0 %4018
    %4021 = vset.pattern.permute.xlu0 29
    %4022 = vperm.xlu0 %4021, %v39
    %v4023 = vpop.permute.xlu0 %4022
    %4025 = vset.pattern.permute.xlu0 29
    %4026 = vperm.xlu0 %4025, %v40
    %v4027 = vpop.permute.xlu0 %4026
    %4029 = vset.pattern.permute.xlu0 29
    %4030 = vperm.xlu0 %4029, %v41
    %v4031 = vpop.permute.xlu0 %4030
    %4033 = vset.pattern.permute.xlu0 29
    %4034 = vperm.xlu0 %4033, %v42
    %v4035 = vpop.permute.xlu0 %4034
    %4037 = vset.pattern.permute.xlu0 29
    %4038 = vperm.xlu0 %4037, %v43
    %v4039 = vpop.permute.xlu0 %4038
    %v4041 = vlaneseq
    %v4042 = vshrl.u32 %v4041, 7
    %v4043 = vsub.s32 0, %v4042
    %v4044 = vrot.slane %v3976, %v4043
    %v4045 = vsub.f32 %v3979, %v4044
    %v4046 = vsub.f32 %v3983, %v4044
    %v4047 = vsub.f32 %v3987, %v4044
    %v4048 = vsub.f32 %v3991, %v4044
    %v4049 = vsub.f32 %v3995, %v4044
    %v4050 = vsub.f32 %v3999, %v4044
    %v4051 = vsub.f32 %v4003, %v4044
    %v4052 = vsub.f32 %v4007, %v4044
    %v4053 = vsub.f32 %v4011, %v4044
    %v4054 = vsub.f32 %v4015, %v4044
    %v4055 = vsub.f32 %v4019, %v4044
    %v4056 = vsub.f32 %v4023, %v4044
    %v4057 = vsub.f32 %v4027, %v4044
    %v4058 = vsub.f32 %v4031, %v4044
    %v4059 = vsub.f32 %v4035, %v4044
    %v4060 = vsub.f32 %v4039, %v4044
    %v4061 = vand.u32 2147483647, %v4045
    %v4062 = vand.u32 2147483647, %v4046
    %v4063 = vand.u32 2147483647, %v4047
    %v4064 = vand.u32 2147483647, %v4048
    %v4065 = vand.u32 2147483647, %v4049
    %v4066 = vand.u32 2147483647, %v4050
    %v4067 = vand.u32 2147483647, %v4051
    %v4068 = vand.u32 2147483647, %v4052
    %v4069 = vand.u32 2147483647, %v4053
    %v4070 = vand.u32 2147483647, %v4054
    %v4071 = vand.u32 2147483647, %v4055
    %v4072 = vand.u32 2147483647, %v4056
    %v4073 = vand.u32 2147483647, %v4057
    %v4074 = vand.u32 2147483647, %v4058
    %v4075 = vand.u32 2147483647, %v4059
    %v4076 = vand.u32 2147483647, %v4060
    %v4077 = vstv %s3975
    %v4078 = vmul.f32 %v4077, %v4061
    %v4079 = vmul.f32 %v4077, %v4062
    %v4080 = vmul.f32 %v4077, %v4063
    %v4081 = vmul.f32 %v4077, %v4064
    %v4082 = vmul.f32 %v4077, %v4065
    %v4083 = vmul.f32 %v4077, %v4066
    %v4084 = vmul.f32 %v4077, %v4067
    %v4085 = vmul.f32 %v4077, %v4068
    %v4086 = vmul.f32 %v4077, %v4069
    %v4087 = vmul.f32 %v4077, %v4070
    %v4088 = vmul.f32 %v4077, %v4071
    %v4089 = vmul.f32 %v4077, %v4072
    %v4090 = vmul.f32 %v4077, %v4073
    %v4091 = vmul.f32 %v4077, %v4074
    %v4092 = vmul.f32 %v4077, %v4075
    %v4093 = vmul.f32 %v4077, %v4076
    %v4094 = vadd.f32 %v3959, %v4078
    %v4095 = vadd.f32 %v3960, %v4079
    %v4096 = vadd.f32 %v3961, %v4080
    %v4097 = vadd.f32 %v3962, %v4081
    %v4098 = vadd.f32 %v3963, %v4082
    %v4099 = vadd.f32 %v3964, %v4083
    %v4100 = vadd.f32 %v3965, %v4084
    %v4101 = vadd.f32 %v3966, %v4085
    %v4102 = vadd.f32 %v3967, %v4086
    %v4103 = vadd.f32 %v3968, %v4087
    %v4104 = vadd.f32 %v3969, %v4088
    %v4105 = vadd.f32 %v3970, %v4089
    %v4106 = vadd.f32 %v3971, %v4090
    %v4107 = vadd.f32 %v3972, %v4091
    %v4108 = vadd.f32 %v3973, %v4092
    %v4109 = vadd.f32 %v3974, %v4093
    %s4110 = sld [smem:[#allocation2 + $0x1e]]
    %v4111 = vld [vmem:[%s2 + $0x1e] sm:$0x1]
    %4112 = vset.pattern.permute.xlu0 30
    %4113 = vperm.xlu0 %4112, %v28
    %v4114 = vpop.permute.xlu0 %4113
    %4116 = vset.pattern.permute.xlu0 30
    %4117 = vperm.xlu0 %4116, %v29
    %v4118 = vpop.permute.xlu0 %4117
    %4120 = vset.pattern.permute.xlu0 30
    %4121 = vperm.xlu0 %4120, %v30
    %v4122 = vpop.permute.xlu0 %4121
    %4124 = vset.pattern.permute.xlu0 30
    %4125 = vperm.xlu0 %4124, %v31
    %v4126 = vpop.permute.xlu0 %4125
    %4128 = vset.pattern.permute.xlu0 30
    %4129 = vperm.xlu0 %4128, %v32
    %v4130 = vpop.permute.xlu0 %4129
    %4132 = vset.pattern.permute.xlu0 30
    %4133 = vperm.xlu0 %4132, %v33
    %v4134 = vpop.permute.xlu0 %4133
    %4136 = vset.pattern.permute.xlu0 30
    %4137 = vperm.xlu0 %4136, %v34
    %v4138 = vpop.permute.xlu0 %4137
    %4140 = vset.pattern.permute.xlu0 30
    %4141 = vperm.xlu0 %4140, %v35
    %v4142 = vpop.permute.xlu0 %4141
    %4144 = vset.pattern.permute.xlu0 30
    %4145 = vperm.xlu0 %4144, %v36
    %v4146 = vpop.permute.xlu0 %4145
    %4148 = vset.pattern.permute.xlu0 30
    %4149 = vperm.xlu0 %4148, %v37
    %v4150 = vpop.permute.xlu0 %4149
    %4152 = vset.pattern.permute.xlu0 30
    %4153 = vperm.xlu0 %4152, %v38
    %v4154 = vpop.permute.xlu0 %4153
    %4156 = vset.pattern.permute.xlu0 30
    %4157 = vperm.xlu0 %4156, %v39
    %v4158 = vpop.permute.xlu0 %4157
    %4160 = vset.pattern.permute.xlu0 30
    %4161 = vperm.xlu0 %4160, %v40
    %v4162 = vpop.permute.xlu0 %4161
    %4164 = vset.pattern.permute.xlu0 30
    %4165 = vperm.xlu0 %4164, %v41
    %v4166 = vpop.permute.xlu0 %4165
    %4168 = vset.pattern.permute.xlu0 30
    %4169 = vperm.xlu0 %4168, %v42
    %v4170 = vpop.permute.xlu0 %4169
    %4172 = vset.pattern.permute.xlu0 30
    %4173 = vperm.xlu0 %4172, %v43
    %v4174 = vpop.permute.xlu0 %4173
    %v4176 = vlaneseq
    %v4177 = vshrl.u32 %v4176, 7
    %v4178 = vsub.s32 0, %v4177
    %v4179 = vrot.slane %v4111, %v4178
    %v4180 = vsub.f32 %v4114, %v4179
    %v4181 = vsub.f32 %v4118, %v4179
    %v4182 = vsub.f32 %v4122, %v4179
    %v4183 = vsub.f32 %v4126, %v4179
    %v4184 = vsub.f32 %v4130, %v4179
    %v4185 = vsub.f32 %v4134, %v4179
    %v4186 = vsub.f32 %v4138, %v4179
    %v4187 = vsub.f32 %v4142, %v4179
    %v4188 = vsub.f32 %v4146, %v4179
    %v4189 = vsub.f32 %v4150, %v4179
    %v4190 = vsub.f32 %v4154, %v4179
    %v4191 = vsub.f32 %v4158, %v4179
    %v4192 = vsub.f32 %v4162, %v4179
    %v4193 = vsub.f32 %v4166, %v4179
    %v4194 = vsub.f32 %v4170, %v4179
    %v4195 = vsub.f32 %v4174, %v4179
    %v4196 = vand.u32 2147483647, %v4180
    %v4197 = vand.u32 2147483647, %v4181
    %v4198 = vand.u32 2147483647, %v4182
    %v4199 = vand.u32 2147483647, %v4183
    %v4200 = vand.u32 2147483647, %v4184
    %v4201 = vand.u32 2147483647, %v4185
    %v4202 = vand.u32 2147483647, %v4186
    %v4203 = vand.u32 2147483647, %v4187
    %v4204 = vand.u32 2147483647, %v4188
    %v4205 = vand.u32 2147483647, %v4189
    %v4206 = vand.u32 2147483647, %v4190
    %v4207 = vand.u32 2147483647, %v4191
    %v4208 = vand.u32 2147483647, %v4192
    %v4209 = vand.u32 2147483647, %v4193
    %v4210 = vand.u32 2147483647, %v4194
    %v4211 = vand.u32 2147483647, %v4195
    %v4212 = vstv %s4110
    %v4213 = vmul.f32 %v4212, %v4196
    %v4214 = vmul.f32 %v4212, %v4197
    %v4215 = vmul.f32 %v4212, %v4198
    %v4216 = vmul.f32 %v4212, %v4199
    %v4217 = vmul.f32 %v4212, %v4200
    %v4218 = vmul.f32 %v4212, %v4201
    %v4219 = vmul.f32 %v4212, %v4202
    %v4220 = vmul.f32 %v4212, %v4203
    %v4221 = vmul.f32 %v4212, %v4204
    %v4222 = vmul.f32 %v4212, %v4205
    %v4223 = vmul.f32 %v4212, %v4206
    %v4224 = vmul.f32 %v4212, %v4207
    %v4225 = vmul.f32 %v4212, %v4208
    %v4226 = vmul.f32 %v4212, %v4209
    %v4227 = vmul.f32 %v4212, %v4210
    %v4228 = vmul.f32 %v4212, %v4211
    %v4229 = vadd.f32 %v4094, %v4213
    %v4230 = vadd.f32 %v4095, %v4214
    %v4231 = vadd.f32 %v4096, %v4215
    %v4232 = vadd.f32 %v4097, %v4216
    %v4233 = vadd.f32 %v4098, %v4217
    %v4234 = vadd.f32 %v4099, %v4218
    %v4235 = vadd.f32 %v4100, %v4219
    %v4236 = vadd.f32 %v4101, %v4220
    %v4237 = vadd.f32 %v4102, %v4221
    %v4238 = vadd.f32 %v4103, %v4222
    %v4239 = vadd.f32 %v4104, %v4223
    %v4240 = vadd.f32 %v4105, %v4224
    %v4241 = vadd.f32 %v4106, %v4225
    %v4242 = vadd.f32 %v4107, %v4226
    %v4243 = vadd.f32 %v4108, %v4227
    %v4244 = vadd.f32 %v4109, %v4228
    %s4245 = sld [smem:[#allocation2 + $0x1f]]
    %v4246 = vld [vmem:[%s2 + $0x1f] sm:$0x1]
    %4247 = vset.pattern.permute.xlu0 31
    %4248 = vperm.xlu0 %4247, %v28
    %v4249 = vpop.permute.xlu0 %4248
    %4251 = vset.pattern.permute.xlu0 31
    %4252 = vperm.xlu0 %4251, %v29
    %v4253 = vpop.permute.xlu0 %4252
    %4255 = vset.pattern.permute.xlu0 31
    %4256 = vperm.xlu0 %4255, %v30
    %v4257 = vpop.permute.xlu0 %4256
    %4259 = vset.pattern.permute.xlu0 31
    %4260 = vperm.xlu0 %4259, %v31
    %v4261 = vpop.permute.xlu0 %4260
    %4263 = vset.pattern.permute.xlu0 31
    %4264 = vperm.xlu0 %4263, %v32
    %v4265 = vpop.permute.xlu0 %4264
    %4267 = vset.pattern.permute.xlu0 31
    %4268 = vperm.xlu0 %4267, %v33
    %v4269 = vpop.permute.xlu0 %4268
    %4271 = vset.pattern.permute.xlu0 31
    %4272 = vperm.xlu0 %4271, %v34
    %v4273 = vpop.permute.xlu0 %4272
    %4275 = vset.pattern.permute.xlu0 31
    %4276 = vperm.xlu0 %4275, %v35
    %v4277 = vpop.permute.xlu0 %4276
    %4279 = vset.pattern.permute.xlu0 31
    %4280 = vperm.xlu0 %4279, %v36
    %v4281 = vpop.permute.xlu0 %4280
    %4283 = vset.pattern.permute.xlu0 31
    %4284 = vperm.xlu0 %4283, %v37
    %v4285 = vpop.permute.xlu0 %4284
    %4287 = vset.pattern.permute.xlu0 31
    %4288 = vperm.xlu0 %4287, %v38
    %v4289 = vpop.permute.xlu0 %4288
    %4291 = vset.pattern.permute.xlu0 31
    %4292 = vperm.xlu0 %4291, %v39
    %v4293 = vpop.permute.xlu0 %4292
    %4295 = vset.pattern.permute.xlu0 31
    %4296 = vperm.xlu0 %4295, %v40
    %v4297 = vpop.permute.xlu0 %4296
    %4299 = vset.pattern.permute.xlu0 31
    %4300 = vperm.xlu0 %4299, %v41
    %v4301 = vpop.permute.xlu0 %4300
    %4303 = vset.pattern.permute.xlu0 31
    %4304 = vperm.xlu0 %4303, %v42
    %v4305 = vpop.permute.xlu0 %4304
    %4307 = vset.pattern.permute.xlu0 31
    %4308 = vperm.xlu0 %4307, %v43
    %v4309 = vpop.permute.xlu0 %4308
    %v4311 = vlaneseq
    %v4312 = vshrl.u32 %v4311, 7
    %v4313 = vsub.s32 0, %v4312
    %v4314 = vrot.slane %v4246, %v4313
    %v4315 = vsub.f32 %v4249, %v4314
    %v4316 = vsub.f32 %v4253, %v4314
    %v4317 = vsub.f32 %v4257, %v4314
    %v4318 = vsub.f32 %v4261, %v4314
    %v4319 = vsub.f32 %v4265, %v4314
    %v4320 = vsub.f32 %v4269, %v4314
    %v4321 = vsub.f32 %v4273, %v4314
    %v4322 = vsub.f32 %v4277, %v4314
    %v4323 = vsub.f32 %v4281, %v4314
    %v4324 = vsub.f32 %v4285, %v4314
    %v4325 = vsub.f32 %v4289, %v4314
    %v4326 = vsub.f32 %v4293, %v4314
    %v4327 = vsub.f32 %v4297, %v4314
    %v4328 = vsub.f32 %v4301, %v4314
    %v4329 = vsub.f32 %v4305, %v4314
    %v4330 = vsub.f32 %v4309, %v4314
    %v4331 = vand.u32 2147483647, %v4315
    %v4332 = vand.u32 2147483647, %v4316
    %v4333 = vand.u32 2147483647, %v4317
    %v4334 = vand.u32 2147483647, %v4318
    %v4335 = vand.u32 2147483647, %v4319
    %v4336 = vand.u32 2147483647, %v4320
    %v4337 = vand.u32 2147483647, %v4321
    %v4338 = vand.u32 2147483647, %v4322
    %v4339 = vand.u32 2147483647, %v4323
    %v4340 = vand.u32 2147483647, %v4324
    %v4341 = vand.u32 2147483647, %v4325
    %v4342 = vand.u32 2147483647, %v4326
    %v4343 = vand.u32 2147483647, %v4327
    %v4344 = vand.u32 2147483647, %v4328
    %v4345 = vand.u32 2147483647, %v4329
    %v4346 = vand.u32 2147483647, %v4330
    %v4347 = vstv %s4245
    %v4348 = vmul.f32 %v4347, %v4331
    %v4349 = vmul.f32 %v4347, %v4332
    %v4350 = vmul.f32 %v4347, %v4333
    %v4351 = vmul.f32 %v4347, %v4334
    %v4352 = vmul.f32 %v4347, %v4335
    %v4353 = vmul.f32 %v4347, %v4336
    %v4354 = vmul.f32 %v4347, %v4337
    %v4355 = vmul.f32 %v4347, %v4338
    %v4356 = vmul.f32 %v4347, %v4339
    %v4357 = vmul.f32 %v4347, %v4340
    %v4358 = vmul.f32 %v4347, %v4341
    %v4359 = vmul.f32 %v4347, %v4342
    %v4360 = vmul.f32 %v4347, %v4343
    %v4361 = vmul.f32 %v4347, %v4344
    %v4362 = vmul.f32 %v4347, %v4345
    %v4363 = vmul.f32 %v4347, %v4346
    %v4364 = vadd.f32 %v4229, %v4348
    %v4365 = vadd.f32 %v4230, %v4349
    %v4366 = vadd.f32 %v4231, %v4350
    %v4367 = vadd.f32 %v4232, %v4351
    %v4368 = vadd.f32 %v4233, %v4352
    %v4369 = vadd.f32 %v4234, %v4353
    %v4370 = vadd.f32 %v4235, %v4354
    %v4371 = vadd.f32 %v4236, %v4355
    %v4372 = vadd.f32 %v4237, %v4356
    %v4373 = vadd.f32 %v4238, %v4357
    %v4374 = vadd.f32 %v4239, %v4358
    %v4375 = vadd.f32 %v4240, %v4359
    %v4376 = vadd.f32 %v4241, %v4360
    %v4377 = vadd.f32 %v4242, %v4361
    %v4378 = vadd.f32 %v4243, %v4362
    %v4379 = vadd.f32 %v4244, %v4363
    %v4380 = vmax.f32 %v4364, 0.0
    %v4381 = vmax.f32 %v4365, 0.0
    %v4382 = vmax.f32 %v4366, 0.0
    %v4383 = vmax.f32 %v4367, 0.0
    %v4384 = vmax.f32 %v4368, 0.0
    %v4385 = vmax.f32 %v4369, 0.0
    %v4386 = vmax.f32 %v4370, 0.0
    %v4387 = vmax.f32 %v4371, 0.0
    %v4388 = vmax.f32 %v4372, 0.0
    %v4389 = vmax.f32 %v4373, 0.0
    %v4390 = vmax.f32 %v4374, 0.0
    %v4391 = vmax.f32 %v4375, 0.0
    %v4392 = vmax.f32 %v4376, 0.0
    %v4393 = vmax.f32 %v4377, 0.0
    %v4394 = vmax.f32 %v4378, 0.0
    %v4395 = vmax.f32 %v4379, 0.0
    %v4396 = vmul.f32 %v4380, 1.442695
    %v4397 = vpow.pop %v4396
    %v4398 = vmul.f32 %v4381, 1.442695
    %v4399 = vpow.pop %v4398
    %v4400 = vmul.f32 %v4382, 1.442695
    %v4401 = vpow.pop %v4400
    %v4402 = vmul.f32 %v4383, 1.442695
    %v4403 = vpow.pop %v4402
    %v4404 = vmul.f32 %v4384, 1.442695
    %v4405 = vpow.pop %v4404
    %v4406 = vmul.f32 %v4385, 1.442695
    %v4407 = vpow.pop %v4406
    %v4408 = vmul.f32 %v4386, 1.442695
    %v4409 = vpow.pop %v4408
    %v4410 = vmul.f32 %v4387, 1.442695
    %v4411 = vpow.pop %v4410
    %v4412 = vmul.f32 %v4388, 1.442695
    %v4413 = vpow.pop %v4412
    %v4414 = vmul.f32 %v4389, 1.442695
    %v4415 = vpow.pop %v4414
    %v4416 = vmul.f32 %v4390, 1.442695
    %v4417 = vpow.pop %v4416
    %v4418 = vmul.f32 %v4391, 1.442695
    %v4419 = vpow.pop %v4418
    %v4420 = vmul.f32 %v4392, 1.442695
    %v4421 = vpow.pop %v4420
    %v4422 = vmul.f32 %v4393, 1.442695
    %v4423 = vpow.pop %v4422
    %v4424 = vmul.f32 %v4394, 1.442695
    %v4425 = vpow.pop %v4424
    %v4426 = vmul.f32 %v4395, 1.442695
    %v4427 = vpow.pop %v4426
    %v4428 = vlaneseq
    %v4429 = vand.u32 %v4428, 127
    %vm4430 = vcmp.lt.s32.totalorder %v4429, 8
    %v4431 = vsel %vm4430, %v4397, -inf
    %v4432 = vsel %vm4430, %v4399, -inf
    %v4433 = vsel %vm4430, %v4401, -inf
    %v4434 = vsel %vm4430, %v4403, -inf
    %v4435 = vsel %vm4430, %v4405, -inf
    %v4436 = vsel %vm4430, %v4407, -inf
    %v4437 = vsel %vm4430, %v4409, -inf
    %v4438 = vsel %vm4430, %v4411, -inf
    %v4439 = vsel %vm4430, %v4413, -inf
    %v4440 = vsel %vm4430, %v4415, -inf
    %v4441 = vsel %vm4430, %v4417, -inf
    %v4442 = vsel %vm4430, %v4419, -inf
    %v4443 = vsel %vm4430, %v4421, -inf
    %v4444 = vsel %vm4430, %v4423, -inf
    %v4445 = vsel %vm4430, %v4425, -inf
    %v4446 = vsel %vm4430, %v4427, -inf
    %4447 = vst [vmem:[#allocation5] sm:$0xff] %v4431
    %4448 = vst [vmem:[#allocation5 + $0x8] sm:$0xff] %v4432
    %4449 = vst [vmem:[#allocation5 + $0x10] sm:$0xff] %v4433
    %4450 = vst [vmem:[#allocation5 + $0x18] sm:$0xff] %v4434
    %4451 = vst [vmem:[#allocation5 + $0x20] sm:$0xff] %v4435
    %4452 = vst [vmem:[#allocation5 + $0x28] sm:$0xff] %v4436
    %4453 = vst [vmem:[#allocation5 + $0x30] sm:$0xff] %v4437
    %4454 = vst [vmem:[#allocation5 + $0x38] sm:$0xff] %v4438
    %4455 = vst [vmem:[#allocation5 + $0x40] sm:$0xff] %v4439
    %4456 = vst [vmem:[#allocation5 + $0x48] sm:$0xff] %v4440
    %4457 = vst [vmem:[#allocation5 + $0x50] sm:$0xff] %v4441
    %4458 = vst [vmem:[#allocation5 + $0x58] sm:$0xff] %v4442
    %4459 = vst [vmem:[#allocation5 + $0x60] sm:$0xff] %v4443
    %4460 = vst [vmem:[#allocation5 + $0x68] sm:$0xff] %v4444
    %4461 = vst [vmem:[#allocation5 + $0x70] sm:$0xff] %v4445
    %4462 = vst [vmem:[#allocation5 + $0x78] sm:$0xff] %v4446
    %v4463 = vld [vmem:[#allocation5] sm:$0xff]
    %v4464 = vld [vmem:[#allocation5 + $0x8] sm:$0xff]
    %v4465 = vld [vmem:[#allocation5 + $0x10] sm:$0xff]
    %v4466 = vld [vmem:[#allocation5 + $0x18] sm:$0xff]
    %v4467 = vld [vmem:[#allocation5 + $0x20] sm:$0xff]
    %v4468 = vld [vmem:[#allocation5 + $0x28] sm:$0xff]
    %v4469 = vld [vmem:[#allocation5 + $0x30] sm:$0xff]
    %v4470 = vld [vmem:[#allocation5 + $0x38] sm:$0xff]
    %v4471 = vld [vmem:[#allocation5 + $0x40] sm:$0xff]
    %v4472 = vld [vmem:[#allocation5 + $0x48] sm:$0xff]
    %v4473 = vld [vmem:[#allocation5 + $0x50] sm:$0xff]
    %v4474 = vld [vmem:[#allocation5 + $0x58] sm:$0xff]
    %v4475 = vld [vmem:[#allocation5 + $0x60] sm:$0xff]
    %v4476 = vld [vmem:[#allocation5 + $0x68] sm:$0xff]
    %v4477 = vld [vmem:[#allocation5 + $0x70] sm:$0xff]
    %v4478 = vld [vmem:[#allocation5 + $0x78] sm:$0xff]
    %4479 = vmax.xlane.f32.xlu0 %v4463
    %v4480 = vpop.xlane.xlu0 %4479
    %4481 = vmax.xlane.f32.xlu0 %v4464
    %v4482 = vpop.xlane.xlu0 %4481
    %4483 = vmax.xlane.f32.xlu0 %v4465
    %v4484 = vpop.xlane.xlu0 %4483
    %4485 = vmax.xlane.f32.xlu0 %v4466
    %v4486 = vpop.xlane.xlu0 %4485
    %4487 = vmax.xlane.f32.xlu0 %v4467
    %v4488 = vpop.xlane.xlu0 %4487
    %4489 = vmax.xlane.f32.xlu0 %v4468
    %v4490 = vpop.xlane.xlu0 %4489
    %4491 = vmax.xlane.f32.xlu0 %v4469
    %v4492 = vpop.xlane.xlu0 %4491
    %4493 = vmax.xlane.f32.xlu0 %v4470
    %v4494 = vpop.xlane.xlu0 %4493
    %4495 = vmax.xlane.f32.xlu0 %v4471
    %v4496 = vpop.xlane.xlu0 %4495
    %4497 = vmax.xlane.f32.xlu0 %v4472
    %v4498 = vpop.xlane.xlu0 %4497
    %4499 = vmax.xlane.f32.xlu0 %v4473
    %v4500 = vpop.xlane.xlu0 %4499
    %4501 = vmax.xlane.f32.xlu0 %v4474
    %v4502 = vpop.xlane.xlu0 %4501
    %4503 = vmax.xlane.f32.xlu0 %v4475
    %v4504 = vpop.xlane.xlu0 %4503
    %4505 = vmax.xlane.f32.xlu0 %v4476
    %v4506 = vpop.xlane.xlu0 %4505
    %4507 = vmax.xlane.f32.xlu0 %v4477
    %v4508 = vpop.xlane.xlu0 %4507
    %4509 = vmax.xlane.f32.xlu0 %v4478
    %v4510 = vpop.xlane.xlu0 %4509
    %v4511 = vsub.f32 %v4463, %v4480
    %v4512 = vsub.f32 %v4464, %v4482
    %v4513 = vsub.f32 %v4465, %v4484
    %v4514 = vsub.f32 %v4466, %v4486
    %v4515 = vsub.f32 %v4467, %v4488
    %v4516 = vsub.f32 %v4468, %v4490
    %v4517 = vsub.f32 %v4469, %v4492
    %v4518 = vsub.f32 %v4470, %v4494
    %v4519 = vsub.f32 %v4471, %v4496
    %v4520 = vsub.f32 %v4472, %v4498
    %v4521 = vsub.f32 %v4473, %v4500
    %v4522 = vsub.f32 %v4474, %v4502
    %v4523 = vsub.f32 %v4475, %v4504
    %v4524 = vsub.f32 %v4476, %v4506
    %v4525 = vsub.f32 %v4477, %v4508
    %v4526 = vsub.f32 %v4478, %v4510
    %v4527 = vmul.f32 %v4511, 1.442695
    %v4528 = vpow.pop %v4527
    %v4529 = vmul.f32 %v4512, 1.442695
    %v4530 = vpow.pop %v4529
    %v4531 = vmul.f32 %v4513, 1.442695
    %v4532 = vpow.pop %v4531
    %v4533 = vmul.f32 %v4514, 1.442695
    %v4534 = vpow.pop %v4533
    %v4535 = vmul.f32 %v4515, 1.442695
    %v4536 = vpow.pop %v4535
    %v4537 = vmul.f32 %v4516, 1.442695
    %v4538 = vpow.pop %v4537
    %v4539 = vmul.f32 %v4517, 1.442695
    %v4540 = vpow.pop %v4539
    %v4541 = vmul.f32 %v4518, 1.442695
    %v4542 = vpow.pop %v4541
    %v4543 = vmul.f32 %v4519, 1.442695
    %v4544 = vpow.pop %v4543
    %v4545 = vmul.f32 %v4520, 1.442695
    %v4546 = vpow.pop %v4545
    %v4547 = vmul.f32 %v4521, 1.442695
    %v4548 = vpow.pop %v4547
    %v4549 = vmul.f32 %v4522, 1.442695
    %v4550 = vpow.pop %v4549
    %v4551 = vmul.f32 %v4523, 1.442695
    %v4552 = vpow.pop %v4551
    %v4553 = vmul.f32 %v4524, 1.442695
    %v4554 = vpow.pop %v4553
    %v4555 = vmul.f32 %v4525, 1.442695
    %v4556 = vpow.pop %v4555
    %v4557 = vmul.f32 %v4526, 1.442695
    %v4558 = vpow.pop %v4557
    %4559 = vadd.xlane.f32.xlu0 %v4528
    %v4560 = vpop.xlane.xlu0 %4559
    %4561 = vadd.xlane.f32.xlu0 %v4530
    %v4562 = vpop.xlane.xlu0 %4561
    %4563 = vadd.xlane.f32.xlu0 %v4532
    %v4564 = vpop.xlane.xlu0 %4563
    %4565 = vadd.xlane.f32.xlu0 %v4534
    %v4566 = vpop.xlane.xlu0 %4565
    %4567 = vadd.xlane.f32.xlu0 %v4536
    %v4568 = vpop.xlane.xlu0 %4567
    %4569 = vadd.xlane.f32.xlu0 %v4538
    %v4570 = vpop.xlane.xlu0 %4569
    %4571 = vadd.xlane.f32.xlu0 %v4540
    %v4572 = vpop.xlane.xlu0 %4571
    %4573 = vadd.xlane.f32.xlu0 %v4542
    %v4574 = vpop.xlane.xlu0 %4573
    %4575 = vadd.xlane.f32.xlu0 %v4544
    %v4576 = vpop.xlane.xlu0 %4575
    %4577 = vadd.xlane.f32.xlu0 %v4546
    %v4578 = vpop.xlane.xlu0 %4577
    %4579 = vadd.xlane.f32.xlu0 %v4548
    %v4580 = vpop.xlane.xlu0 %4579
    %4581 = vadd.xlane.f32.xlu0 %v4550
    %v4582 = vpop.xlane.xlu0 %4581
    %4583 = vadd.xlane.f32.xlu0 %v4552
    %v4584 = vpop.xlane.xlu0 %4583
    %4585 = vadd.xlane.f32.xlu0 %v4554
    %v4586 = vpop.xlane.xlu0 %4585
    %4587 = vadd.xlane.f32.xlu0 %v4556
    %v4588 = vpop.xlane.xlu0 %4587
    %4589 = vadd.xlane.f32.xlu0 %v4558
    %v4590 = vpop.xlane.xlu0 %4589
    %v4591 = vrcp.pop %v4560
    %v4592 = vrcp.pop %v4562
    %v4593 = vrcp.pop %v4564
    %v4594 = vrcp.pop %v4566
    %v4595 = vrcp.pop %v4568
    %v4596 = vrcp.pop %v4570
    %v4597 = vrcp.pop %v4572
    %v4598 = vrcp.pop %v4574
    %v4599 = vrcp.pop %v4576
    %v4600 = vrcp.pop %v4578
    %v4601 = vrcp.pop %v4580
    %v4602 = vrcp.pop %v4582
    %v4603 = vrcp.pop %v4584
    %v4604 = vrcp.pop %v4586
    %v4605 = vrcp.pop %v4588
    %v4606 = vrcp.pop %v4590
    %v4607 = vmul.f32 %v4560, %v4591
    %v4608 = vmul.f32 %v4562, %v4592
    %v4609 = vmul.f32 %v4564, %v4593
    %v4610 = vmul.f32 %v4566, %v4594
    %v4611 = vmul.f32 %v4568, %v4595
    %v4612 = vmul.f32 %v4570, %v4596
    %v4613 = vmul.f32 %v4572, %v4597
    %v4614 = vmul.f32 %v4574, %v4598
    %v4615 = vmul.f32 %v4576, %v4599
    %v4616 = vmul.f32 %v4578, %v4600
    %v4617 = vmul.f32 %v4580, %v4601
    %v4618 = vmul.f32 %v4582, %v4602
    %v4619 = vmul.f32 %v4584, %v4603
    %v4620 = vmul.f32 %v4586, %v4604
    %v4621 = vmul.f32 %v4588, %v4605
    %v4622 = vmul.f32 %v4590, %v4606
    %v4623 = vsub.f32 2.0, %v4607
    %v4624 = vsub.f32 2.0, %v4608
    %v4625 = vsub.f32 2.0, %v4609
    %v4626 = vsub.f32 2.0, %v4610
    %v4627 = vsub.f32 2.0, %v4611
    %v4628 = vsub.f32 2.0, %v4612
    %v4629 = vsub.f32 2.0, %v4613
    %v4630 = vsub.f32 2.0, %v4614
    %v4631 = vsub.f32 2.0, %v4615
    %v4632 = vsub.f32 2.0, %v4616
    %v4633 = vsub.f32 2.0, %v4617
    %v4634 = vsub.f32 2.0, %v4618
    %v4635 = vsub.f32 2.0, %v4619
    %v4636 = vsub.f32 2.0, %v4620
    %v4637 = vsub.f32 2.0, %v4621
    %v4638 = vsub.f32 2.0, %v4622
    %v4639 = vmul.f32 %v4591, %v4623
    %v4640 = vmul.f32 %v4592, %v4624
    %v4641 = vmul.f32 %v4593, %v4625
    %v4642 = vmul.f32 %v4594, %v4626
    %v4643 = vmul.f32 %v4595, %v4627
    %v4644 = vmul.f32 %v4596, %v4628
    %v4645 = vmul.f32 %v4597, %v4629
    %v4646 = vmul.f32 %v4598, %v4630
    %v4647 = vmul.f32 %v4599, %v4631
    %v4648 = vmul.f32 %v4600, %v4632
    %v4649 = vmul.f32 %v4601, %v4633
    %v4650 = vmul.f32 %v4602, %v4634
    %v4651 = vmul.f32 %v4603, %v4635
    %v4652 = vmul.f32 %v4604, %v4636
    %v4653 = vmul.f32 %v4605, %v4637
    %v4654 = vmul.f32 %v4606, %v4638
    %v4655 = vmul.f32 %v4560, %v4639
    %v4656 = vmul.f32 %v4562, %v4640
    %v4657 = vmul.f32 %v4564, %v4641
    %v4658 = vmul.f32 %v4566, %v4642
    %v4659 = vmul.f32 %v4568, %v4643
    %v4660 = vmul.f32 %v4570, %v4644
    %v4661 = vmul.f32 %v4572, %v4645
    %v4662 = vmul.f32 %v4574, %v4646
    %v4663 = vmul.f32 %v4576, %v4647
    %v4664 = vmul.f32 %v4578, %v4648
    %v4665 = vmul.f32 %v4580, %v4649
    %v4666 = vmul.f32 %v4582, %v4650
    %v4667 = vmul.f32 %v4584, %v4651
    %v4668 = vmul.f32 %v4586, %v4652
    %v4669 = vmul.f32 %v4588, %v4653
    %v4670 = vmul.f32 %v4590, %v4654
    %v4671 = vsub.f32 2.0, %v4655
    %v4672 = vsub.f32 2.0, %v4656
    %v4673 = vsub.f32 2.0, %v4657
    %v4674 = vsub.f32 2.0, %v4658
    %v4675 = vsub.f32 2.0, %v4659
    %v4676 = vsub.f32 2.0, %v4660
    %v4677 = vsub.f32 2.0, %v4661
    %v4678 = vsub.f32 2.0, %v4662
    %v4679 = vsub.f32 2.0, %v4663
    %v4680 = vsub.f32 2.0, %v4664
    %v4681 = vsub.f32 2.0, %v4665
    %v4682 = vsub.f32 2.0, %v4666
    %v4683 = vsub.f32 2.0, %v4667
    %v4684 = vsub.f32 2.0, %v4668
    %v4685 = vsub.f32 2.0, %v4669
    %v4686 = vsub.f32 2.0, %v4670
    %v4687 = vmul.f32 %v4639, %v4671
    %v4688 = vmul.f32 %v4640, %v4672
    %v4689 = vmul.f32 %v4641, %v4673
    %v4690 = vmul.f32 %v4642, %v4674
    %v4691 = vmul.f32 %v4643, %v4675
    %v4692 = vmul.f32 %v4644, %v4676
    %v4693 = vmul.f32 %v4645, %v4677
    %v4694 = vmul.f32 %v4646, %v4678
    %v4695 = vmul.f32 %v4647, %v4679
    %v4696 = vmul.f32 %v4648, %v4680
    %v4697 = vmul.f32 %v4649, %v4681
    %v4698 = vmul.f32 %v4650, %v4682
    %v4699 = vmul.f32 %v4651, %v4683
    %v4700 = vmul.f32 %v4652, %v4684
    %v4701 = vmul.f32 %v4653, %v4685
    %v4702 = vmul.f32 %v4654, %v4686
    %v4703 = vmul.f32 %v4528, %v4687
    %v4704 = vmul.f32 %v4530, %v4688
    %v4705 = vmul.f32 %v4532, %v4689
    %v4706 = vmul.f32 %v4534, %v4690
    %v4707 = vmul.f32 %v4536, %v4691
    %v4708 = vmul.f32 %v4538, %v4692
    %v4709 = vmul.f32 %v4540, %v4693
    %v4710 = vmul.f32 %v4542, %v4694
    %v4711 = vmul.f32 %v4544, %v4695
    %v4712 = vmul.f32 %v4546, %v4696
    %v4713 = vmul.f32 %v4548, %v4697
    %v4714 = vmul.f32 %v4550, %v4698
    %v4715 = vmul.f32 %v4552, %v4699
    %v4716 = vmul.f32 %v4554, %v4700
    %v4717 = vmul.f32 %v4556, %v4701
    %v4718 = vmul.f32 %v4558, %v4702
    %4719 = vst [vmem:[#allocation5] sm:$0xff] %v4703
    %4720 = vst [vmem:[#allocation5 + $0x8] sm:$0xff] %v4704
    %4721 = vst [vmem:[#allocation5 + $0x10] sm:$0xff] %v4705
    %4722 = vst [vmem:[#allocation5 + $0x18] sm:$0xff] %v4706
    %4723 = vst [vmem:[#allocation5 + $0x20] sm:$0xff] %v4707
    %4724 = vst [vmem:[#allocation5 + $0x28] sm:$0xff] %v4708
    %4725 = vst [vmem:[#allocation5 + $0x30] sm:$0xff] %v4709
    %4726 = vst [vmem:[#allocation5 + $0x38] sm:$0xff] %v4710
    %4727 = vst [vmem:[#allocation5 + $0x40] sm:$0xff] %v4711
    %4728 = vst [vmem:[#allocation5 + $0x48] sm:$0xff] %v4712
    %4729 = vst [vmem:[#allocation5 + $0x50] sm:$0xff] %v4713
    %4730 = vst [vmem:[#allocation5 + $0x58] sm:$0xff] %v4714
    %4731 = vst [vmem:[#allocation5 + $0x60] sm:$0xff] %v4715
    %4732 = vst [vmem:[#allocation5 + $0x68] sm:$0xff] %v4716
    %4733 = vst [vmem:[#allocation5 + $0x70] sm:$0xff] %v4717
    %4734 = vst [vmem:[#allocation5 + $0x78] sm:$0xff] %v4718
    // Predicated region
    $region18: #{tpu_custom_call.1} parent=1 // pred_check
      _
    $region19: #{tpu_custom_call.1} parent=1 // pred_check_branch
      %4736 = sbr.rel (0) target = $region21
    $region20: #{tpu_custom_call.1} parent=1 // pred_region
      %s4738 = ssub.s32 2048, 2048
      %4739 = vsyncadd [#allocation3], %s4738
      %s4740 = sshll.u32 [#allocation5], 4
      %s4741 = int_to_ptr.vmem [resolvable:$true] %s4740
      %4746 = dma.vmem_to_hbm [thread:$0]  %s4741, 2048, %s3, [#allocation3], 128, 128, 8
    $region21: #{tpu_custom_call.1} parent=1 // pred_fallthru
      _
    // Predicated region
    $region22: #{tpu_custom_call.1} parent=1 // pred_check
      _
    $region23: #{tpu_custom_call.1} parent=1 // pred_check_branch
      %4748 = sbr.rel (0) target = $region25
    $region24: #{tpu_custom_call.1} parent=1 // pred_region
      %4749 = dma.done [#allocation3], 2048
    $region25: #{tpu_custom_call.1} parent=1 // pred_fallthru
      _
    %4750 = vsyncpa [#allocation3], 1
    %4751 = vsyncpa [#allocation4], 1

</llo_original>
